<compile_context>
chip_gen: v5e
topology: v5e:2x2
jax: 0.10.0
libtpu: 0.0.40
codegen_flags: <defaults>
</compile_context>

<pallas_src>
import functools

import numpy as np

import jax
import jax.numpy as jnp
from jax.experimental import pallas as pl
from jax.experimental.pallas import tpu as pltpu

_VMEM_LIMIT = 48 * 1024 * 1024   # explicit limit with headroom under v7x's 64 MiB


# ----------------------------------------------------------------------------
# Pallas kernels
# ----------------------------------------------------------------------------
def _conv3x3_kernel(*refs, H, win, step, n_w, fuse_fma, has_add, has_theta):
    """Fused reflection-padded 3x3 conv (+ optional FMA inputs, add, soft-threshold).

    Per grid step (batch group g, W tile j), fused-lane layout:
      x (or A, G, Bb) : (H+2, nb*(W+2)*Cin)   bf16
      banded weight   : (3, win, Nblk)        bf16  (one slab shared by all tiles)
      [add]           : (H, Nblk)             f32
      [theta]         : (1, Nblk)             f32
      out             : (H, Nblk)             f32
    The banded slab for row offset dy realises all three dx taps of the tile as
    a single MXU matmul; no im2col is ever materialised.
    """
    n_x = 3 if fuse_fma else 1
    wb_ref = refs[n_x]
    idx = n_x + 1
    acc = None
    if has_add:
        acc = refs[idx][...]
        idx += 1

    if n_w > 1:
        # TODO(synk): dynamic lane-offset window; only taken when W*Cout > 512.
        j = pl.program_id(1)
        start = pl.multiple_of(j * step, step)

    def window(r, dy):
        if n_w == 1:
            return r[dy:dy + H, :]
        return r[pl.ds(dy, H), pl.ds(start, win)]

    for dy in range(3):
        if fuse_fma:
            # guided-filter FMA recomputed per dy so only one H-row window is live
            xs = window(refs[0], dy) * window(refs[1], dy) + window(refs[2], dy)
        else:
            xs = window(refs[0], dy)
        part = jnp.dot(xs, wb_ref[dy], preferred_element_type=jnp.float32)
        acc = part if acc is None else acc + part

    if has_theta:
        t = refs[idx][...]                        # (1, Nblk) broadcast over rows
        idx += 1
        acc = jnp.where(acc > t, acc - t, jnp.where(acc < -t, acc + t, 0.0))
    refs[idx][...] = acc


def _gf_kernel(xp_ref, yp_ref, invn_ref, a_ref, b_ref, *, h, wc, c, ksize, eps):
    """Fast-guided-filter low-res stage with separable box sums.

    xp/yp : (B, h+2r, (w+2r)*C) f32 zero padded
    invn  : (h, w*C) f32 closed-form 1/valid-pixel-count
    A, b  : (B, h, w*C) f32
    """
    rx = ry = rxx = rxy = None
    for dy in range(ksize):                      # sublane (row) shifts first
        xs = xp_ref[:, dy:dy + h, :]
        ys = yp_ref[:, dy:dy + h, :]
        if rx is None:
            rx, ry, rxx, rxy = xs, ys, xs * xs, xs * ys
        else:
            rx = rx + xs
            ry = ry + ys
            rxx = rxx + xs * xs
            rxy = rxy + xs * ys

    sx = sy = sxx = sxy = None
    for dx in range(ksize):                      # then O(k) lane shifts only
        sl = slice(dx * c, dx * c + wc)
        if sx is None:
            sx, sy, sxx, sxy = rx[:, :, sl], ry[:, :, sl], rxx[:, :, sl], rxy[:, :, sl]
        else:
            sx = sx + rx[:, :, sl]
            sy = sy + ry[:, :, sl]
            sxx = sxx + rxx[:, :, sl]
            sxy = sxy + rxy[:, :, sl]

    inv_n = invn_ref[...]
    mx = sx * inv_n
    my = sy * inv_n
    var_x = sxx * inv_n - mx * mx
    cov_xy = sxy * inv_n - mx * my
    A = cov_xy / (var_x + eps)                   # exact division (review concern)
    a_ref[...] = A
    b_ref[...] = my - A * mx


def _resize_kernel(x_ref, rm_ref, cm_ref, o_ref):
    """Fused bilinear resize: rows then columns, all inside one kernel (f32)."""
    t = jnp.dot(rm_ref[...], x_ref[...], preferred_element_type=jnp.float32)
    o_ref[...] = jnp.dot(t, cm_ref[...], preferred_element_type=jnp.float32)


# ----------------------------------------------------------------------------
# Conv wrapper: hoisted per-tile banded bf16 weights, batch grouping, W tiling
# ----------------------------------------------------------------------------
def _choose_tiles(W, Cout, B):
    """Return (tw, nb, n_w): W-tile width, batches folded into lanes, #W tiles."""
    lane = W * Cout
    if lane < 128:
        want = -(-128 // lane)                                   # ceil(128/lane)
        nb = 1
        for cand in range(min(B, want), 0, -1):
            if B % cand == 0:
                nb = cand
                break
        return W, nb, 1
    if lane <= 512:
        return W, 1, 1
    for t in range(W - 1, 0, -1):
        if W % t == 0 and (t * Cout) % 128 == 0 and t * Cout <= 512:
            return t, 1, W // t
    return W, 1, 1


def _prepare_conv(w, W, batch, negate=False):
    """PyTorch (Cout, Cin, 3, 3) weight -> per-tile banded bf16 slabs + meta.

    Built once with numpy (hoisted out of the forward path).  Slab dy element
    [(x+dx)*Cin+ci, x*Cout+co] = w[co, ci, dy, dx], so one matmul per row offset
    realises all three dx taps of a W tile.  When nb batches are folded into the
    lane axis the slab becomes kron(I_nb, band).
    """
    w = np.asarray(w, np.float32)
    if negate:
        w = -w
    Cout, Cin = int(w.shape[0]), int(w.shape[1])
    tw, nb, n_w = _choose_tiles(W, Cout, batch)
    band = np.zeros((3, (tw + 2) * Cin, tw * Cout), np.float32)
    for dy in range(3):
        for dx in range(3):
            tap = w[:, :, dy, dx].T                              # (Cin, Cout)
            for x in range(tw):
                band[dy, (x + dx) * Cin:(x + dx + 1) * Cin,
                     x * Cout:(x + 1) * Cout] += tap
    if nb > 1:
        eye = np.eye(nb, dtype=np.float32)
        band = np.stack([np.kron(eye, band[dy]) for dy in range(3)], axis=0)
    return {"wb": jnp.asarray(band, dtype=jnp.bfloat16),
            "Cin": Cin, "Cout": Cout, "tw": tw, "nb": nb, "n_w": n_w}


def _group_batches(x, nb):
    """(B, H, L) -> (B//nb, H, nb*L): fold nb consecutive batches into lanes."""
    if nb == 1:
        return x
    B, H, L = x.shape
    return x.reshape(B // nb, nb, H, L).transpose(0, 2, 1, 3).reshape(B // nb, H, nb * L)


def _ungroup_batches(y, nb, L):
    if nb == 1:
        return y
    G, H, _ = y.shape
    return y.reshape(G, H, nb, L).transpose(0, 2, 1, 3).reshape(G * nb, H, L)


def conv3x3_fused(inputs, prep, add=None, theta=None):
    """ReflectionPad2d(1) + Conv2d(3x3, no bias) [+ add] [+ soft-threshold].

    `inputs` is [x] for a plain conv or [A, guide, b] for the decoder's fused
    guided-filter FMA (the conv runs on A*guide+b computed in-kernel).
    All tensors use the fused-lane layout (B, H, W*C); output is f32.
    """
    Cin, Cout = prep["Cin"], prep["Cout"]
    tw, nb, n_w = prep["tw"], prep["nb"], prep["n_w"]
    B, H, WC = inputs[0].shape
    W = WC // Cin
    Hp, WpCin = H + 2, (W + 2) * Cin
    G = B // nb
    lanes_in = nb * WpCin
    nblk = nb * tw * Cout                         # output lanes per grid step
    win = (tw + 2) * Cin if n_w > 1 else lanes_in
    step = tw * Cin

    padded = []
    for t in inputs:
        t4 = t.reshape(B, H, W, Cin)
        tp = jnp.pad(t4, ((0, 0), (1, 1), (1, 1), (0, 0)), mode="reflect")
        tp = tp.astype(jnp.bfloat16).reshape(B, Hp, WpCin)        # bf16 MXU inputs
        padded.append(_group_batches(tp, nb))

    fuse_fma = len(inputs) == 3
    has_add = add is not None
    has_theta = theta is not None

    in_specs = [pl.BlockSpec((None, Hp, lanes_in), lambda g, j: (g, 0, 0))
                for _ in padded]
    args = list(padded)
    wb = prep["wb"]
    in_specs.append(pl.BlockSpec(tuple(wb.shape), lambda g, j: (0, 0, 0)))
    args.append(wb)
    if has_add:
        in_specs.append(pl.BlockSpec((None, H, nblk), lambda g, j: (g, 0, j)))
        args.append(_group_batches(add.astype(jnp.float32), nb))
    if has_theta:
        th = jnp.tile(theta.astype(jnp.float32), (nb * tw,)).reshape(1, nblk)
        in_specs.append(pl.BlockSpec((1, nblk), lambda g, j: (0, 0)))
        args.append(th)

    kern = functools.partial(_conv3x3_kernel, H=H, win=win, step=step, n_w=n_w,
                             fuse_fma=fuse_fma, has_add=has_add, has_theta=has_theta)
    out = pl.pallas_call(
        kern,
        out_shape=jax.ShapeDtypeStruct((G, H, nb * W * Cout), jnp.float32),
        grid=(G, n_w),
        in_specs=in_specs,
        out_specs=pl.BlockSpec((None, H, nblk), lambda g, j: (g, 0, j)),
        compiler_params=pltpu.CompilerParams(
            dimension_semantics=("parallel", "parallel"),
            vmem_limit_bytes=_VMEM_LIMIT),
    )(*args)
    return _ungroup_batches(out, nb, W * Cout)


# ----------------------------------------------------------------------------
# Fast guided filter (low-res A, b)
# ----------------------------------------------------------------------------
def guided_filter_lowres(xf, yf, C, radius, eps):
    """Low-res stage of the fast guided filter on fused (B, h, w*C) features."""
    B, h, wc = xf.shape
    w = wc // C
    r = int(radius)
    pad = ((0, 0), (r, r), (r, r), (0, 0))
    xp = jnp.pad(xf.reshape(B, h, w, C), pad).reshape(B, h + 2 * r, (w + 2 * r) * C)
    yp = jnp.pad(yf.reshape(B, h, w, C), pad).reshape(B, h + 2 * r, (w + 2 * r) * C)

    # Closed-form valid-pixel count (no box-filtered ones tensor).
    iy = jnp.arange(h, dtype=jnp.float32)
    ix = jnp.arange(w, dtype=jnp.float32)
    cnt_h = jnp.minimum(iy + r, h - 1.0) - jnp.maximum(iy - r, 0.0) + 1.0
    cnt_w = jnp.minimum(ix + r, w - 1.0) - jnp.maximum(ix - r, 0.0) + 1.0
    inv_n = 1.0 / (cnt_h[:, None, None] * cnt_w[None, :, None])            # (h,w,1)
    inv_n = jnp.broadcast_to(inv_n, (h, w, C)).reshape(h, wc)

    kern = functools.partial(_gf_kernel, h=h, wc=wc, c=C, ksize=2 * r + 1,
                             eps=float(eps))
    return pl.pallas_call(
        kern,
        out_shape=(jax.ShapeDtypeStruct((B, h, wc), jnp.float32),
                   jax.ShapeDtypeStruct((B, h, wc), jnp.float32)),
    )(xp, yp, inv_n)


# ----------------------------------------------------------------------------
# Bilinear resize (align_corners=True) fused into one kernel per call
# ----------------------------------------------------------------------------
def _bilinear_matrix_np(n_out, n_in):
    m = np.zeros((n_out, n_in), np.float32)
    if n_out == 1:
        src = np.zeros((1,), np.float64)
    else:
        src = np.arange(n_out, dtype=np.float64) * ((n_in - 1) / (n_out - 1))
    lo = np.clip(np.floor(src).astype(np.int64), 0, n_in - 1)
    hi = np.minimum(lo + 1, n_in - 1)
    frac = (src - lo).astype(np.float32)
    for i in range(n_out):
        m[i, lo[i]] += 1.0 - frac[i]
        m[i, hi[i]] += frac[i]
    return m


def _resize_mats(h_in, w_in, h_out, w_out, C):
    rm = _bilinear_matrix_np(h_out, h_in)                               # (h_out, h_in)
    aw = _bilinear_matrix_np(w_out, w_in)                               # (w_out, w_in)
    cm = np.kron(aw.T, np.eye(C, dtype=np.float32)).astype(np.float32)  # (w_in*C, w_out*C)
    return {"rm": jnp.asarray(rm), "cm": jnp.asarray(cm)}


def resize_fused(x_f, mats):
    """Bilinear (align_corners=True) resize of fused (B, h, w*C), one kernel."""
    B, h, wc = x_f.shape
    rm, cm = mats["rm"], mats["cm"]
    h_out = int(rm.shape[0])
    woc = int(cm.shape[1])
    return pl.pallas_call(
        _resize_kernel,
        out_shape=jax.ShapeDtypeStruct((B, h_out, woc), jnp.float32),
        grid=(B,),
        in_specs=[pl.BlockSpec((None, h, wc), lambda b: (b, 0, 0)),
                  pl.BlockSpec((h_out, h), lambda b: (0, 0)),
                  pl.BlockSpec((wc, woc), lambda b: (0, 0))],
        out_specs=pl.BlockSpec((None, h_out, woc), lambda b: (b, 0, 0)),
        compiler_params=pltpu.CompilerParams(
            dimension_semantics=("parallel",), vmem_limit_bytes=_VMEM_LIMIT),
    )(x_f, rm, cm)


# ----------------------------------------------------------------------------
# ModelA forward
# ----------------------------------------------------------------------------
def _nchw_to_fused(x):
    B, C, H, W = x.shape
    return jnp.transpose(x, (0, 2, 3, 1)).astype(jnp.float32).reshape(B, H, W * C)


def backbone_forward(data_f, bb):
    """set_backbone + ModelA.block_forward: conv0 + sst, then CSC/ISTA blocks."""
    code = conv3x3_fused([data_f], bb["w0"], theta=bb["th0"])
    for blk in bb["csc"]:
        # DictConv2dBlock (ISTA step): code <- sst(code + E(data - D(code)))
        res = conv3x3_fused([code], blk["nDw"], add=data_f)     # data - D(code)
        code = conv3x3_fused([res], blk["Ew"], add=code, theta=blk["th"])
    return code


def model_a_forward(lr_nchw, guide_nchw, prep):
    """Full ModelA forward.  Inputs NCHW (PyTorch convention), output NCHW."""
    lr_f = _nchw_to_fused(lr_nchw)
    guide_f = _nchw_to_fused(guide_nchw)

    feat_guide = backbone_forward(guide_f, prep["bb_guide"])     # (B, Hg, Wg*Co)
    feat_lr = backbone_forward(lr_f, prep["bb_lr"])              # (B, h,  w*Co)

    # FastGuidedFilter(feat_lguide, feat_lr, feat_guide)
    feat_lguide = resize_fused(feat_guide, prep["rs_down"])
    A, bb = guided_filter_lowres(feat_lguide, feat_lr, prep["C"],
                                 prep["radius"], prep["eps"])
    A_hr = resize_fused(A, prep["rs_up"])
    b_hr = resize_fused(bb, prep["rs_up"])

    # decoder(A_hr*feat_guide + b_hr) + upsample(lr, guide.shape[2], guide.shape[2])
    up_lr = resize_fused(lr_f, prep["rs_lr"])                    # module quirk kept
    out_f = conv3x3_fused([A_hr, feat_guide, b_hr], prep["dec"], add=up_lr)

    B, Hg, wout = out_f.shape
    in_lr = lr_nchw.shape[1]
    return jnp.transpose(out_f.reshape(B, Hg, wout // in_lr, in_lr), (0, 3, 1, 2))


# ----------------------------------------------------------------------------
# Parameter construction and preparation (hoisted weight/matrix builds)
# ----------------------------------------------------------------------------
def make_params(key, num_csc, in_lr, in_guide, out_channels):
    def conv_w(k, cout, cin):
        return 0.1 * jax.random.normal(k, (cout, cin, 3, 3), jnp.float32)

    def make_backbone(k, cin):
        ks = jax.random.split(k, 1 + 2 * max(1, num_csc - 1))
        p = {"w0": conv_w(ks[0], out_channels, cin),
             "th0": jnp.full((out_channels,), 0.02, jnp.float32),
             "csc": []}
        for i in range(num_csc - 1):
            p["csc"].append({
                "Dw": conv_w(ks[1 + 2 * i], cin, out_channels),      # decoder D
                "Ew": conv_w(ks[2 + 2 * i], out_channels, cin),      # encoder E
                "th": jnp.full((out_channels,), 0.02, jnp.float32),
            })
        return p

    kg, kl, kd = jax.random.split(key, 3)
    return {"bb_guide": make_backbone(kg, in_guide),
            "bb_lr": make_backbone(kl, in_lr),
            "dec_w": conv_w(kd, in_lr, out_channels)}


def prepare_model(raw, *, batch, lr_hw, guide_hw, in_lr, out_channels, radius, eps):
    """Convert raw (PyTorch-layout) weights into hoisted banded bf16 slabs and
    resize matrices, keyed by the static image sizes each stage runs at."""
    h_lr, w_lr = lr_hw
    h_g, w_g = guide_hw

    def prep_backbone(bb, W):
        out = {"w0": _prepare_conv(bb["w0"], W, batch),
               "th0": jnp.asarray(bb["th0"], jnp.float32),
               "csc": []}
        for blk in bb["csc"]:
            out["csc"].append({
                "nDw": _prepare_conv(blk["Dw"], W, batch, negate=True),
                "Ew": _prepare_conv(blk["Ew"], W, batch),
                "th": jnp.asarray(blk["th"], jnp.float32),
            })
        return out

    return {
        "bb_guide": prep_backbone(raw["bb_guide"], w_g),
        "bb_lr": prep_backbone(raw["bb_lr"], w_lr),
        "dec": _prepare_conv(raw["dec_w"], w_g, batch),
        "rs_down": _resize_mats(h_g, w_g, h_lr, w_lr, out_channels),
        "rs_up": _resize_mats(h_lr, w_lr, h_g, w_g, out_channels),
        # Module quirk: upsample(lr, guide.shape[2], guide.shape[2]) -> (Hg, Hg).
        "rs_lr": _resize_mats(h_lr, w_lr, h_g, h_g, in_lr),
        "radius": int(radius), "eps": float(eps), "C": out_channels,
    }


# ----------------------------------------------------------------------------
if __name__ == "__main__":
    # small ModelA config: num_csc=2, in_lr=1, in_guide=3, out_channels=8
    NUM_CSC, IN_LR, IN_GUIDE, OUT_CH = 2, 1, 3, 8
    RADIUS, EPS = 1, 1e-4
    B, H_LR, H_G = 2, 8, 16

    key = jax.random.PRNGKey(0)
    k_lr, k_guide, k_par = jax.random.split(key, 3)
    lr = jax.random.normal(k_lr, (B, IN_LR, H_LR, H_LR), jnp.float32)         # NCHW
    guide = jax.random.normal(k_guide, (B, IN_GUIDE, H_G, H_G), jnp.float32)  # NCHW

    raw = make_params(k_par, NUM_CSC, IN_LR, IN_GUIDE, OUT_CH)
    prep = prepare_model(raw, batch=B, lr_hw=(H_LR, H_LR), guide_hw=(H_G, H_G),
                         in_lr=IN_LR, out_channels=OUT_CH, radius=RADIUS, eps=EPS)

    # prepared params are closed over (they contain static tiling metadata);
    # radius/eps are static, so all pad widths concretize at trace time.
    fwd = jax.jit(lambda a, g: model_a_forward(a, g, prep))
    out = jax.block_until_ready(fwd(lr, guide))
    assert out.shape == (B, IN_LR, H_G, H_G), out.shape
    assert bool(jnp.all(jnp.isfinite(out)))
    print("KERNEL_OK")
</pallas_src>

<mosaic_0001>
module attributes {stable_mosaic.version = 11 : i64} {
  func.func @_conv3x3_kernel(%arg0: i32, %arg1: i32, %arg2: memref<1x10x20xbf16, #tpu.memory_space<vmem>>, %arg3: memref<3x20x128xbf16, #tpu.memory_space<vmem>>, %arg4: memref<1x128xf32, #tpu.memory_space<vmem>>, %arg5: memref<1x8x128xf32, #tpu.memory_space<vmem>>) attributes {dimension_semantics = [#tpu.dimension_semantics<parallel>, #tpu.dimension_semantics<parallel>], iteration_bounds = array<i64: 1, 1>, scalar_prefetch = 0 : i64, scratch_operands = 0 : i64, tpu.core_type = #tpu.core_type<tc>, window_params = [{transform_indices = @transform_0, window_bounds = array<i64: 1, 10, 20>}, {pipeline_mode = #tpu.pipeline_mode<synchronous>, transform_indices = @transform_1, window_bounds = array<i64: 3, 20, 128>}, {pipeline_mode = #tpu.pipeline_mode<synchronous>, transform_indices = @transform_2, window_bounds = array<i64: 1, 128>}, {transform_indices = @transform_3, window_bounds = array<i64: 1, 8, 128>}]} {
    %c0 = arith.constant 0 : index
    %c0_0 = arith.constant 0 : index
    %c0_1 = arith.constant 0 : index
    %0 = vector.load %arg2[%c0, %c0_0, %c0_1] : memref<1x10x20xbf16, #tpu.memory_space<vmem>>, vector<1x8x20xbf16>
    %1 = vector.shape_cast %0 : vector<1x8x20xbf16> to vector<8x20xbf16>
    %c0_2 = arith.constant 0 : index
    %c0_3 = arith.constant 0 : index
    %c0_4 = arith.constant 0 : index
    %2 = vector.load %arg3[%c0_2, %c0_3, %c0_4] : memref<3x20x128xbf16, #tpu.memory_space<vmem>>, vector<1x20x128xbf16>
    %3 = vector.shape_cast %2 : vector<1x20x128xbf16> to vector<20x128xbf16>
    %cst = arith.constant dense<0.000000e+00> : vector<8x128xf32>
    %4 = tpu.matmul %1, %3, %cst {dimension_numbers = #tpu.dot_dimension_numbers<[1], [0], [0], [1], [0, 0, 1, 1], [], []>} : vector<8x20xbf16>, vector<20x128xbf16>, vector<8x128xf32> -> vector<8x128xf32>
    %c0_5 = arith.constant 0 : index
    %c1 = arith.constant 1 : index
    %c0_6 = arith.constant 0 : index
    %5 = vector.load %arg2[%c0_5, %c1, %c0_6] : memref<1x10x20xbf16, #tpu.memory_space<vmem>>, vector<1x8x20xbf16>
    %6 = vector.shape_cast %5 : vector<1x8x20xbf16> to vector<8x20xbf16>
    %c1_7 = arith.constant 1 : index
    %c0_8 = arith.constant 0 : index
    %c0_9 = arith.constant 0 : index
    %7 = vector.load %arg3[%c1_7, %c0_8, %c0_9] : memref<3x20x128xbf16, #tpu.memory_space<vmem>>, vector<1x20x128xbf16>
    %8 = vector.shape_cast %7 : vector<1x20x128xbf16> to vector<20x128xbf16>
    %cst_10 = arith.constant dense<0.000000e+00> : vector<8x128xf32>
    %9 = tpu.matmul %6, %8, %cst_10 {dimension_numbers = #tpu.dot_dimension_numbers<[1], [0], [0], [1], [0, 0, 1, 1], [], []>} : vector<8x20xbf16>, vector<20x128xbf16>, vector<8x128xf32> -> vector<8x128xf32>
    %10 = arith.addf %4, %9 : vector<8x128xf32>
    %c0_11 = arith.constant 0 : index
    %c2 = arith.constant 2 : index
    %c0_12 = arith.constant 0 : index
    %11 = vector.load %arg2[%c0_11, %c2, %c0_12] : memref<1x10x20xbf16, #tpu.memory_space<vmem>>, vector<1x8x20xbf16>
    %12 = vector.shape_cast %11 : vector<1x8x20xbf16> to vector<8x20xbf16>
    %c2_13 = arith.constant 2 : index
    %c0_14 = arith.constant 0 : index
    %c0_15 = arith.constant 0 : index
    %13 = vector.load %arg3[%c2_13, %c0_14, %c0_15] : memref<3x20x128xbf16, #tpu.memory_space<vmem>>, vector<1x20x128xbf16>
    %14 = vector.shape_cast %13 : vector<1x20x128xbf16> to vector<20x128xbf16>
    %cst_16 = arith.constant dense<0.000000e+00> : vector<8x128xf32>
    %15 = tpu.matmul %12, %14, %cst_16 {dimension_numbers = #tpu.dot_dimension_numbers<[1], [0], [0], [1], [0, 0, 1, 1], [], []>} : vector<8x20xbf16>, vector<20x128xbf16>, vector<8x128xf32> -> vector<8x128xf32>
    %16 = arith.addf %10, %15 : vector<8x128xf32>
    %c0_17 = arith.constant 0 : index
    %c0_18 = arith.constant 0 : index
    %17 = vector.load %arg4[%c0_17, %c0_18] : memref<1x128xf32, #tpu.memory_space<vmem>>, vector<1x128xf32>
    %18 = vector.broadcast %17 : vector<1x128xf32> to vector<8x128xf32>
    %19 = arith.cmpf ogt, %16, %18 : vector<8x128xf32>
    %20 = vector.broadcast %17 : vector<1x128xf32> to vector<8x128xf32>
    %21 = arith.subf %16, %20 : vector<8x128xf32>
    %cst_19 = arith.constant 0.000000e+00 : f32
    %22 = vector.broadcast %cst_19 : f32 to vector<1x128xf32>
    %23 = arith.subf %22, %17 : vector<1x128xf32>
    %24 = vector.broadcast %23 : vector<1x128xf32> to vector<8x128xf32>
    %25 = arith.cmpf olt, %16, %24 : vector<8x128xf32>
    %26 = vector.broadcast %17 : vector<1x128xf32> to vector<8x128xf32>
    %27 = arith.addf %16, %26 : vector<8x128xf32>
    %cst_20 = arith.constant 0.000000e+00 : f32
    %28 = vector.broadcast %cst_20 : f32 to vector<8x128xf32>
    %29 = arith.select %25, %27, %28 : vector<8x128xi1>, vector<8x128xf32>
    %30 = arith.select %19, %21, %29 : vector<8x128xi1>, vector<8x128xf32>
    %c0_21 = arith.constant 0 : index
    %c0_22 = arith.constant 0 : index
    %c0_23 = arith.constant 0 : index
    %31 = vector.load %arg5[%c0_21, %c0_22, %c0_23] : memref<1x8x128xf32, #tpu.memory_space<vmem>>, vector<1x8x128xf32>
    %32 = vector.shape_cast %31 : vector<1x8x128xf32> to vector<8x128xf32>
    %33 = vector.shape_cast %30 : vector<8x128xf32> to vector<1x8x128xf32>
    tpu.vector_store %arg5[%c0_21, %c0_22, %c0_23], %33 {strides = array<i32>} : memref<1x8x128xf32, #tpu.memory_space<vmem>>, vector<1x8x128xf32>,
    return
  }
  func.func @transform_0(%arg0: i32, %arg1: i32) -> (i32, i32, i32) {
    %c0_i32 = arith.constant 0 : i32
    %c0_i32_0 = arith.constant 0 : i32
    %c0_i32_1 = arith.constant 0 : i32
    return %arg0, %c0_i32, %c0_i32_0 : i32, i32, i32
  }
  func.func @transform_1(%arg0: i32, %arg1: i32) -> (i32, i32, i32) {
    %c0_i32 = arith.constant 0 : i32
    %c0_i32_0 = arith.constant 0 : i32
    %c0_i32_1 = arith.constant 0 : i32
    %c0_i32_2 = arith.constant 0 : i32
    return %c0_i32, %c0_i32_0, %c0_i32_1 : i32, i32, i32
  }
  func.func @transform_2(%arg0: i32, %arg1: i32) -> (i32, i32) {
    %c0_i32 = arith.constant 0 : i32
    %c0_i32_0 = arith.constant 0 : i32
    %c0_i32_1 = arith.constant 0 : i32
    return %c0_i32, %c0_i32_0 : i32, i32
  }
  func.func @transform_3(%arg0: i32, %arg1: i32) -> (i32, i32, i32) {
    %c0_i32 = arith.constant 0 : i32
    %c0_i32_0 = arith.constant 0 : i32
    return %arg0, %c0_i32, %arg1 : i32, i32, i32
  }
}

module attributes {stable_mosaic.version = 11 : i64} {
  func.func @_conv3x3_kernel(%arg0: i32, %arg1: i32, %arg2: memref<1x10x160xbf16, #tpu.memory_space<vmem>>, %arg3: memref<3x160x16xbf16, #tpu.memory_space<vmem>>, %arg4: memref<1x8x16xf32, #tpu.memory_space<vmem>>, %arg5: memref<1x8x16xf32, #tpu.memory_space<vmem>>) attributes {dimension_semantics = [#tpu.dimension_semantics<parallel>, #tpu.dimension_semantics<parallel>], iteration_bounds = array<i64: 1, 1>, scalar_prefetch = 0 : i64, scratch_operands = 0 : i64, tpu.core_type = #tpu.core_type<tc>, window_params = [{transform_indices = @transform_0, window_bounds = array<i64: 1, 10, 160>}, {pipeline_mode = #tpu.pipeline_mode<synchronous>, transform_indices = @transform_1, window_bounds = array<i64: 3, 160, 16>}, {transform_indices = @transform_2, window_bounds = array<i64: 1, 8, 16>}, {transform_indices = @transform_3, window_bounds = array<i64: 1, 8, 16>}]} {
    %c0 = arith.constant 0 : index
    %c0_0 = arith.constant 0 : index
    %c0_1 = arith.constant 0 : index
    %0 = vector.load %arg4[%c0, %c0_0, %c0_1] : memref<1x8x16xf32, #tpu.memory_space<vmem>>, vector<1x8x16xf32>
    %1 = vector.shape_cast %0 : vector<1x8x16xf32> to vector<8x16xf32>
    %c0_2 = arith.constant 0 : index
    %c0_3 = arith.constant 0 : index
    %c0_4 = arith.constant 0 : index
    %2 = vector.load %arg2[%c0_2, %c0_3, %c0_4] : memref<1x10x160xbf16, #tpu.memory_space<vmem>>, vector<1x8x160xbf16>
    %3 = vector.shape_cast %2 : vector<1x8x160xbf16> to vector<8x160xbf16>
    %c0_5 = arith.constant 0 : index
    %c0_6 = arith.constant 0 : index
    %c0_7 = arith.constant 0 : index
    %4 = vector.load %arg3[%c0_5, %c0_6, %c0_7] : memref<3x160x16xbf16, #tpu.memory_space<vmem>>, vector<1x160x16xbf16>
    %5 = vector.shape_cast %4 : vector<1x160x16xbf16> to vector<160x16xbf16>
    %cst = arith.constant dense<0.000000e+00> : vector<8x16xf32>
    %6 = tpu.matmul %3, %5, %cst {dimension_numbers = #tpu.dot_dimension_numbers<[1], [0], [0], [1], [0, 0, 1, 1], [], []>} : vector<8x160xbf16>, vector<160x16xbf16>, vector<8x16xf32> -> vector<8x16xf32>
    %7 = arith.addf %1, %6 : vector<8x16xf32>
    %c0_8 = arith.constant 0 : index
    %c1 = arith.constant 1 : index
    %c0_9 = arith.constant 0 : index
    %8 = vector.load %arg2[%c0_8, %c1, %c0_9] : memref<1x10x160xbf16, #tpu.memory_space<vmem>>, vector<1x8x160xbf16>
    %9 = vector.shape_cast %8 : vector<1x8x160xbf16> to vector<8x160xbf16>
    %c1_10 = arith.constant 1 : index
    %c0_11 = arith.constant 0 : index
    %c0_12 = arith.constant 0 : index
    %10 = vector.load %arg3[%c1_10, %c0_11, %c0_12] : memref<3x160x16xbf16, #tpu.memory_space<vmem>>, vector<1x160x16xbf16>
    %11 = vector.shape_cast %10 : vector<1x160x16xbf16> to vector<160x16xbf16>
    %cst_13 = arith.constant dense<0.000000e+00> : vector<8x16xf32>
    %12 = tpu.matmul %9, %11, %cst_13 {dimension_numbers = #tpu.dot_dimension_numbers<[1], [0], [0], [1], [0, 0, 1, 1], [], []>} : vector<8x160xbf16>, vector<160x16xbf16>, vector<8x16xf32> -> vector<8x16xf32>
    %13 = arith.addf %7, %12 : vector<8x16xf32>
    %c0_14 = arith.constant 0 : index
    %c2 = arith.constant 2 : index
    %c0_15 = arith.constant 0 : index
    %14 = vector.load %arg2[%c0_14, %c2, %c0_15] : memref<1x10x160xbf16, #tpu.memory_space<vmem>>, vector<1x8x160xbf16>
    %15 = vector.shape_cast %14 : vector<1x8x160xbf16> to vector<8x160xbf16>
    %c2_16 = arith.constant 2 : index
    %c0_17 = arith.constant 0 : index
    %c0_18 = arith.constant 0 : index
    %16 = vector.load %arg3[%c2_16, %c0_17, %c0_18] : memref<3x160x16xbf16, #tpu.memory_space<vmem>>, vector<1x160x16xbf16>
    %17 = vector.shape_cast %16 : vector<1x160x16xbf16> to vector<160x16xbf16>
    %cst_19 = arith.constant dense<0.000000e+00> : vector<8x16xf32>
    %18 = tpu.matmul %15, %17, %cst_19 {dimension_numbers = #tpu.dot_dimension_numbers<[1], [0], [0], [1], [0, 0, 1, 1], [], []>} : vector<8x160xbf16>, vector<160x16xbf16>, vector<8x16xf32> -> vector<8x16xf32>
    %19 = arith.addf %13, %18 : vector<8x16xf32>
    %c0_20 = arith.constant 0 : index
    %c0_21 = arith.constant 0 : index
    %c0_22 = arith.constant 0 : index
    %20 = vector.load %arg5[%c0_20, %c0_21, %c0_22] : memref<1x8x16xf32, #tpu.memory_space<vmem>>, vector<1x8x16xf32>
    %21 = vector.shape_cast %20 : vector<1x8x16xf32> to vector<8x16xf32>
    %22 = vector.shape_cast %19 : vector<8x16xf32> to vector<1x8x16xf32>
    tpu.vector_store %arg5[%c0_20, %c0_21, %c0_22], %22 {strides = array<i32>} : memref<1x8x16xf32, #tpu.memory_space<vmem>>, vector<1x8x16xf32>,
    return
  }
  func.func @transform_0(%arg0: i32, %arg1: i32) -> (i32, i32, i32) {
    %c0_i32 = arith.constant 0 : i32
    %c0_i32_0 = arith.constant 0 : i32
    %c0_i32_1 = arith.constant 0 : i32
    return %arg0, %c0_i32, %c0_i32_0 : i32, i32, i32
  }
  func.func @transform_1(%arg0: i32, %arg1: i32) -> (i32, i32, i32) {
    %c0_i32 = arith.constant 0 : i32
    %c0_i32_0 = arith.constant 0 : i32
    %c0_i32_1 = arith.constant 0 : i32
    %c0_i32_2 = arith.constant 0 : i32
    return %c0_i32, %c0_i32_0, %c0_i32_1 : i32, i32, i32
  }
  func.func @transform_2(%arg0: i32, %arg1: i32) -> (i32, i32, i32) {
    %c0_i32 = arith.constant 0 : i32
    %c0_i32_0 = arith.constant 0 : i32
    return %arg0, %c0_i32, %arg1 : i32, i32, i32
  }
  func.func @transform_3(%arg0: i32, %arg1: i32) -> (i32, i32, i32) {
    %c0_i32 = arith.constant 0 : i32
    %c0_i32_0 = arith.constant 0 : i32
    return %arg0, %c0_i32, %arg1 : i32, i32, i32
  }
}

module attributes {stable_mosaic.version = 11 : i64} {
  func.func @_conv3x3_kernel(%arg0: i32, %arg1: i32, %arg2: memref<1x10x20xbf16, #tpu.memory_space<vmem>>, %arg3: memref<3x20x128xbf16, #tpu.memory_space<vmem>>, %arg4: memref<1x8x128xf32, #tpu.memory_space<vmem>>, %arg5: memref<1x128xf32, #tpu.memory_space<vmem>>, %arg6: memref<1x8x128xf32, #tpu.memory_space<vmem>>) attributes {dimension_semantics = [#tpu.dimension_semantics<parallel>, #tpu.dimension_semantics<parallel>], iteration_bounds = array<i64: 1, 1>, scalar_prefetch = 0 : i64, scratch_operands = 0 : i64, tpu.core_type = #tpu.core_type<tc>, window_params = [{transform_indices = @transform_0, window_bounds = array<i64: 1, 10, 20>}, {pipeline_mode = #tpu.pipeline_mode<synchronous>, transform_indices = @transform_1, window_bounds = array<i64: 3, 20, 128>}, {transform_indices = @transform_2, window_bounds = array<i64: 1, 8, 128>}, {pipeline_mode = #tpu.pipeline_mode<synchronous>, transform_indices = @transform_3, window_bounds = array<i64: 1, 128>}, {transform_indices = @transform_4, window_bounds = array<i64: 1, 8, 128>}]} {
    %c0 = arith.constant 0 : index
    %c0_0 = arith.constant 0 : index
    %c0_1 = arith.constant 0 : index
    %0 = vector.load %arg4[%c0, %c0_0, %c0_1] : memref<1x8x128xf32, #tpu.memory_space<vmem>>, vector<1x8x128xf32>
    %1 = vector.shape_cast %0 : vector<1x8x128xf32> to vector<8x128xf32>
    %c0_2 = arith.constant 0 : index
    %c0_3 = arith.constant 0 : index
    %c0_4 = arith.constant 0 : index
    %2 = vector.load %arg2[%c0_2, %c0_3, %c0_4] : memref<1x10x20xbf16, #tpu.memory_space<vmem>>, vector<1x8x20xbf16>
    %3 = vector.shape_cast %2 : vector<1x8x20xbf16> to vector<8x20xbf16>
    %c0_5 = arith.constant 0 : index
    %c0_6 = arith.constant 0 : index
    %c0_7 = arith.constant 0 : index
    %4 = vector.load %arg3[%c0_5, %c0_6, %c0_7] : memref<3x20x128xbf16, #tpu.memory_space<vmem>>, vector<1x20x128xbf16>
    %5 = vector.shape_cast %4 : vector<1x20x128xbf16> to vector<20x128xbf16>
    %cst = arith.constant dense<0.000000e+00> : vector<8x128xf32>
    %6 = tpu.matmul %3, %5, %cst {dimension_numbers = #tpu.dot_dimension_numbers<[1], [0], [0], [1], [0, 0, 1, 1], [], []>} : vector<8x20xbf16>, vector<20x128xbf16>, vector<8x128xf32> -> vector<8x128xf32>
    %7 = arith.addf %1, %6 : vector<8x128xf32>
    %c0_8 = arith.constant 0 : index
    %c1 = arith.constant 1 : index
    %c0_9 = arith.constant 0 : index
    %8 = vector.load %arg2[%c0_8, %c1, %c0_9] : memref<1x10x20xbf16, #tpu.memory_space<vmem>>, vector<1x8x20xbf16>
    %9 = vector.shape_cast %8 : vector<1x8x20xbf16> to vector<8x20xbf16>
    %c1_10 = arith.constant 1 : index
    %c0_11 = arith.constant 0 : index
    %c0_12 = arith.constant 0 : index
    %10 = vector.load %arg3[%c1_10, %c0_11, %c0_12] : memref<3x20x128xbf16, #tpu.memory_space<vmem>>, vector<1x20x128xbf16>
    %11 = vector.shape_cast %10 : vector<1x20x128xbf16> to vector<20x128xbf16>
    %cst_13 = arith.constant dense<0.000000e+00> : vector<8x128xf32>
    %12 = tpu.matmul %9, %11, %cst_13 {dimension_numbers = #tpu.dot_dimension_numbers<[1], [0], [0], [1], [0, 0, 1, 1], [], []>} : vector<8x20xbf16>, vector<20x128xbf16>, vector<8x128xf32> -> vector<8x128xf32>
    %13 = arith.addf %7, %12 : vector<8x128xf32>
    %c0_14 = arith.constant 0 : index
    %c2 = arith.constant 2 : index
    %c0_15 = arith.constant 0 : index
    %14 = vector.load %arg2[%c0_14, %c2, %c0_15] : memref<1x10x20xbf16, #tpu.memory_space<vmem>>, vector<1x8x20xbf16>
    %15 = vector.shape_cast %14 : vector<1x8x20xbf16> to vector<8x20xbf16>
    %c2_16 = arith.constant 2 : index
    %c0_17 = arith.constant 0 : index
    %c0_18 = arith.constant 0 : index
    %16 = vector.load %arg3[%c2_16, %c0_17, %c0_18] : memref<3x20x128xbf16, #tpu.memory_space<vmem>>, vector<1x20x128xbf16>
    %17 = vector.shape_cast %16 : vector<1x20x128xbf16> to vector<20x128xbf16>
    %cst_19 = arith.constant dense<0.000000e+00> : vector<8x128xf32>
    %18 = tpu.matmul %15, %17, %cst_19 {dimension_numbers = #tpu.dot_dimension_numbers<[1], [0], [0], [1], [0, 0, 1, 1], [], []>} : vector<8x20xbf16>, vector<20x128xbf16>, vector<8x128xf32> -> vector<8x128xf32>
    %19 = arith.addf %13, %18 : vector<8x128xf32>
    %c0_20 = arith.constant 0 : index
    %c0_21 = arith.constant 0 : index
    %20 = vector.load %arg5[%c0_20, %c0_21] : memref<1x128xf32, #tpu.memory_space<vmem>>, vector<1x128xf32>
    %21 = vector.broadcast %20 : vector<1x128xf32> to vector<8x128xf32>
    %22 = arith.cmpf ogt, %19, %21 : vector<8x128xf32>
    %23 = vector.broadcast %20 : vector<1x128xf32> to vector<8x128xf32>
    %24 = arith.subf %19, %23 : vector<8x128xf32>
    %cst_22 = arith.constant 0.000000e+00 : f32
    %25 = vector.broadcast %cst_22 : f32 to vector<1x128xf32>
    %26 = arith.subf %25, %20 : vector<1x128xf32>
    %27 = vector.broadcast %26 : vector<1x128xf32> to vector<8x128xf32>
    %28 = arith.cmpf olt, %19, %27 : vector<8x128xf32>
    %29 = vector.broadcast %20 : vector<1x128xf32> to vector<8x128xf32>
    %30 = arith.addf %19, %29 : vector<8x128xf32>
    %cst_23 = arith.constant 0.000000e+00 : f32
    %31 = vector.broadcast %cst_23 : f32 to vector<8x128xf32>
    %32 = arith.select %28, %30, %31 : vector<8x128xi1>, vector<8x128xf32>
    %33 = arith.select %22, %24, %32 : vector<8x128xi1>, vector<8x128xf32>
    %c0_24 = arith.constant 0 : index
    %c0_25 = arith.constant 0 : index
    %c0_26 = arith.constant 0 : index
    %34 = vector.load %arg6[%c0_24, %c0_25, %c0_26] : memref<1x8x128xf32, #tpu.memory_space<vmem>>, vector<1x8x128xf32>
    %35 = vector.shape_cast %34 : vector<1x8x128xf32> to vector<8x128xf32>
    %36 = vector.shape_cast %33 : vector<8x128xf32> to vector<1x8x128xf32>
    tpu.vector_store %arg6[%c0_24, %c0_25, %c0_26], %36 {strides = array<i32>} : memref<1x8x128xf32, #tpu.memory_space<vmem>>, vector<1x8x128xf32>,
    return
  }
  func.func @transform_0(%arg0: i32, %arg1: i32) -> (i32, i32, i32) {
    %c0_i32 = arith.constant 0 : i32
    %c0_i32_0 = arith.constant 0 : i32
    %c0_i32_1 = arith.constant 0 : i32
    return %arg0, %c0_i32, %c0_i32_0 : i32, i32, i32
  }
  func.func @transform_1(%arg0: i32, %arg1: i32) -> (i32, i32, i32) {
    %c0_i32 = arith.constant 0 : i32
    %c0_i32_0 = arith.constant 0 : i32
    %c0_i32_1 = arith.constant 0 : i32
    %c0_i32_2 = arith.constant 0 : i32
    return %c0_i32, %c0_i32_0, %c0_i32_1 : i32, i32, i32
  }
  func.func @transform_2(%arg0: i32, %arg1: i32) -> (i32, i32, i32) {
    %c0_i32 = arith.constant 0 : i32
    %c0_i32_0 = arith.constant 0 : i32
    return %arg0, %c0_i32, %arg1 : i32, i32, i32
  }
  func.func @transform_3(%arg0: i32, %arg1: i32) -> (i32, i32) {
    %c0_i32 = arith.constant 0 : i32
    %c0_i32_0 = arith.constant 0 : i32
    %c0_i32_1 = arith.constant 0 : i32
    return %c0_i32, %c0_i32_0 : i32, i32
  }
  func.func @transform_4(%arg0: i32, %arg1: i32) -> (i32, i32, i32) {
    %c0_i32 = arith.constant 0 : i32
    %c0_i32_0 = arith.constant 0 : i32
    return %arg0, %c0_i32, %arg1 : i32, i32, i32
  }
}

module attributes {stable_mosaic.version = 11 : i64} {
  func.func @_conv3x3_kernel(%arg0: i32, %arg1: i32, %arg2: memref<1x18x54xbf16, #tpu.memory_space<vmem>>, %arg3: memref<3x54x128xbf16, #tpu.memory_space<vmem>>, %arg4: memref<1x128xf32, #tpu.memory_space<vmem>>, %arg5: memref<1x16x128xf32, #tpu.memory_space<vmem>>) attributes {dimension_semantics = [#tpu.dimension_semantics<parallel>, #tpu.dimension_semantics<parallel>], iteration_bounds = array<i64: 2, 1>, scalar_prefetch = 0 : i64, scratch_operands = 0 : i64, tpu.core_type = #tpu.core_type<tc>, window_params = [{transform_indices = @transform_0, window_bounds = array<i64: 1, 18, 54>}, {pipeline_mode = #tpu.pipeline_mode<synchronous>, transform_indices = @transform_1, window_bounds = array<i64: 3, 54, 128>}, {pipeline_mode = #tpu.pipeline_mode<synchronous>, transform_indices = @transform_2, window_bounds = array<i64: 1, 128>}, {transform_indices = @transform_3, window_bounds = array<i64: 1, 16, 128>}]} {
    %c0 = arith.constant 0 : index
    %c0_0 = arith.constant 0 : index
    %c0_1 = arith.constant 0 : index
    %0 = vector.load %arg2[%c0, %c0_0, %c0_1] : memref<1x18x54xbf16, #tpu.memory_space<vmem>>, vector<1x16x54xbf16>
    %1 = vector.shape_cast %0 : vector<1x16x54xbf16> to vector<16x54xbf16>
    %c0_2 = arith.constant 0 : index
    %c0_3 = arith.constant 0 : index
    %c0_4 = arith.constant 0 : index
    %2 = vector.load %arg3[%c0_2, %c0_3, %c0_4] : memref<3x54x128xbf16, #tpu.memory_space<vmem>>, vector<1x54x128xbf16>
    %3 = vector.shape_cast %2 : vector<1x54x128xbf16> to vector<54x128xbf16>
    %cst = arith.constant dense<0.000000e+00> : vector<16x128xf32>
    %4 = tpu.matmul %1, %3, %cst {dimension_numbers = #tpu.dot_dimension_numbers<[1], [0], [0], [1], [0, 0, 1, 1], [], []>} : vector<16x54xbf16>, vector<54x128xbf16>, vector<16x128xf32> -> vector<16x128xf32>
    %c0_5 = arith.constant 0 : index
    %c1 = arith.constant 1 : index
    %c0_6 = arith.constant 0 : index
    %5 = vector.load %arg2[%c0_5, %c1, %c0_6] : memref<1x18x54xbf16, #tpu.memory_space<vmem>>, vector<1x16x54xbf16>
    %6 = vector.shape_cast %5 : vector<1x16x54xbf16> to vector<16x54xbf16>
    %c1_7 = arith.constant 1 : index
    %c0_8 = arith.constant 0 : index
    %c0_9 = arith.constant 0 : index
    %7 = vector.load %arg3[%c1_7, %c0_8, %c0_9] : memref<3x54x128xbf16, #tpu.memory_space<vmem>>, vector<1x54x128xbf16>
    %8 = vector.shape_cast %7 : vector<1x54x128xbf16> to vector<54x128xbf16>
    %cst_10 = arith.constant dense<0.000000e+00> : vector<16x128xf32>
    %9 = tpu.matmul %6, %8, %cst_10 {dimension_numbers = #tpu.dot_dimension_numbers<[1], [0], [0], [1], [0, 0, 1, 1], [], []>} : vector<16x54xbf16>, vector<54x128xbf16>, vector<16x128xf32> -> vector<16x128xf32>
    %10 = arith.addf %4, %9 : vector<16x128xf32>
    %c0_11 = arith.constant 0 : index
    %c2 = arith.constant 2 : index
    %c0_12 = arith.constant 0 : index
    %11 = vector.load %arg2[%c0_11, %c2, %c0_12] : memref<1x18x54xbf16, #tpu.memory_space<vmem>>, vector<1x16x54xbf16>
    %12 = vector.shape_cast %11 : vector<1x16x54xbf16> to vector<16x54xbf16>
    %c2_13 = arith.constant 2 : index
    %c0_14 = arith.constant 0 : index
    %c0_15 = arith.constant 0 : index
    %13 = vector.load %arg3[%c2_13, %c0_14, %c0_15] : memref<3x54x128xbf16, #tpu.memory_space<vmem>>, vector<1x54x128xbf16>
    %14 = vector.shape_cast %13 : vector<1x54x128xbf16> to vector<54x128xbf16>
    %cst_16 = arith.constant dense<0.000000e+00> : vector<16x128xf32>
    %15 = tpu.matmul %12, %14, %cst_16 {dimension_numbers = #tpu.dot_dimension_numbers<[1], [0], [0], [1], [0, 0, 1, 1], [], []>} : vector<16x54xbf16>, vector<54x128xbf16>, vector<16x128xf32> -> vector<16x128xf32>
    %16 = arith.addf %10, %15 : vector<16x128xf32>
    %c0_17 = arith.constant 0 : index
    %c0_18 = arith.constant 0 : index
    %17 = vector.load %arg4[%c0_17, %c0_18] : memref<1x128xf32, #tpu.memory_space<vmem>>, vector<1x128xf32>
    %18 = vector.broadcast %17 : vector<1x128xf32> to vector<16x128xf32>
    %19 = arith.cmpf ogt, %16, %18 : vector<16x128xf32>
    %20 = vector.broadcast %17 : vector<1x128xf32> to vector<16x128xf32>
    %21 = arith.subf %16, %20 : vector<16x128xf32>
    %cst_19 = arith.constant 0.000000e+00 : f32
    %22 = vector.broadcast %cst_19 : f32 to vector<1x128xf32>
    %23 = arith.subf %22, %17 : vector<1x128xf32>
    %24 = vector.broadcast %23 : vector<1x128xf32> to vector<16x128xf32>
    %25 = arith.cmpf olt, %16, %24 : vector<16x128xf32>
    %26 = vector.broadcast %17 : vector<1x128xf32> to vector<16x128xf32>
    %27 = arith.addf %16, %26 : vector<16x128xf32>
    %cst_20 = arith.constant 0.000000e+00 : f32
    %28 = vector.broadcast %cst_20 : f32 to vector<16x128xf32>
    %29 = arith.select %25, %27, %28 : vector<16x128xi1>, vector<16x128xf32>
    %30 = arith.select %19, %21, %29 : vector<16x128xi1>, vector<16x128xf32>
    %c0_21 = arith.constant 0 : index
    %c0_22 = arith.constant 0 : index
    %c0_23 = arith.constant 0 : index
    %31 = vector.load %arg5[%c0_21, %c0_22, %c0_23] : memref<1x16x128xf32, #tpu.memory_space<vmem>>, vector<1x16x128xf32>
    %32 = vector.shape_cast %31 : vector<1x16x128xf32> to vector<16x128xf32>
    %33 = vector.shape_cast %30 : vector<16x128xf32> to vector<1x16x128xf32>
    tpu.vector_store %arg5[%c0_21, %c0_22, %c0_23], %33 {strides = array<i32>} : memref<1x16x128xf32, #tpu.memory_space<vmem>>, vector<1x16x128xf32>,
    return
  }
  func.func @transform_0(%arg0: i32, %arg1: i32) -> (i32, i32, i32) {
    %c0_i32 = arith.constant 0 : i32
    %c0_i32_0 = arith.constant 0 : i32
    %c0_i32_1 = arith.constant 0 : i32
    return %arg0, %c0_i32, %c0_i32_0 : i32, i32, i32
  }
  func.func @transform_1(%arg0: i32, %arg1: i32) -> (i32, i32, i32) {
    %c0_i32 = arith.constant 0 : i32
    %c0_i32_0 = arith.constant 0 : i32
    %c0_i32_1 = arith.constant 0 : i32
    %c0_i32_2 = arith.constant 0 : i32
    return %c0_i32, %c0_i32_0, %c0_i32_1 : i32, i32, i32
  }
  func.func @transform_2(%arg0: i32, %arg1: i32) -> (i32, i32) {
    %c0_i32 = arith.constant 0 : i32
    %c0_i32_0 = arith.constant 0 : i32
    %c0_i32_1 = arith.constant 0 : i32
    return %c0_i32, %c0_i32_0 : i32, i32
  }
  func.func @transform_3(%arg0: i32, %arg1: i32) -> (i32, i32, i32) {
    %c0_i32 = arith.constant 0 : i32
    %c0_i32_0 = arith.constant 0 : i32
    return %arg0, %c0_i32, %arg1 : i32, i32, i32
  }
}

module attributes {stable_mosaic.version = 11 : i64} {
  func.func @_conv3x3_kernel(%arg0: i32, %arg1: i32, %arg2: memref<1x18x288xbf16, #tpu.memory_space<vmem>>, %arg3: memref<3x288x96xbf16, #tpu.memory_space<vmem>>, %arg4: memref<1x16x96xf32, #tpu.memory_space<vmem>>, %arg5: memref<1x16x96xf32, #tpu.memory_space<vmem>>) attributes {dimension_semantics = [#tpu.dimension_semantics<parallel>, #tpu.dimension_semantics<parallel>], iteration_bounds = array<i64: 1, 1>, scalar_prefetch = 0 : i64, scratch_operands = 0 : i64, tpu.core_type = #tpu.core_type<tc>, window_params = [{transform_indices = @transform_0, window_bounds = array<i64: 1, 18, 288>}, {pipeline_mode = #tpu.pipeline_mode<synchronous>, transform_indices = @transform_1, window_bounds = array<i64: 3, 288, 96>}, {transform_indices = @transform_2, window_bounds = array<i64: 1, 16, 96>}, {transform_indices = @transform_3, window_bounds = array<i64: 1, 16, 96>}]} {
    %c0 = arith.constant 0 : index
    %c0_0 = arith.constant 0 : index
    %c0_1 = arith.constant 0 : index
    %0 = vector.load %arg4[%c0, %c0_0, %c0_1] : memref<1x16x96xf32, #tpu.memory_space<vmem>>, vector<1x16x96xf32>
    %1 = vector.shape_cast %0 : vector<1x16x96xf32> to vector<16x96xf32>
    %c0_2 = arith.constant 0 : index
    %c0_3 = arith.constant 0 : index
    %c0_4 = arith.constant 0 : index
    %2 = vector.load %arg2[%c0_2, %c0_3, %c0_4] : memref<1x18x288xbf16, #tpu.memory_space<vmem>>, vector<1x16x288xbf16>
    %3 = vector.shape_cast %2 : vector<1x16x288xbf16> to vector<16x288xbf16>
    %c0_5 = arith.constant 0 : index
    %c0_6 = arith.constant 0 : index
    %c0_7 = arith.constant 0 : index
    %4 = vector.load %arg3[%c0_5, %c0_6, %c0_7] : memref<3x288x96xbf16, #tpu.memory_space<vmem>>, vector<1x288x96xbf16>
    %5 = vector.shape_cast %4 : vector<1x288x96xbf16> to vector<288x96xbf16>
    %cst = arith.constant dense<0.000000e+00> : vector<16x96xf32>
    %6 = tpu.matmul %3, %5, %cst {dimension_numbers = #tpu.dot_dimension_numbers<[1], [0], [0], [1], [0, 0, 1, 1], [], []>} : vector<16x288xbf16>, vector<288x96xbf16>, vector<16x96xf32> -> vector<16x96xf32>
    %7 = arith.addf %1, %6 : vector<16x96xf32>
    %c0_8 = arith.constant 0 : index
    %c1 = arith.constant 1 : index
    %c0_9 = arith.constant 0 : index
    %8 = vector.load %arg2[%c0_8, %c1, %c0_9] : memref<1x18x288xbf16, #tpu.memory_space<vmem>>, vector<1x16x288xbf16>
    %9 = vector.shape_cast %8 : vector<1x16x288xbf16> to vector<16x288xbf16>
    %c1_10 = arith.constant 1 : index
    %c0_11 = arith.constant 0 : index
    %c0_12 = arith.constant 0 : index
    %10 = vector.load %arg3[%c1_10, %c0_11, %c0_12] : memref<3x288x96xbf16, #tpu.memory_space<vmem>>, vector<1x288x96xbf16>
    %11 = vector.shape_cast %10 : vector<1x288x96xbf16> to vector<288x96xbf16>
    %cst_13 = arith.constant dense<0.000000e+00> : vector<16x96xf32>
    %12 = tpu.matmul %9, %11, %cst_13 {dimension_numbers = #tpu.dot_dimension_numbers<[1], [0], [0], [1], [0, 0, 1, 1], [], []>} : vector<16x288xbf16>, vector<288x96xbf16>, vector<16x96xf32> -> vector<16x96xf32>
    %13 = arith.addf %7, %12 : vector<16x96xf32>
    %c0_14 = arith.constant 0 : index
    %c2 = arith.constant 2 : index
    %c0_15 = arith.constant 0 : index
    %14 = vector.load %arg2[%c0_14, %c2, %c0_15] : memref<1x18x288xbf16, #tpu.memory_space<vmem>>, vector<1x16x288xbf16>
    %15 = vector.shape_cast %14 : vector<1x16x288xbf16> to vector<16x288xbf16>
    %c2_16 = arith.constant 2 : index
    %c0_17 = arith.constant 0 : index
    %c0_18 = arith.constant 0 : index
    %16 = vector.load %arg3[%c2_16, %c0_17, %c0_18] : memref<3x288x96xbf16, #tpu.memory_space<vmem>>, vector<1x288x96xbf16>
    %17 = vector.shape_cast %16 : vector<1x288x96xbf16> to vector<288x96xbf16>
    %cst_19 = arith.constant dense<0.000000e+00> : vector<16x96xf32>
    %18 = tpu.matmul %15, %17, %cst_19 {dimension_numbers = #tpu.dot_dimension_numbers<[1], [0], [0], [1], [0, 0, 1, 1], [], []>} : vector<16x288xbf16>, vector<288x96xbf16>, vector<16x96xf32> -> vector<16x96xf32>
    %19 = arith.addf %13, %18 : vector<16x96xf32>
    %c0_20 = arith.constant 0 : index
    %c0_21 = arith.constant 0 : index
    %c0_22 = arith.constant 0 : index
    %20 = vector.load %arg5[%c0_20, %c0_21, %c0_22] : memref<1x16x96xf32, #tpu.memory_space<vmem>>, vector<1x16x96xf32>
    %21 = vector.shape_cast %20 : vector<1x16x96xf32> to vector<16x96xf32>
    %22 = vector.shape_cast %19 : vector<16x96xf32> to vector<1x16x96xf32>
    tpu.vector_store %arg5[%c0_20, %c0_21, %c0_22], %22 {strides = array<i32>} : memref<1x16x96xf32, #tpu.memory_space<vmem>>, vector<1x16x96xf32>,
    return
  }
  func.func @transform_0(%arg0: i32, %arg1: i32) -> (i32, i32, i32) {
    %c0_i32 = arith.constant 0 : i32
    %c0_i32_0 = arith.constant 0 : i32
    %c0_i32_1 = arith.constant 0 : i32
    return %arg0, %c0_i32, %c0_i32_0 : i32, i32, i32
  }
  func.func @transform_1(%arg0: i32, %arg1: i32) -> (i32, i32, i32) {
    %c0_i32 = arith.constant 0 : i32
    %c0_i32_0 = arith.constant 0 : i32
    %c0_i32_1 = arith.constant 0 : i32
    %c0_i32_2 = arith.constant 0 : i32
    return %c0_i32, %c0_i32_0, %c0_i32_1 : i32, i32, i32
  }
  func.func @transform_2(%arg0: i32, %arg1: i32) -> (i32, i32, i32) {
    %c0_i32 = arith.constant 0 : i32
    %c0_i32_0 = arith.constant 0 : i32
    return %arg0, %c0_i32, %arg1 : i32, i32, i32
  }
  func.func @transform_3(%arg0: i32, %arg1: i32) -> (i32, i32, i32) {
    %c0_i32 = arith.constant 0 : i32
    %c0_i32_0 = arith.constant 0 : i32
    return %arg0, %c0_i32, %arg1 : i32, i32, i32
  }
}

module attributes {stable_mosaic.version = 11 : i64} {
  func.func @_conv3x3_kernel(%arg0: i32, %arg1: i32, %arg2: memref<1x18x54xbf16, #tpu.memory_space<vmem>>, %arg3: memref<3x54x128xbf16, #tpu.memory_space<vmem>>, %arg4: memref<1x16x128xf32, #tpu.memory_space<vmem>>, %arg5: memref<1x128xf32, #tpu.memory_space<vmem>>, %arg6: memref<1x16x128xf32, #tpu.memory_space<vmem>>) attributes {dimension_semantics = [#tpu.dimension_semantics<parallel>, #tpu.dimension_semantics<parallel>], iteration_bounds = array<i64: 2, 1>, scalar_prefetch = 0 : i64, scratch_operands = 0 : i64, tpu.core_type = #tpu.core_type<tc>, window_params = [{transform_indices = @transform_0, window_bounds = array<i64: 1, 18, 54>}, {pipeline_mode = #tpu.pipeline_mode<synchronous>, transform_indices = @transform_1, window_bounds = array<i64: 3, 54, 128>}, {transform_indices = @transform_2, window_bounds = array<i64: 1, 16, 128>}, {pipeline_mode = #tpu.pipeline_mode<synchronous>, transform_indices = @transform_3, window_bounds = array<i64: 1, 128>}, {transform_indices = @transform_4, window_bounds = array<i64: 1, 16, 128>}]} {
    %c0 = arith.constant 0 : index
    %c0_0 = arith.constant 0 : index
    %c0_1 = arith.constant 0 : index
    %0 = vector.load %arg4[%c0, %c0_0, %c0_1] : memref<1x16x128xf32, #tpu.memory_space<vmem>>, vector<1x16x128xf32>
    %1 = vector.shape_cast %0 : vector<1x16x128xf32> to vector<16x128xf32>
    %c0_2 = arith.constant 0 : index
    %c0_3 = arith.constant 0 : index
    %c0_4 = arith.constant 0 : index
    %2 = vector.load %arg2[%c0_2, %c0_3, %c0_4] : memref<1x18x54xbf16, #tpu.memory_space<vmem>>, vector<1x16x54xbf16>
    %3 = vector.shape_cast %2 : vector<1x16x54xbf16> to vector<16x54xbf16>
    %c0_5 = arith.constant 0 : index
    %c0_6 = arith.constant 0 : index
    %c0_7 = arith.constant 0 : index
    %4 = vector.load %arg3[%c0_5, %c0_6, %c0_7] : memref<3x54x128xbf16, #tpu.memory_space<vmem>>, vector<1x54x128xbf16>
    %5 = vector.shape_cast %4 : vector<1x54x128xbf16> to vector<54x128xbf16>
    %cst = arith.constant dense<0.000000e+00> : vector<16x128xf32>
    %6 = tpu.matmul %3, %5, %cst {dimension_numbers = #tpu.dot_dimension_numbers<[1], [0], [0], [1], [0, 0, 1, 1], [], []>} : vector<16x54xbf16>, vector<54x128xbf16>, vector<16x128xf32> -> vector<16x128xf32>
    %7 = arith.addf %1, %6 : vector<16x128xf32>
    %c0_8 = arith.constant 0 : index
    %c1 = arith.constant 1 : index
    %c0_9 = arith.constant 0 : index
    %8 = vector.load %arg2[%c0_8, %c1, %c0_9] : memref<1x18x54xbf16, #tpu.memory_space<vmem>>, vector<1x16x54xbf16>
    %9 = vector.shape_cast %8 : vector<1x16x54xbf16> to vector<16x54xbf16>
    %c1_10 = arith.constant 1 : index
    %c0_11 = arith.constant 0 : index
    %c0_12 = arith.constant 0 : index
    %10 = vector.load %arg3[%c1_10, %c0_11, %c0_12] : memref<3x54x128xbf16, #tpu.memory_space<vmem>>, vector<1x54x128xbf16>
    %11 = vector.shape_cast %10 : vector<1x54x128xbf16> to vector<54x128xbf16>
    %cst_13 = arith.constant dense<0.000000e+00> : vector<16x128xf32>
    %12 = tpu.matmul %9, %11, %cst_13 {dimension_numbers = #tpu.dot_dimension_numbers<[1], [0], [0], [1], [0, 0, 1, 1], [], []>} : vector<16x54xbf16>, vector<54x128xbf16>, vector<16x128xf32> -> vector<16x128xf32>
    %13 = arith.addf %7, %12 : vector<16x128xf32>
    %c0_14 = arith.constant 0 : index
    %c2 = arith.constant 2 : index
    %c0_15 = arith.constant 0 : index
    %14 = vector.load %arg2[%c0_14, %c2, %c0_15] : memref<1x18x54xbf16, #tpu.memory_space<vmem>>, vector<1x16x54xbf16>
    %15 = vector.shape_cast %14 : vector<1x16x54xbf16> to vector<16x54xbf16>
    %c2_16 = arith.constant 2 : index
    %c0_17 = arith.constant 0 : index
    %c0_18 = arith.constant 0 : index
    %16 = vector.load %arg3[%c2_16, %c0_17, %c0_18] : memref<3x54x128xbf16, #tpu.memory_space<vmem>>, vector<1x54x128xbf16>
    %17 = vector.shape_cast %16 : vector<1x54x128xbf16> to vector<54x128xbf16>
    %cst_19 = arith.constant dense<0.000000e+00> : vector<16x128xf32>
    %18 = tpu.matmul %15, %17, %cst_19 {dimension_numbers = #tpu.dot_dimension_numbers<[1], [0], [0], [1], [0, 0, 1, 1], [], []>} : vector<16x54xbf16>, vector<54x128xbf16>, vector<16x128xf32> -> vector<16x128xf32>
    %19 = arith.addf %13, %18 : vector<16x128xf32>
    %c0_20 = arith.constant 0 : index
    %c0_21 = arith.constant 0 : index
    %20 = vector.load %arg5[%c0_20, %c0_21] : memref<1x128xf32, #tpu.memory_space<vmem>>, vector<1x128xf32>
    %21 = vector.broadcast %20 : vector<1x128xf32> to vector<16x128xf32>
    %22 = arith.cmpf ogt, %19, %21 : vector<16x128xf32>
    %23 = vector.broadcast %20 : vector<1x128xf32> to vector<16x128xf32>
    %24 = arith.subf %19, %23 : vector<16x128xf32>
    %cst_22 = arith.constant 0.000000e+00 : f32
    %25 = vector.broadcast %cst_22 : f32 to vector<1x128xf32>
    %26 = arith.subf %25, %20 : vector<1x128xf32>
    %27 = vector.broadcast %26 : vector<1x128xf32> to vector<16x128xf32>
    %28 = arith.cmpf olt, %19, %27 : vector<16x128xf32>
    %29 = vector.broadcast %20 : vector<1x128xf32> to vector<16x128xf32>
    %30 = arith.addf %19, %29 : vector<16x128xf32>
    %cst_23 = arith.constant 0.000000e+00 : f32
    %31 = vector.broadcast %cst_23 : f32 to vector<16x128xf32>
    %32 = arith.select %28, %30, %31 : vector<16x128xi1>, vector<16x128xf32>
    %33 = arith.select %22, %24, %32 : vector<16x128xi1>, vector<16x128xf32>
    %c0_24 = arith.constant 0 : index
    %c0_25 = arith.constant 0 : index
    %c0_26 = arith.constant 0 : index
    %34 = vector.load %arg6[%c0_24, %c0_25, %c0_26] : memref<1x16x128xf32, #tpu.memory_space<vmem>>, vector<1x16x128xf32>
    %35 = vector.shape_cast %34 : vector<1x16x128xf32> to vector<16x128xf32>
    %36 = vector.shape_cast %33 : vector<16x128xf32> to vector<1x16x128xf32>
    tpu.vector_store %arg6[%c0_24, %c0_25, %c0_26], %36 {strides = array<i32>} : memref<1x16x128xf32, #tpu.memory_space<vmem>>, vector<1x16x128xf32>,
    return
  }
  func.func @transform_0(%arg0: i32, %arg1: i32) -> (i32, i32, i32) {
    %c0_i32 = arith.constant 0 : i32
    %c0_i32_0 = arith.constant 0 : i32
    %c0_i32_1 = arith.constant 0 : i32
    return %arg0, %c0_i32, %c0_i32_0 : i32, i32, i32
  }
  func.func @transform_1(%arg0: i32, %arg1: i32) -> (i32, i32, i32) {
    %c0_i32 = arith.constant 0 : i32
    %c0_i32_0 = arith.constant 0 : i32
    %c0_i32_1 = arith.constant 0 : i32
    %c0_i32_2 = arith.constant 0 : i32
    return %c0_i32, %c0_i32_0, %c0_i32_1 : i32, i32, i32
  }
  func.func @transform_2(%arg0: i32, %arg1: i32) -> (i32, i32, i32) {
    %c0_i32 = arith.constant 0 : i32
    %c0_i32_0 = arith.constant 0 : i32
    return %arg0, %c0_i32, %arg1 : i32, i32, i32
  }
  func.func @transform_3(%arg0: i32, %arg1: i32) -> (i32, i32) {
    %c0_i32 = arith.constant 0 : i32
    %c0_i32_0 = arith.constant 0 : i32
    %c0_i32_1 = arith.constant 0 : i32
    return %c0_i32, %c0_i32_0 : i32, i32
  }
  func.func @transform_4(%arg0: i32, %arg1: i32) -> (i32, i32, i32) {
    %c0_i32 = arith.constant 0 : i32
    %c0_i32_0 = arith.constant 0 : i32
    return %arg0, %c0_i32, %arg1 : i32, i32, i32
  }
}

module attributes {stable_mosaic.version = 11 : i64} {
  func.func @_resize_kernel(%arg0: i32, %arg1: memref<1x16x128xf32, #tpu.memory_space<vmem>>, %arg2: memref<8x16xf32, #tpu.memory_space<vmem>>, %arg3: memref<128x64xf32, #tpu.memory_space<vmem>>, %arg4: memref<1x8x64xf32, #tpu.memory_space<vmem>>) attributes {dimension_semantics = [#tpu.dimension_semantics<parallel>], iteration_bounds = array<i64: 2>, scalar_prefetch = 0 : i64, scratch_operands = 0 : i64, tpu.core_type = #tpu.core_type<tc>, window_params = [{transform_indices = @transform_0, window_bounds = array<i64: 1, 16, 128>}, {pipeline_mode = #tpu.pipeline_mode<synchronous>, transform_indices = @transform_1, window_bounds = array<i64: 8, 16>}, {pipeline_mode = #tpu.pipeline_mode<synchronous>, transform_indices = @transform_2, window_bounds = array<i64: 128, 64>}, {transform_indices = @transform_3, window_bounds = array<i64: 1, 8, 64>}]} {
    %c0 = arith.constant 0 : index
    %c0_0 = arith.constant 0 : index
    %0 = vector.load %arg2[%c0, %c0_0] : memref<8x16xf32, #tpu.memory_space<vmem>>, vector<8x16xf32>
    %c0_1 = arith.constant 0 : index
    %c0_2 = arith.constant 0 : index
    %c0_3 = arith.constant 0 : index
    %1 = vector.load %arg1[%c0_1, %c0_2, %c0_3] : memref<1x16x128xf32, #tpu.memory_space<vmem>>, vector<1x16x128xf32>
    %2 = vector.shape_cast %1 : vector<1x16x128xf32> to vector<16x128xf32>
    %cst = arith.constant dense<0.000000e+00> : vector<8x128xf32>
    %3 = tpu.matmul %0, %2, %cst {dimension_numbers = #tpu.dot_dimension_numbers<[1], [0], [0], [1], [0, 0, 1, 1], [], []>} : vector<8x16xf32>, vector<16x128xf32>, vector<8x128xf32> -> vector<8x128xf32>
    %c0_4 = arith.constant 0 : index
    %c0_5 = arith.constant 0 : index
    %4 = vector.load %arg3[%c0_4, %c0_5] : memref<128x64xf32, #tpu.memory_space<vmem>>, vector<128x64xf32>
    %cst_6 = arith.constant dense<0.000000e+00> : vector<8x64xf32>
    %5 = tpu.matmul %3, %4, %cst_6 {dimension_numbers = #tpu.dot_dimension_numbers<[1], [0], [0], [1], [0, 0, 1, 1], [], []>} : vector<8x128xf32>, vector<128x64xf32>, vector<8x64xf32> -> vector<8x64xf32>
    %c0_7 = arith.constant 0 : index
    %c0_8 = arith.constant 0 : index
    %c0_9 = arith.constant 0 : index
    %6 = vector.load %arg4[%c0_7, %c0_8, %c0_9] : memref<1x8x64xf32, #tpu.memory_space<vmem>>, vector<1x8x64xf32>
    %7 = vector.shape_cast %6 : vector<1x8x64xf32> to vector<8x64xf32>
    %8 = vector.shape_cast %5 : vector<8x64xf32> to vector<1x8x64xf32>
    tpu.vector_store %arg4[%c0_7, %c0_8, %c0_9], %8 {strides = array<i32>} : memref<1x8x64xf32, #tpu.memory_space<vmem>>, vector<1x8x64xf32>,
    return
  }
  func.func @transform_0(%arg0: i32) -> (i32, i32, i32) {
    %c0_i32 = arith.constant 0 : i32
    %c0_i32_0 = arith.constant 0 : i32
    %c0_i32_1 = arith.constant 0 : i32
    return %arg0, %c0_i32, %c0_i32_0 : i32, i32, i32
  }
  func.func @transform_1(%arg0: i32) -> (i32, i32) {
    %c0_i32 = arith.constant 0 : i32
    %c0_i32_0 = arith.constant 0 : i32
    %c0_i32_1 = arith.constant 0 : i32
    return %c0_i32, %c0_i32_0 : i32, i32
  }
  func.func @transform_2(%arg0: i32) -> (i32, i32) {
    %c0_i32 = arith.constant 0 : i32
    %c0_i32_0 = arith.constant 0 : i32
    %c0_i32_1 = arith.constant 0 : i32
    return %c0_i32, %c0_i32_0 : i32, i32
  }
  func.func @transform_3(%arg0: i32) -> (i32, i32, i32) {
    %c0_i32 = arith.constant 0 : i32
    %c0_i32_0 = arith.constant 0 : i32
    %c0_i32_1 = arith.constant 0 : i32
    return %arg0, %c0_i32, %c0_i32_0 : i32, i32, i32
  }
}

module attributes {stable_mosaic.version = 11 : i64} {
  func.func @_resize_kernel(%arg0: i32, %arg1: memref<1x8x8xf32, #tpu.memory_space<vmem>>, %arg2: memref<16x8xf32, #tpu.memory_space<vmem>>, %arg3: memref<8x16xf32, #tpu.memory_space<vmem>>, %arg4: memref<1x16x16xf32, #tpu.memory_space<vmem>>) attributes {dimension_semantics = [#tpu.dimension_semantics<parallel>], iteration_bounds = array<i64: 2>, scalar_prefetch = 0 : i64, scratch_operands = 0 : i64, tpu.core_type = #tpu.core_type<tc>, window_params = [{transform_indices = @transform_0, window_bounds = array<i64: 1, 8, 8>}, {pipeline_mode = #tpu.pipeline_mode<synchronous>, transform_indices = @transform_1, window_bounds = array<i64: 16, 8>}, {pipeline_mode = #tpu.pipeline_mode<synchronous>, transform_indices = @transform_2, window_bounds = array<i64: 8, 16>}, {transform_indices = @transform_3, window_bounds = array<i64: 1, 16, 16>}]} {
    %c0 = arith.constant 0 : index
    %c0_0 = arith.constant 0 : index
    %0 = vector.load %arg2[%c0, %c0_0] : memref<16x8xf32, #tpu.memory_space<vmem>>, vector<16x8xf32>
    %c0_1 = arith.constant 0 : index
    %c0_2 = arith.constant 0 : index
    %c0_3 = arith.constant 0 : index
    %1 = vector.load %arg1[%c0_1, %c0_2, %c0_3] : memref<1x8x8xf32, #tpu.memory_space<vmem>>, vector<1x8x8xf32>
    %2 = vector.shape_cast %1 : vector<1x8x8xf32> to vector<8x8xf32>
    %cst = arith.constant dense<0.000000e+00> : vector<16x8xf32>
    %3 = tpu.matmul %0, %2, %cst {dimension_numbers = #tpu.dot_dimension_numbers<[1], [0], [0], [1], [0, 0, 1, 1], [], []>} : vector<16x8xf32>, vector<8x8xf32>, vector<16x8xf32> -> vector<16x8xf32>
    %c0_4 = arith.constant 0 : index
    %c0_5 = arith.constant 0 : index
    %4 = vector.load %arg3[%c0_4, %c0_5] : memref<8x16xf32, #tpu.memory_space<vmem>>, vector<8x16xf32>
    %cst_6 = arith.constant dense<0.000000e+00> : vector<16x16xf32>
    %5 = tpu.matmul %3, %4, %cst_6 {dimension_numbers = #tpu.dot_dimension_numbers<[1], [0], [0], [1], [0, 0, 1, 1], [], []>} : vector<16x8xf32>, vector<8x16xf32>, vector<16x16xf32> -> vector<16x16xf32>
    %c0_7 = arith.constant 0 : index
    %c0_8 = arith.constant 0 : index
    %c0_9 = arith.constant 0 : index
    %6 = vector.load %arg4[%c0_7, %c0_8, %c0_9] : memref<1x16x16xf32, #tpu.memory_space<vmem>>, vector<1x16x16xf32>
    %7 = vector.shape_cast %6 : vector<1x16x16xf32> to vector<16x16xf32>
    %8 = vector.shape_cast %5 : vector<16x16xf32> to vector<1x16x16xf32>
    tpu.vector_store %arg4[%c0_7, %c0_8, %c0_9], %8 {strides = array<i32>} : memref<1x16x16xf32, #tpu.memory_space<vmem>>, vector<1x16x16xf32>,
    return
  }
  func.func @transform_0(%arg0: i32) -> (i32, i32, i32) {
    %c0_i32 = arith.constant 0 : i32
    %c0_i32_0 = arith.constant 0 : i32
    %c0_i32_1 = arith.constant 0 : i32
    return %arg0, %c0_i32, %c0_i32_0 : i32, i32, i32
  }
  func.func @transform_1(%arg0: i32) -> (i32, i32) {
    %c0_i32 = arith.constant 0 : i32
    %c0_i32_0 = arith.constant 0 : i32
    %c0_i32_1 = arith.constant 0 : i32
    return %c0_i32, %c0_i32_0 : i32, i32
  }
  func.func @transform_2(%arg0: i32) -> (i32, i32) {
    %c0_i32 = arith.constant 0 : i32
    %c0_i32_0 = arith.constant 0 : i32
    %c0_i32_1 = arith.constant 0 : i32
    return %c0_i32, %c0_i32_0 : i32, i32
  }
  func.func @transform_3(%arg0: i32) -> (i32, i32, i32) {
    %c0_i32 = arith.constant 0 : i32
    %c0_i32_0 = arith.constant 0 : i32
    %c0_i32_1 = arith.constant 0 : i32
    return %arg0, %c0_i32, %c0_i32_0 : i32, i32, i32
  }
}

module attributes {stable_mosaic.version = 11 : i64} {
  func.func @_gf_kernel(%arg0: memref<2x10x80xf32, #tpu.memory_space<vmem>>, %arg1: memref<2x10x80xf32, #tpu.memory_space<vmem>>, %arg2: memref<8x64xf32, #tpu.memory_space<vmem>>, %arg3: memref<2x8x64xf32, #tpu.memory_space<vmem>>, %arg4: memref<2x8x64xf32, #tpu.memory_space<vmem>>) attributes {dimension_semantics = [], scalar_prefetch = 0 : i64, scratch_operands = 0 : i64, tpu.core_type = #tpu.core_type<tc>} {
    %c0 = arith.constant 0 : index
    %c0_0 = arith.constant 0 : index
    %c0_1 = arith.constant 0 : index
    %0 = vector.load %arg0[%c0, %c0_0, %c0_1] : memref<2x10x80xf32, #tpu.memory_space<vmem>>, vector<2x8x80xf32>
    %c0_2 = arith.constant 0 : index
    %c0_3 = arith.constant 0 : index
    %c0_4 = arith.constant 0 : index
    %1 = vector.load %arg1[%c0_2, %c0_3, %c0_4] : memref<2x10x80xf32, #tpu.memory_space<vmem>>, vector<2x8x80xf32>
    %2 = arith.mulf %0, %0 : vector<2x8x80xf32>
    %3 = arith.mulf %0, %1 : vector<2x8x80xf32>
    %c0_5 = arith.constant 0 : index
    %c1 = arith.constant 1 : index
    %c0_6 = arith.constant 0 : index
    %4 = vector.load %arg0[%c0_5, %c1, %c0_6] : memref<2x10x80xf32, #tpu.memory_space<vmem>>, vector<2x8x80xf32>
    %c0_7 = arith.constant 0 : index
    %c1_8 = arith.constant 1 : index
    %c0_9 = arith.constant 0 : index
    %5 = vector.load %arg1[%c0_7, %c1_8, %c0_9] : memref<2x10x80xf32, #tpu.memory_space<vmem>>, vector<2x8x80xf32>
    %6 = arith.addf %0, %4 : vector<2x8x80xf32>
    %7 = arith.addf %1, %5 : vector<2x8x80xf32>
    %8 = arith.mulf %4, %4 : vector<2x8x80xf32>
    %9 = arith.addf %2, %8 : vector<2x8x80xf32>
    %10 = arith.mulf %4, %5 : vector<2x8x80xf32>
    %11 = arith.addf %3, %10 : vector<2x8x80xf32>
    %c0_10 = arith.constant 0 : index
    %c2 = arith.constant 2 : index
    %c0_11 = arith.constant 0 : index
    %12 = vector.load %arg0[%c0_10, %c2, %c0_11] : memref<2x10x80xf32, #tpu.memory_space<vmem>>, vector<2x8x80xf32>
    %c0_12 = arith.constant 0 : index
    %c2_13 = arith.constant 2 : index
    %c0_14 = arith.constant 0 : index
    %13 = vector.load %arg1[%c0_12, %c2_13, %c0_14] : memref<2x10x80xf32, #tpu.memory_space<vmem>>, vector<2x8x80xf32>
    %14 = arith.addf %6, %12 : vector<2x8x80xf32>
    %15 = arith.addf %7, %13 : vector<2x8x80xf32>
    %16 = arith.mulf %12, %12 : vector<2x8x80xf32>
    %17 = arith.addf %9, %16 : vector<2x8x80xf32>
    %18 = arith.mulf %12, %13 : vector<2x8x80xf32>
    %19 = arith.addf %11, %18 : vector<2x8x80xf32>
    %20 = vector.extract_strided_slice %14 {offsets = [0, 0, 0], sizes = [2, 8, 64], strides = [1, 1, 1]} : vector<2x8x80xf32> to vector<2x8x64xf32>
    %21 = vector.extract_strided_slice %15 {offsets = [0, 0, 0], sizes = [2, 8, 64], strides = [1, 1, 1]} : vector<2x8x80xf32> to vector<2x8x64xf32>
    %22 = vector.extract_strided_slice %17 {offsets = [0, 0, 0], sizes = [2, 8, 64], strides = [1, 1, 1]} : vector<2x8x80xf32> to vector<2x8x64xf32>
    %23 = vector.extract_strided_slice %19 {offsets = [0, 0, 0], sizes = [2, 8, 64], strides = [1, 1, 1]} : vector<2x8x80xf32> to vector<2x8x64xf32>
    %24 = vector.extract_strided_slice %14 {offsets = [0, 0, 8], sizes = [2, 8, 64], strides = [1, 1, 1]} : vector<2x8x80xf32> to vector<2x8x64xf32>
    %25 = arith.addf %20, %24 : vector<2x8x64xf32>
    %26 = vector.extract_strided_slice %15 {offsets = [0, 0, 8], sizes = [2, 8, 64], strides = [1, 1, 1]} : vector<2x8x80xf32> to vector<2x8x64xf32>
    %27 = arith.addf %21, %26 : vector<2x8x64xf32>
    %28 = vector.extract_strided_slice %17 {offsets = [0, 0, 8], sizes = [2, 8, 64], strides = [1, 1, 1]} : vector<2x8x80xf32> to vector<2x8x64xf32>
    %29 = arith.addf %22, %28 : vector<2x8x64xf32>
    %30 = vector.extract_strided_slice %19 {offsets = [0, 0, 8], sizes = [2, 8, 64], strides = [1, 1, 1]} : vector<2x8x80xf32> to vector<2x8x64xf32>
    %31 = arith.addf %23, %30 : vector<2x8x64xf32>
    %32 = vector.extract_strided_slice %14 {offsets = [0, 0, 16], sizes = [2, 8, 64], strides = [1, 1, 1]} : vector<2x8x80xf32> to vector<2x8x64xf32>
    %33 = arith.addf %25, %32 : vector<2x8x64xf32>
    %34 = vector.extract_strided_slice %15 {offsets = [0, 0, 16], sizes = [2, 8, 64], strides = [1, 1, 1]} : vector<2x8x80xf32> to vector<2x8x64xf32>
    %35 = arith.addf %27, %34 : vector<2x8x64xf32>
    %36 = vector.extract_strided_slice %17 {offsets = [0, 0, 16], sizes = [2, 8, 64], strides = [1, 1, 1]} : vector<2x8x80xf32> to vector<2x8x64xf32>
    %37 = arith.addf %29, %36 : vector<2x8x64xf32>
    %38 = vector.extract_strided_slice %19 {offsets = [0, 0, 16], sizes = [2, 8, 64], strides = [1, 1, 1]} : vector<2x8x80xf32> to vector<2x8x64xf32>
    %39 = arith.addf %31, %38 : vector<2x8x64xf32>
    %c0_15 = arith.constant 0 : index
    %c0_16 = arith.constant 0 : index
    %40 = vector.load %arg2[%c0_15, %c0_16] : memref<8x64xf32, #tpu.memory_space<vmem>>, vector<8x64xf32>
    %41 = vector.shape_cast %40 : vector<8x64xf32> to vector<1x8x64xf32>
    %42 = vector.broadcast %41 : vector<1x8x64xf32> to vector<2x8x64xf32>
    %43 = arith.mulf %33, %42 : vector<2x8x64xf32>
    %44 = vector.shape_cast %40 : vector<8x64xf32> to vector<1x8x64xf32>
    %45 = vector.broadcast %44 : vector<1x8x64xf32> to vector<2x8x64xf32>
    %46 = arith.mulf %35, %45 : vector<2x8x64xf32>
    %47 = vector.shape_cast %40 : vector<8x64xf32> to vector<1x8x64xf32>
    %48 = vector.broadcast %47 : vector<1x8x64xf32> to vector<2x8x64xf32>
    %49 = arith.mulf %37, %48 : vector<2x8x64xf32>
    %50 = arith.mulf %43, %43 : vector<2x8x64xf32>
    %51 = arith.subf %49, %50 : vector<2x8x64xf32>
    %52 = vector.shape_cast %40 : vector<8x64xf32> to vector<1x8x64xf32>
    %53 = vector.broadcast %52 : vector<1x8x64xf32> to vector<2x8x64xf32>
    %54 = arith.mulf %39, %53 : vector<2x8x64xf32>
    %55 = arith.mulf %43, %46 : vector<2x8x64xf32>
    %56 = arith.subf %54, %55 : vector<2x8x64xf32>
    %cst = arith.constant 9.99999974E-5 : f32
    %57 = vector.broadcast %cst : f32 to vector<2x8x64xf32>
    %58 = arith.addf %51, %57 : vector<2x8x64xf32>
    %59 = arith.divf %56, %58 : vector<2x8x64xf32>
    %c0_17 = arith.constant 0 : index
    %c0_18 = arith.constant 0 : index
    %c0_19 = arith.constant 0 : index
    %60 = vector.load %arg3[%c0_17, %c0_18, %c0_19] : memref<2x8x64xf32, #tpu.memory_space<vmem>>, vector<2x8x64xf32>
    tpu.vector_store %arg3[%c0_17, %c0_18, %c0_19], %59 {strides = array<i32>} : memref<2x8x64xf32, #tpu.memory_space<vmem>>, vector<2x8x64xf32>,
    %61 = arith.mulf %59, %43 : vector<2x8x64xf32>
    %62 = arith.subf %46, %61 : vector<2x8x64xf32>
    %c0_20 = arith.constant 0 : index
    %c0_21 = arith.constant 0 : index
    %c0_22 = arith.constant 0 : index
    %63 = vector.load %arg4[%c0_20, %c0_21, %c0_22] : memref<2x8x64xf32, #tpu.memory_space<vmem>>, vector<2x8x64xf32>
    tpu.vector_store %arg4[%c0_20, %c0_21, %c0_22], %62 {strides = array<i32>} : memref<2x8x64xf32, #tpu.memory_space<vmem>>, vector<2x8x64xf32>,
    return
  }
}

module attributes {stable_mosaic.version = 11 : i64} {
  func.func @_resize_kernel(%arg0: i32, %arg1: memref<1x8x64xf32, #tpu.memory_space<vmem>>, %arg2: memref<16x8xf32, #tpu.memory_space<vmem>>, %arg3: memref<64x128xf32, #tpu.memory_space<vmem>>, %arg4: memref<1x16x128xf32, #tpu.memory_space<vmem>>) attributes {dimension_semantics = [#tpu.dimension_semantics<parallel>], iteration_bounds = array<i64: 2>, scalar_prefetch = 0 : i64, scratch_operands = 0 : i64, tpu.core_type = #tpu.core_type<tc>, window_params = [{transform_indices = @transform_0, window_bounds = array<i64: 1, 8, 64>}, {pipeline_mode = #tpu.pipeline_mode<synchronous>, transform_indices = @transform_1, window_bounds = array<i64: 16, 8>}, {pipeline_mode = #tpu.pipeline_mode<synchronous>, transform_indices = @transform_2, window_bounds = array<i64: 64, 128>}, {transform_indices = @transform_3, window_bounds = array<i64: 1, 16, 128>}]} {
    %c0 = arith.constant 0 : index
    %c0_0 = arith.constant 0 : index
    %0 = vector.load %arg2[%c0, %c0_0] : memref<16x8xf32, #tpu.memory_space<vmem>>, vector<16x8xf32>
    %c0_1 = arith.constant 0 : index
    %c0_2 = arith.constant 0 : index
    %c0_3 = arith.constant 0 : index
    %1 = vector.load %arg1[%c0_1, %c0_2, %c0_3] : memref<1x8x64xf32, #tpu.memory_space<vmem>>, vector<1x8x64xf32>
    %2 = vector.shape_cast %1 : vector<1x8x64xf32> to vector<8x64xf32>
    %cst = arith.constant dense<0.000000e+00> : vector<16x64xf32>
    %3 = tpu.matmul %0, %2, %cst {dimension_numbers = #tpu.dot_dimension_numbers<[1], [0], [0], [1], [0, 0, 1, 1], [], []>} : vector<16x8xf32>, vector<8x64xf32>, vector<16x64xf32> -> vector<16x64xf32>
    %c0_4 = arith.constant 0 : index
    %c0_5 = arith.constant 0 : index
    %4 = vector.load %arg3[%c0_4, %c0_5] : memref<64x128xf32, #tpu.memory_space<vmem>>, vector<64x128xf32>
    %cst_6 = arith.constant dense<0.000000e+00> : vector<16x128xf32>
    %5 = tpu.matmul %3, %4, %cst_6 {dimension_numbers = #tpu.dot_dimension_numbers<[1], [0], [0], [1], [0, 0, 1, 1], [], []>} : vector<16x64xf32>, vector<64x128xf32>, vector<16x128xf32> -> vector<16x128xf32>
    %c0_7 = arith.constant 0 : index
    %c0_8 = arith.constant 0 : index
    %c0_9 = arith.constant 0 : index
    %6 = vector.load %arg4[%c0_7, %c0_8, %c0_9] : memref<1x16x128xf32, #tpu.memory_space<vmem>>, vector<1x16x128xf32>
    %7 = vector.shape_cast %6 : vector<1x16x128xf32> to vector<16x128xf32>
    %8 = vector.shape_cast %5 : vector<16x128xf32> to vector<1x16x128xf32>
    tpu.vector_store %arg4[%c0_7, %c0_8, %c0_9], %8 {strides = array<i32>} : memref<1x16x128xf32, #tpu.memory_space<vmem>>, vector<1x16x128xf32>,
    return
  }
  func.func @transform_0(%arg0: i32) -> (i32, i32, i32) {
    %c0_i32 = arith.constant 0 : i32
    %c0_i32_0 = arith.constant 0 : i32
    %c0_i32_1 = arith.constant 0 : i32
    return %arg0, %c0_i32, %c0_i32_0 : i32, i32, i32
  }
  func.func @transform_1(%arg0: i32) -> (i32, i32) {
    %c0_i32 = arith.constant 0 : i32
    %c0_i32_0 = arith.constant 0 : i32
    %c0_i32_1 = arith.constant 0 : i32
    return %c0_i32, %c0_i32_0 : i32, i32
  }
  func.func @transform_2(%arg0: i32) -> (i32, i32) {
    %c0_i32 = arith.constant 0 : i32
    %c0_i32_0 = arith.constant 0 : i32
    %c0_i32_1 = arith.constant 0 : i32
    return %c0_i32, %c0_i32_0 : i32, i32
  }
  func.func @transform_3(%arg0: i32) -> (i32, i32, i32) {
    %c0_i32 = arith.constant 0 : i32
    %c0_i32_0 = arith.constant 0 : i32
    %c0_i32_1 = arith.constant 0 : i32
    return %arg0, %c0_i32, %c0_i32_0 : i32, i32, i32
  }
}

module attributes {stable_mosaic.version = 11 : i64} {
  func.func @_conv3x3_kernel(%arg0: i32, %arg1: i32, %arg2: memref<1x18x288xbf16, #tpu.memory_space<vmem>>, %arg3: memref<1x18x288xbf16, #tpu.memory_space<vmem>>, %arg4: memref<1x18x288xbf16, #tpu.memory_space<vmem>>, %arg5: memref<3x288x32xbf16, #tpu.memory_space<vmem>>, %arg6: memref<1x16x32xf32, #tpu.memory_space<vmem>>, %arg7: memref<1x16x32xf32, #tpu.memory_space<vmem>>) attributes {dimension_semantics = [#tpu.dimension_semantics<parallel>, #tpu.dimension_semantics<parallel>], iteration_bounds = array<i64: 1, 1>, scalar_prefetch = 0 : i64, scratch_operands = 0 : i64, tpu.core_type = #tpu.core_type<tc>, window_params = [{transform_indices = @transform_0, window_bounds = array<i64: 1, 18, 288>}, {transform_indices = @transform_1, window_bounds = array<i64: 1, 18, 288>}, {transform_indices = @transform_2, window_bounds = array<i64: 1, 18, 288>}, {pipeline_mode = #tpu.pipeline_mode<synchronous>, transform_indices = @transform_3, window_bounds = array<i64: 3, 288, 32>}, {transform_indices = @transform_4, window_bounds = array<i64: 1, 16, 32>}, {transform_indices = @transform_5, window_bounds = array<i64: 1, 16, 32>}]} {
    %c0 = arith.constant 0 : index
    %c0_0 = arith.constant 0 : index
    %c0_1 = arith.constant 0 : index
    %0 = vector.load %arg6[%c0, %c0_0, %c0_1] : memref<1x16x32xf32, #tpu.memory_space<vmem>>, vector<1x16x32xf32>
    %1 = vector.shape_cast %0 : vector<1x16x32xf32> to vector<16x32xf32>
    %c0_2 = arith.constant 0 : index
    %c0_3 = arith.constant 0 : index
    %c0_4 = arith.constant 0 : index
    %2 = vector.load %arg2[%c0_2, %c0_3, %c0_4] : memref<1x18x288xbf16, #tpu.memory_space<vmem>>, vector<1x16x288xbf16>
    %3 = vector.shape_cast %2 : vector<1x16x288xbf16> to vector<16x288xbf16>
    %c0_5 = arith.constant 0 : index
    %c0_6 = arith.constant 0 : index
    %c0_7 = arith.constant 0 : index
    %4 = vector.load %arg3[%c0_5, %c0_6, %c0_7] : memref<1x18x288xbf16, #tpu.memory_space<vmem>>, vector<1x16x288xbf16>
    %5 = vector.shape_cast %4 : vector<1x16x288xbf16> to vector<16x288xbf16>
    %6 = arith.mulf %3, %5 : vector<16x288xbf16>
    %c0_8 = arith.constant 0 : index
    %c0_9 = arith.constant 0 : index
    %c0_10 = arith.constant 0 : index
    %7 = vector.load %arg4[%c0_8, %c0_9, %c0_10] : memref<1x18x288xbf16, #tpu.memory_space<vmem>>, vector<1x16x288xbf16>
    %8 = vector.shape_cast %7 : vector<1x16x288xbf16> to vector<16x288xbf16>
    %9 = arith.addf %6, %8 : vector<16x288xbf16>
    %c0_11 = arith.constant 0 : index
    %c0_12 = arith.constant 0 : index
    %c0_13 = arith.constant 0 : index
    %10 = vector.load %arg5[%c0_11, %c0_12, %c0_13] : memref<3x288x32xbf16, #tpu.memory_space<vmem>>, vector<1x288x32xbf16>
    %11 = vector.shape_cast %10 : vector<1x288x32xbf16> to vector<288x32xbf16>
    %cst = arith.constant dense<0.000000e+00> : vector<16x32xf32>
    %12 = tpu.matmul %9, %11, %cst {dimension_numbers = #tpu.dot_dimension_numbers<[1], [0], [0], [1], [0, 0, 1, 1], [], []>} : vector<16x288xbf16>, vector<288x32xbf16>, vector<16x32xf32> -> vector<16x32xf32>
    %13 = arith.addf %1, %12 : vector<16x32xf32>
    %c0_14 = arith.constant 0 : index
    %c1 = arith.constant 1 : index
    %c0_15 = arith.constant 0 : index
    %14 = vector.load %arg2[%c0_14, %c1, %c0_15] : memref<1x18x288xbf16, #tpu.memory_space<vmem>>, vector<1x16x288xbf16>
    %15 = vector.shape_cast %14 : vector<1x16x288xbf16> to vector<16x288xbf16>
    %c0_16 = arith.constant 0 : index
    %c1_17 = arith.constant 1 : index
    %c0_18 = arith.constant 0 : index
    %16 = vector.load %arg3[%c0_16, %c1_17, %c0_18] : memref<1x18x288xbf16, #tpu.memory_space<vmem>>, vector<1x16x288xbf16>
    %17 = vector.shape_cast %16 : vector<1x16x288xbf16> to vector<16x288xbf16>
    %18 = arith.mulf %15, %17 : vector<16x288xbf16>
    %c0_19 = arith.constant 0 : index
    %c1_20 = arith.constant 1 : index
    %c0_21 = arith.constant 0 : index
    %19 = vector.load %arg4[%c0_19, %c1_20, %c0_21] : memref<1x18x288xbf16, #tpu.memory_space<vmem>>, vector<1x16x288xbf16>
    %20 = vector.shape_cast %19 : vector<1x16x288xbf16> to vector<16x288xbf16>
    %21 = arith.addf %18, %20 : vector<16x288xbf16>
    %c1_22 = arith.constant 1 : index
    %c0_23 = arith.constant 0 : index
    %c0_24 = arith.constant 0 : index
    %22 = vector.load %arg5[%c1_22, %c0_23, %c0_24] : memref<3x288x32xbf16, #tpu.memory_space<vmem>>, vector<1x288x32xbf16>
    %23 = vector.shape_cast %22 : vector<1x288x32xbf16> to vector<288x32xbf16>
    %cst_25 = arith.constant dense<0.000000e+00> : vector<16x32xf32>
    %24 = tpu.matmul %21, %23, %cst_25 {dimension_numbers = #tpu.dot_dimension_numbers<[1], [0], [0], [1], [0, 0, 1, 1], [], []>} : vector<16x288xbf16>, vector<288x32xbf16>, vector<16x32xf32> -> vector<16x32xf32>
    %25 = arith.addf %13, %24 : vector<16x32xf32>
    %c0_26 = arith.constant 0 : index
    %c2 = arith.constant 2 : index
    %c0_27 = arith.constant 0 : index
    %26 = vector.load %arg2[%c0_26, %c2, %c0_27] : memref<1x18x288xbf16, #tpu.memory_space<vmem>>, vector<1x16x288xbf16>
    %27 = vector.shape_cast %26 : vector<1x16x288xbf16> to vector<16x288xbf16>
    %c0_28 = arith.constant 0 : index
    %c2_29 = arith.constant 2 : index
    %c0_30 = arith.constant 0 : index
    %28 = vector.load %arg3[%c0_28, %c2_29, %c0_30] : memref<1x18x288xbf16, #tpu.memory_space<vmem>>, vector<1x16x288xbf16>
    %29 = vector.shape_cast %28 : vector<1x16x288xbf16> to vector<16x288xbf16>
    %30 = arith.mulf %27, %29 : vector<16x288xbf16>
    %c0_31 = arith.constant 0 : index
    %c2_32 = arith.constant 2 : index
    %c0_33 = arith.constant 0 : index
    %31 = vector.load %arg4[%c0_31, %c2_32, %c0_33] : memref<1x18x288xbf16, #tpu.memory_space<vmem>>, vector<1x16x288xbf16>
    %32 = vector.shape_cast %31 : vector<1x16x288xbf16> to vector<16x288xbf16>
    %33 = arith.addf %30, %32 : vector<16x288xbf16>
    %c2_34 = arith.constant 2 : index
    %c0_35 = arith.constant 0 : index
    %c0_36 = arith.constant 0 : index
    %34 = vector.load %arg5[%c2_34, %c0_35, %c0_36] : memref<3x288x32xbf16, #tpu.memory_space<vmem>>, vector<1x288x32xbf16>
    %35 = vector.shape_cast %34 : vector<1x288x32xbf16> to vector<288x32xbf16>
    %cst_37 = arith.constant dense<0.000000e+00> : vector<16x32xf32>
    %36 = tpu.matmul %33, %35, %cst_37 {dimension_numbers = #tpu.dot_dimension_numbers<[1], [0], [0], [1], [0, 0, 1, 1], [], []>} : vector<16x288xbf16>, vector<288x32xbf16>, vector<16x32xf32> -> vector<16x32xf32>
    %37 = arith.addf %25, %36 : vector<16x32xf32>
    %c0_38 = arith.constant 0 : index
    %c0_39 = arith.constant 0 : index
    %c0_40 = arith.constant 0 : index
    %38 = vector.load %arg7[%c0_38, %c0_39, %c0_40] : memref<1x16x32xf32, #tpu.memory_space<vmem>>, vector<1x16x32xf32>
    %39 = vector.shape_cast %38 : vector<1x16x32xf32> to vector<16x32xf32>
    %40 = vector.shape_cast %37 : vector<16x32xf32> to vector<1x16x32xf32>
    tpu.vector_store %arg7[%c0_38, %c0_39, %c0_40], %40 {strides = array<i32>} : memref<1x16x32xf32, #tpu.memory_space<vmem>>, vector<1x16x32xf32>,
    return
  }
  func.func @transform_0(%arg0: i32, %arg1: i32) -> (i32, i32, i32) {
    %c0_i32 = arith.constant 0 : i32
    %c0_i32_0 = arith.constant 0 : i32
    %c0_i32_1 = arith.constant 0 : i32
    return %arg0, %c0_i32, %c0_i32_0 : i32, i32, i32
  }
  func.func @transform_1(%arg0: i32, %arg1: i32) -> (i32, i32, i32) {
    %c0_i32 = arith.constant 0 : i32
    %c0_i32_0 = arith.constant 0 : i32
    %c0_i32_1 = arith.constant 0 : i32
    return %arg0, %c0_i32, %c0_i32_0 : i32, i32, i32
  }
  func.func @transform_2(%arg0: i32, %arg1: i32) -> (i32, i32, i32) {
    %c0_i32 = arith.constant 0 : i32
    %c0_i32_0 = arith.constant 0 : i32
    %c0_i32_1 = arith.constant 0 : i32
    return %arg0, %c0_i32, %c0_i32_0 : i32, i32, i32
  }
  func.func @transform_3(%arg0: i32, %arg1: i32) -> (i32, i32, i32) {
    %c0_i32 = arith.constant 0 : i32
    %c0_i32_0 = arith.constant 0 : i32
    %c0_i32_1 = arith.constant 0 : i32
    %c0_i32_2 = arith.constant 0 : i32
    return %c0_i32, %c0_i32_0, %c0_i32_1 : i32, i32, i32
  }
  func.func @transform_4(%arg0: i32, %arg1: i32) -> (i32, i32, i32) {
    %c0_i32 = arith.constant 0 : i32
    %c0_i32_0 = arith.constant 0 : i32
    return %arg0, %c0_i32, %arg1 : i32, i32, i32
  }
  func.func @transform_5(%arg0: i32, %arg1: i32) -> (i32, i32, i32) {
    %c0_i32 = arith.constant 0 : i32
    %c0_i32_0 = arith.constant 0 : i32
    return %arg0, %c0_i32, %arg1 : i32, i32, i32
  }
}

</mosaic_0001>

<llo_original>
// kernel: _lambda_.15
$region0: #{_lambda_.15}
  #allocation0 [shape = 'u32[]', space=smem, size = 0x4, offset = 0x4, fixed_abs, tag = 'smem constant byte address 0x4 - core index']
  #allocation1 [shape = 'u32[72,128]{1,0:T(1,128)}', space=vmem, size = 0x9000, scoped, tag = 'internal scratch']
  %s0 = inlined_call_operand.vmem [shape: bf16[1,10,20], index: 0, kind: input, shape index: {}]
  %s1 = inlined_call_operand.vmem [shape: bf16[3,20,128], index: 1, kind: input, shape index: {}]
  %s2 = inlined_call_operand.vmem [shape: f32[1,128], index: 2, kind: input, shape index: {}]
  %s3 = inlined_call_operand.vmem [shape: f32[1,8,128], index: 3, kind: output, shape index: {}]
  %s4 = sld [smem:[#allocation0]]
  $region22: #{_lambda_.15} parent=0
    _
  %s6 = ssub.s32 1, %s4
  %s7 = scalar_select 0, %s6, %s4
  // Predicated region
  $region2: #{_lambda_.15} parent=0 // pred_check
    _
  $region3: #{_lambda_.15} parent=0 // pred_check_branch
    %9 = sbr.rel (0) target = $region5
  $region4: #{_lambda_.15} parent=0 // pred_region
    _
  $region5: #{_lambda_.15} parent=0 // pred_fallthru
    _
  // Predicated region
  $region6: #{_lambda_.15} parent=0 // pred_check
    _
  $region7: #{_lambda_.15} parent=0 // pred_check_branch
    %11 = sbr.rel (0) target = $region9
  $region8: #{_lambda_.15} parent=0 // pred_region
    _
  $region9: #{_lambda_.15} parent=0 // pred_fallthru
    _
  // Predicated region
  $region10: #{_lambda_.15} parent=0 // pred_check
    _
  $region11: #{_lambda_.15} parent=0 // pred_check_branch
    %13 = sbr.rel (0) target = $region13
  $region12: #{_lambda_.15} parent=0 // pred_region
    _
  $region13: #{_lambda_.15} parent=0 // pred_fallthru
    _
  %v15 = vld [vmem:[%s0] sm:$0xf]
  %v16 = vld [vmem:[%s1] sm:$0xf]
  %v17 = vld [vmem:[%s1 + $0x4] sm:$0xf]
  %v18 = vld [vmem:[%s1 + $0x8] sm:$0x3]
  %v19 = vld [vmem:[%s0 + $0x4] sm:$0x1]
  %s20 = scalar_lea.vmem %s1, 12
  %v21 = vld [vmem:[%s20] sm:$0xf]
  %v22 = vld [vmem:[%s20 + $0x4] sm:$0xf]
  %v23 = vld [vmem:[%s20 + $0x8] sm:$0x3]
  %v26 = vunpack.c.l.b16 %v15
  %v27 = vunpack.c.l.b16 %v19
  %v28 = vpack.c.b16 %v27, %v26
  %v30 = vshrl.u32 %v28, 16
  %v32 = vshll.u32 %v28, 16
  %v34 = vrot.slane %v32, 1
  %v35 = vor.u32 %v30, %v34
  %v39 = vunpack.c.l.b16 %v21
  %v40 = vunpack.c.l.b16 %v22
  %v41 = vunpack.c.l.b16 %v23
  %v42 = vpack.c.b16 %v40, %v39
  %v43 = vpack.c.b16 %v41, %v41
  %vm45 = vcmask 162816
  %v47 = vsel %vm45, %v35, 0
  %vm49 = vcmask 1041408
  %v51 = vsel %vm49, %v43, 0
  %53 = vmatpush.bf16.msra.mxu0 0
  %54 = vmatpush.bf16.msra.mxu0 0
  %55 = vmatpush.bf16.msra.mxu0 0
  %56 = vmatpush.bf16.msra.mxu0 0
  %57 = vmatpush.bf16.msra.mxu0 0
  %58 = vmatpush.bf16.msra.mxu0 0
  %59 = vmatpush.bf16.msra.mxu0 %v51
  %60 = vmatpush.bf16.msra.mxu0 %v42
  %61 = vmatmul.bf16.gmra.mxu0 %v47
  %v62 = vpop.f32.mrf.mxu0
  %v63 = vadd.f32 0.0, %v62
  %v64 = vpop.f32.mrf.mxu0
  %65 = vdwg.mxu0
  %v69 = vunpack.c.l.b16 %v16
  %v70 = vunpack.c.l.b16 %v17
  %v71 = vunpack.c.l.b16 %v18
  %v72 = vpack.c.b16 %v70, %v69
  %v73 = vpack.c.b16 %v71, %v71
  %v76 = vsel %vm45, %v15, 0
  %v79 = vsel %vm49, %v73, 0
  %81 = vmatpush.bf16.msra.mxu0 0
  %82 = vmatpush.bf16.msra.mxu0 0
  %83 = vmatpush.bf16.msra.mxu0 0
  %84 = vmatpush.bf16.msra.mxu0 0
  %85 = vmatpush.bf16.msra.mxu0 0
  %86 = vmatpush.bf16.msra.mxu0 0
  %87 = vmatpush.bf16.msra.mxu0 %v79
  %88 = vmatpush.bf16.msra.mxu0 %v72
  %89 = vmatmul.bf16.gmra.mxu0 %v76
  %v90 = vpop.f32.mrf.mxu0
  %v91 = vadd.f32 %v63, %v90
  %v92 = vpop.f32.mrf.mxu0
  %93 = vdwg.mxu0
  %v94 = vld [vmem:[%s0] sm:$0xe]
  %s95 = scalar_lea.vmem %s1, 24
  %v96 = vld [vmem:[%s95] sm:$0xf]
  %v97 = vld [vmem:[%s95 + $0x4] sm:$0xf]
  %v98 = vld [vmem:[%s95 + $0x8] sm:$0x3]
  %v100 = vunpack.c.l.b16 %v94
  %v101 = vpack.c.b16 %v27, %v100
  %v102 = vrot.slane %v101, 1
  %v106 = vunpack.c.l.b16 %v96
  %v107 = vunpack.c.l.b16 %v97
  %v108 = vunpack.c.l.b16 %v98
  %v109 = vpack.c.b16 %v107, %v106
  %v110 = vpack.c.b16 %v108, %v108
  %v113 = vsel %vm45, %v102, 0
  %v116 = vsel %vm49, %v110, 0
  %118 = vmatpush.bf16.msra.mxu0 0
  %119 = vmatpush.bf16.msra.mxu0 0
  %120 = vmatpush.bf16.msra.mxu0 0
  %121 = vmatpush.bf16.msra.mxu0 0
  %122 = vmatpush.bf16.msra.mxu0 0
  %123 = vmatpush.bf16.msra.mxu0 0
  %124 = vmatpush.bf16.msra.mxu0 %v116
  %125 = vmatpush.bf16.msra.mxu0 %v109
  %126 = vmatmul.bf16.gmra.mxu0 %v113
  %v127 = vpop.f32.mrf.mxu0
  %v128 = vadd.f32 0.0, %v127
  %v129 = vpop.f32.mrf.mxu0
  %130 = vdwg.mxu0
  %v131 = vadd.f32 %v91, %v128
  %v132 = vld [vmem:[%s2] sm:$0x1]
  %v134 = vperm.slane %v132, 0
  %vm136 = vcmp.gt.f32.partialorder %v131, %v134
  %v137 = vsub.f32 %v131, %v134
  %v138 = vsub.f32 0.0, %v132
  %v140 = vperm.slane %v138, 0
  %vm142 = vcmp.lt.f32.partialorder %v131, %v140
  %v143 = vadd.f32 %v131, %v134
  %v144 = vsel %vm142, %v143, 0.0
  %v145 = vsel %vm136, %v137, %v144
  %146 = vst [vmem:[%s3] sm:$0xff] %v145
  // Predicated region
  $region14: #{_lambda_.15} parent=0 // pred_check
    _
  $region15: #{_lambda_.15} parent=0 // pred_check_branch
    %148 = sbr.rel (0) target = $region17
  $region16: #{_lambda_.15} parent=0 // pred_region
    _
  $region17: #{_lambda_.15} parent=0 // pred_fallthru
    _
  // Predicated region
  $region18: #{_lambda_.15} parent=0 // pred_check
    _
  $region19: #{_lambda_.15} parent=0 // pred_check_branch
    %150 = sbr.rel (0) target = $region21
  $region20: #{_lambda_.15} parent=0 // pred_region
    _
  $region21: #{_lambda_.15} parent=0 // pred_fallthru
    _

// kernel: _lambda_.16
$region0: #{_lambda_.16}
  #allocation0 [shape = 'u32[]', space=smem, size = 0x4, offset = 0x4, fixed_abs, tag = 'smem constant byte address 0x4 - core index']
  #allocation1 [shape = 'u32[72,128]{1,0:T(1,128)}', space=vmem, size = 0x9000, scoped, tag = 'internal scratch']
  %s0 = inlined_call_operand.vmem [shape: bf16[1,10,160], index: 0, kind: input, shape index: {}]
  %s1 = inlined_call_operand.vmem [shape: bf16[3,160,16], index: 1, kind: input, shape index: {}]
  %s2 = inlined_call_operand.vmem [shape: f32[1,8,16], index: 2, kind: input, shape index: {}]
  %s3 = inlined_call_operand.vmem [shape: f32[1,8,16], index: 3, kind: output, shape index: {}]
  %s4 = sld [smem:[#allocation0]]
  $region22: #{_lambda_.16} parent=0
    _
  %s6 = ssub.s32 1, %s4
  %s7 = scalar_select 0, %s6, %s4
  // Predicated region
  $region2: #{_lambda_.16} parent=0 // pred_check
    _
  $region3: #{_lambda_.16} parent=0 // pred_check_branch
    %9 = sbr.rel (0) target = $region5
  $region4: #{_lambda_.16} parent=0 // pred_region
    _
  $region5: #{_lambda_.16} parent=0 // pred_fallthru
    _
  // Predicated region
  $region6: #{_lambda_.16} parent=0 // pred_check
    _
  $region7: #{_lambda_.16} parent=0 // pred_check_branch
    %11 = sbr.rel (0) target = $region9
  $region8: #{_lambda_.16} parent=0 // pred_region
    _
  $region9: #{_lambda_.16} parent=0 // pred_fallthru
    _
  // Predicated region
  $region10: #{_lambda_.16} parent=0 // pred_check
    _
  $region11: #{_lambda_.16} parent=0 // pred_check_branch
    %13 = sbr.rel (0) target = $region13
  $region12: #{_lambda_.16} parent=0 // pred_region
    _
  $region13: #{_lambda_.16} parent=0 // pred_fallthru
    _
  %v15 = vld [vmem:[%s2] sm:$0xff]
  %v16 = vld [vmem:[%s0] sm:$0xff]
  %v17 = vld [vmem:[%s1] sm:$0xf]
  %v18 = vld [vmem:[%s1 + $0x4] sm:$0xf]
  %v19 = vld [vmem:[%s1 + $0x8] sm:$0xf]
  %v20 = vld [vmem:[%s1 + $0xc] sm:$0xf]
  %v21 = vld [vmem:[%s1 + $0x10] sm:$0xf]
  %v22 = vld [vmem:[%s1 + $0x14] sm:$0xf]
  %v23 = vld [vmem:[%s1 + $0x18] sm:$0xf]
  %v24 = vld [vmem:[%s1 + $0x1c] sm:$0xf]
  %v25 = vld [vmem:[%s1 + $0x20] sm:$0xf]
  %v26 = vld [vmem:[%s1 + $0x24] sm:$0xf]
  %v27 = vld [vmem:[%s1 + $0x28] sm:$0xf]
  %v28 = vld [vmem:[%s1 + $0x2c] sm:$0xf]
  %v29 = vld [vmem:[%s1 + $0x30] sm:$0xf]
  %v30 = vld [vmem:[%s1 + $0x34] sm:$0xf]
  %v31 = vld [vmem:[%s1 + $0x38] sm:$0xf]
  %v32 = vld [vmem:[%s1 + $0x3c] sm:$0xf]
  %v33 = vld [vmem:[%s1 + $0x40] sm:$0xf]
  %v34 = vld [vmem:[%s1 + $0x44] sm:$0xf]
  %v35 = vld [vmem:[%s1 + $0x48] sm:$0xf]
  %v36 = vld [vmem:[%s1 + $0x4c] sm:$0xf]
  %v38 = vunpack.c.l.b16 %v16
  %v39 = vunpack.c.h.b16 %v16
  %v40 = vpack.c.b16 %v38, %v38
  %v41 = vpack.c.b16 %v39, %v39
  %v63 = vunpack.c.l.b16 %v17
  %v64 = vunpack.c.l.b16 %v18
  %v65 = vunpack.c.l.b16 %v19
  %v66 = vunpack.c.l.b16 %v20
  %v67 = vunpack.c.l.b16 %v21
  %v68 = vunpack.c.l.b16 %v22
  %v69 = vunpack.c.l.b16 %v23
  %v70 = vunpack.c.l.b16 %v24
  %v71 = vunpack.c.l.b16 %v25
  %v72 = vunpack.c.l.b16 %v26
  %v73 = vunpack.c.l.b16 %v27
  %v74 = vunpack.c.l.b16 %v28
  %v75 = vunpack.c.l.b16 %v29
  %v76 = vunpack.c.l.b16 %v30
  %v77 = vunpack.c.l.b16 %v31
  %v78 = vunpack.c.l.b16 %v32
  %v79 = vunpack.c.l.b16 %v33
  %v80 = vunpack.c.l.b16 %v34
  %v81 = vunpack.c.l.b16 %v35
  %v82 = vunpack.c.l.b16 %v36
  %v83 = vpack.c.b16 %v64, %v63
  %v84 = vpack.c.b16 %v66, %v65
  %v85 = vpack.c.b16 %v68, %v67
  %v86 = vpack.c.b16 %v70, %v69
  %v87 = vpack.c.b16 %v72, %v71
  %v88 = vpack.c.b16 %v74, %v73
  %v89 = vpack.c.b16 %v76, %v75
  %v90 = vpack.c.b16 %v78, %v77
  %v91 = vpack.c.b16 %v80, %v79
  %v92 = vpack.c.b16 %v82, %v81
  %vm103 = vcmask 261120
  %v105 = vsel %vm103, %v41, 0
  %107 = vmatpush.bf16.msra.mxu0 %v90
  %108 = vmatpush.bf16.msra.mxu0 %v89
  %109 = vmatpush.bf16.msra.mxu0 %v88
  %110 = vmatpush.bf16.msra.mxu0 %v87
  %111 = vmatpush.bf16.msra.mxu0 %v86
  %112 = vmatpush.bf16.msra.mxu0 %v85
  %113 = vmatpush.bf16.msra.mxu0 %v84
  %114 = vmatpush.bf16.msra.mxu0 %v83
  %115 = vmatmul.bf16.gmra.mxu0 %v40
  %v116 = vpop.f32.mrf.mxu0
  %v117 = vadd.f32 0.0, %v116
  %v118 = vpop.f32.mrf.mxu0
  %119 = vdwg.mxu0
  %120 = vmatpush.bf16.msra.mxu0 0
  %121 = vmatpush.bf16.msra.mxu0 0
  %122 = vmatpush.bf16.msra.mxu0 0
  %123 = vmatpush.bf16.msra.mxu0 0
  %124 = vmatpush.bf16.msra.mxu0 0
  %125 = vmatpush.bf16.msra.mxu0 0
  %126 = vmatpush.bf16.msra.mxu0 %v92
  %127 = vmatpush.bf16.msra.mxu0 %v91
  %128 = vmatmul.bf16.gmra.mxu0 %v105
  %v129 = vpop.f32.mrf.mxu0
  %v130 = vadd.f32 %v117, %v129
  %v131 = vpop.f32.mrf.mxu0
  %132 = vdwg.mxu0
  %v133 = vadd.f32 %v15, %v130
  %v134 = vld [vmem:[%s0] sm:$0xff]
  %v135 = vld [vmem:[%s0 + $0x8] sm:$0x11]
  %s136 = scalar_lea.vmem %s1, 80
  %v137 = vld [vmem:[%s136] sm:$0xf]
  %v138 = vld [vmem:[%s136 + $0x4] sm:$0xf]
  %v139 = vld [vmem:[%s136 + $0x8] sm:$0xf]
  %v140 = vld [vmem:[%s136 + $0xc] sm:$0xf]
  %v141 = vld [vmem:[%s136 + $0x10] sm:$0xf]
  %v142 = vld [vmem:[%s136 + $0x14] sm:$0xf]
  %v143 = vld [vmem:[%s136 + $0x18] sm:$0xf]
  %v144 = vld [vmem:[%s136 + $0x1c] sm:$0xf]
  %v145 = vld [vmem:[%s136 + $0x20] sm:$0xf]
  %v146 = vld [vmem:[%s136 + $0x24] sm:$0xf]
  %v147 = vld [vmem:[%s136 + $0x28] sm:$0xf]
  %v148 = vld [vmem:[%s136 + $0x2c] sm:$0xf]
  %v149 = vld [vmem:[%s136 + $0x30] sm:$0xf]
  %v150 = vld [vmem:[%s136 + $0x34] sm:$0xf]
  %v151 = vld [vmem:[%s136 + $0x38] sm:$0xf]
  %v152 = vld [vmem:[%s136 + $0x3c] sm:$0xf]
  %v153 = vld [vmem:[%s136 + $0x40] sm:$0xf]
  %v154 = vld [vmem:[%s136 + $0x44] sm:$0xf]
  %v155 = vld [vmem:[%s136 + $0x48] sm:$0xf]
  %v156 = vld [vmem:[%s136 + $0x4c] sm:$0xf]
  %v159 = vunpack.c.l.b16 %v134
  %v160 = vunpack.c.h.b16 %v134
  %v161 = vunpack.c.l.b16 %v135
  %v162 = vunpack.c.h.b16 %v135
  %v163 = vpack.c.b16 %v161, %v159
  %v164 = vpack.c.b16 %v162, %v160
  %v166 = vshrl.u32 %v163, 16
  %v168 = vshll.u32 %v163, 16
  %v170 = vrot.slane %v168, 1
  %v171 = vor.u32 %v166, %v170
  %v173 = vshrl.u32 %v164, 16
  %v175 = vshll.u32 %v164, 16
  %v177 = vrot.slane %v175, 1
  %v178 = vor.u32 %v173, %v177
  %v200 = vunpack.c.l.b16 %v137
  %v201 = vunpack.c.l.b16 %v138
  %v202 = vunpack.c.l.b16 %v139
  %v203 = vunpack.c.l.b16 %v140
  %v204 = vunpack.c.l.b16 %v141
  %v205 = vunpack.c.l.b16 %v142
  %v206 = vunpack.c.l.b16 %v143
  %v207 = vunpack.c.l.b16 %v144
  %v208 = vunpack.c.l.b16 %v145
  %v209 = vunpack.c.l.b16 %v146
  %v210 = vunpack.c.l.b16 %v147
  %v211 = vunpack.c.l.b16 %v148
  %v212 = vunpack.c.l.b16 %v149
  %v213 = vunpack.c.l.b16 %v150
  %v214 = vunpack.c.l.b16 %v151
  %v215 = vunpack.c.l.b16 %v152
  %v216 = vunpack.c.l.b16 %v153
  %v217 = vunpack.c.l.b16 %v154
  %v218 = vunpack.c.l.b16 %v155
  %v219 = vunpack.c.l.b16 %v156
  %v220 = vpack.c.b16 %v201, %v200
  %v221 = vpack.c.b16 %v203, %v202
  %v222 = vpack.c.b16 %v205, %v204
  %v223 = vpack.c.b16 %v207, %v206
  %v224 = vpack.c.b16 %v209, %v208
  %v225 = vpack.c.b16 %v211, %v210
  %v226 = vpack.c.b16 %v213, %v212
  %v227 = vpack.c.b16 %v215, %v214
  %v228 = vpack.c.b16 %v217, %v216
  %v229 = vpack.c.b16 %v219, %v218
  %v241 = vsel %vm103, %v178, 0
  %243 = vmatpush.bf16.msra.mxu0 %v227
  %244 = vmatpush.bf16.msra.mxu0 %v226
  %245 = vmatpush.bf16.msra.mxu0 %v225
  %246 = vmatpush.bf16.msra.mxu0 %v224
  %247 = vmatpush.bf16.msra.mxu0 %v223
  %248 = vmatpush.bf16.msra.mxu0 %v222
  %249 = vmatpush.bf16.msra.mxu0 %v221
  %250 = vmatpush.bf16.msra.mxu0 %v220
  %251 = vmatmul.bf16.gmra.mxu0 %v171
  %v252 = vpop.f32.mrf.mxu0
  %v253 = vadd.f32 0.0, %v252
  %v254 = vpop.f32.mrf.mxu0
  %255 = vdwg.mxu0
  %256 = vmatpush.bf16.msra.mxu0 0
  %257 = vmatpush.bf16.msra.mxu0 0
  %258 = vmatpush.bf16.msra.mxu0 0
  %259 = vmatpush.bf16.msra.mxu0 0
  %260 = vmatpush.bf16.msra.mxu0 0
  %261 = vmatpush.bf16.msra.mxu0 0
  %262 = vmatpush.bf16.msra.mxu0 %v229
  %263 = vmatpush.bf16.msra.mxu0 %v228
  %264 = vmatmul.bf16.gmra.mxu0 %v241
  %v265 = vpop.f32.mrf.mxu0
  %v266 = vadd.f32 %v253, %v265
  %v267 = vpop.f32.mrf.mxu0
  %268 = vdwg.mxu0
  %v269 = vadd.f32 %v133, %v266
  %v270 = vld [vmem:[%s0] sm:$0xee]
  %s271 = scalar_lea.vmem %s1, 160
  %v272 = vld [vmem:[%s271] sm:$0xf]
  %v273 = vld [vmem:[%s271 + $0x4] sm:$0xf]
  %v274 = vld [vmem:[%s271 + $0x8] sm:$0xf]
  %v275 = vld [vmem:[%s271 + $0xc] sm:$0xf]
  %v276 = vld [vmem:[%s271 + $0x10] sm:$0xf]
  %v277 = vld [vmem:[%s271 + $0x14] sm:$0xf]
  %v278 = vld [vmem:[%s271 + $0x18] sm:$0xf]
  %v279 = vld [vmem:[%s271 + $0x1c] sm:$0xf]
  %v280 = vld [vmem:[%s271 + $0x20] sm:$0xf]
  %v281 = vld [vmem:[%s271 + $0x24] sm:$0xf]
  %v282 = vld [vmem:[%s271 + $0x28] sm:$0xf]
  %v283 = vld [vmem:[%s271 + $0x2c] sm:$0xf]
  %v284 = vld [vmem:[%s271 + $0x30] sm:$0xf]
  %v285 = vld [vmem:[%s271 + $0x34] sm:$0xf]
  %v286 = vld [vmem:[%s271 + $0x38] sm:$0xf]
  %v287 = vld [vmem:[%s271 + $0x3c] sm:$0xf]
  %v288 = vld [vmem:[%s271 + $0x40] sm:$0xf]
  %v289 = vld [vmem:[%s271 + $0x44] sm:$0xf]
  %v290 = vld [vmem:[%s271 + $0x48] sm:$0xf]
  %v291 = vld [vmem:[%s271 + $0x4c] sm:$0xf]
  %v293 = vunpack.c.l.b16 %v270
  %v294 = vunpack.c.h.b16 %v270
  %v295 = vpack.c.b16 %v161, %v293
  %v296 = vpack.c.b16 %v162, %v294
  %v297 = vrot.slane %v295, 1
  %v298 = vrot.slane %v296, 1
  %v320 = vunpack.c.l.b16 %v272
  %v321 = vunpack.c.l.b16 %v273
  %v322 = vunpack.c.l.b16 %v274
  %v323 = vunpack.c.l.b16 %v275
  %v324 = vunpack.c.l.b16 %v276
  %v325 = vunpack.c.l.b16 %v277
  %v326 = vunpack.c.l.b16 %v278
  %v327 = vunpack.c.l.b16 %v279
  %v328 = vunpack.c.l.b16 %v280
  %v329 = vunpack.c.l.b16 %v281
  %v330 = vunpack.c.l.b16 %v282
  %v331 = vunpack.c.l.b16 %v283
  %v332 = vunpack.c.l.b16 %v284
  %v333 = vunpack.c.l.b16 %v285
  %v334 = vunpack.c.l.b16 %v286
  %v335 = vunpack.c.l.b16 %v287
  %v336 = vunpack.c.l.b16 %v288
  %v337 = vunpack.c.l.b16 %v289
  %v338 = vunpack.c.l.b16 %v290
  %v339 = vunpack.c.l.b16 %v291
  %v340 = vpack.c.b16 %v321, %v320
  %v341 = vpack.c.b16 %v323, %v322
  %v342 = vpack.c.b16 %v325, %v324
  %v343 = vpack.c.b16 %v327, %v326
  %v344 = vpack.c.b16 %v329, %v328
  %v345 = vpack.c.b16 %v331, %v330
  %v346 = vpack.c.b16 %v333, %v332
  %v347 = vpack.c.b16 %v335, %v334
  %v348 = vpack.c.b16 %v337, %v336
  %v349 = vpack.c.b16 %v339, %v338
  %v361 = vsel %vm103, %v298, 0
  %363 = vmatpush.bf16.msra.mxu0 %v347
  %364 = vmatpush.bf16.msra.mxu0 %v346
  %365 = vmatpush.bf16.msra.mxu0 %v345
  %366 = vmatpush.bf16.msra.mxu0 %v344
  %367 = vmatpush.bf16.msra.mxu0 %v343
  %368 = vmatpush.bf16.msra.mxu0 %v342
  %369 = vmatpush.bf16.msra.mxu0 %v341
  %370 = vmatpush.bf16.msra.mxu0 %v340
  %371 = vmatmul.bf16.gmra.mxu0 %v297
  %v372 = vpop.f32.mrf.mxu0
  %v373 = vadd.f32 0.0, %v372
  %v374 = vpop.f32.mrf.mxu0
  %375 = vdwg.mxu0
  %376 = vmatpush.bf16.msra.mxu0 0
  %377 = vmatpush.bf16.msra.mxu0 0
  %378 = vmatpush.bf16.msra.mxu0 0
  %379 = vmatpush.bf16.msra.mxu0 0
  %380 = vmatpush.bf16.msra.mxu0 0
  %381 = vmatpush.bf16.msra.mxu0 0
  %382 = vmatpush.bf16.msra.mxu0 %v349
  %383 = vmatpush.bf16.msra.mxu0 %v348
  %384 = vmatmul.bf16.gmra.mxu0 %v361
  %v385 = vpop.f32.mrf.mxu0
  %v386 = vadd.f32 %v373, %v385
  %v387 = vpop.f32.mrf.mxu0
  %388 = vdwg.mxu0
  %v389 = vadd.f32 %v269, %v386
  %vm390 = vcmask 130048
  %391 = vst.msk [vmem:[%s3] sm:$0xff] %vm390, %v389
  // Predicated region
  $region14: #{_lambda_.16} parent=0 // pred_check
    _
  $region15: #{_lambda_.16} parent=0 // pred_check_branch
    %393 = sbr.rel (0) target = $region17
  $region16: #{_lambda_.16} parent=0 // pred_region
    _
  $region17: #{_lambda_.16} parent=0 // pred_fallthru
    _
  // Predicated region
  $region18: #{_lambda_.16} parent=0 // pred_check
    _
  $region19: #{_lambda_.16} parent=0 // pred_check_branch
    %395 = sbr.rel (0) target = $region21
  $region20: #{_lambda_.16} parent=0 // pred_region
    _
  $region21: #{_lambda_.16} parent=0 // pred_fallthru
    _

// kernel: _lambda_.17
$region0: #{_lambda_.17}
  #allocation0 [shape = 'u32[]', space=smem, size = 0x4, offset = 0x4, fixed_abs, tag = 'smem constant byte address 0x4 - core index']
  #allocation1 [shape = 'u32[72,128]{1,0:T(1,128)}', space=vmem, size = 0x9000, scoped, tag = 'internal scratch']
  %s0 = inlined_call_operand.vmem [shape: bf16[1,10,20], index: 0, kind: input, shape index: {}]
  %s1 = inlined_call_operand.vmem [shape: bf16[3,20,128], index: 1, kind: input, shape index: {}]
  %s2 = inlined_call_operand.vmem [shape: f32[1,8,128], index: 2, kind: input, shape index: {}]
  %s3 = inlined_call_operand.vmem [shape: f32[1,128], index: 3, kind: input, shape index: {}]
  %s4 = inlined_call_operand.vmem [shape: f32[1,8,128], index: 4, kind: output, shape index: {}]
  %s5 = sld [smem:[#allocation0]]
  $region26: #{_lambda_.17} parent=0
    _
  %s7 = ssub.s32 1, %s5
  %s8 = scalar_select 0, %s7, %s5
  // Predicated region
  $region2: #{_lambda_.17} parent=0 // pred_check
    _
  $region3: #{_lambda_.17} parent=0 // pred_check_branch
    %10 = sbr.rel (0) target = $region5
  $region4: #{_lambda_.17} parent=0 // pred_region
    _
  $region5: #{_lambda_.17} parent=0 // pred_fallthru
    _
  // Predicated region
  $region6: #{_lambda_.17} parent=0 // pred_check
    _
  $region7: #{_lambda_.17} parent=0 // pred_check_branch
    %12 = sbr.rel (0) target = $region9
  $region8: #{_lambda_.17} parent=0 // pred_region
    _
  $region9: #{_lambda_.17} parent=0 // pred_fallthru
    _
  // Predicated region
  $region10: #{_lambda_.17} parent=0 // pred_check
    _
  $region11: #{_lambda_.17} parent=0 // pred_check_branch
    %14 = sbr.rel (0) target = $region13
  $region12: #{_lambda_.17} parent=0 // pred_region
    _
  $region13: #{_lambda_.17} parent=0 // pred_fallthru
    _
  // Predicated region
  $region14: #{_lambda_.17} parent=0 // pred_check
    _
  $region15: #{_lambda_.17} parent=0 // pred_check_branch
    %16 = sbr.rel (0) target = $region17
  $region16: #{_lambda_.17} parent=0 // pred_region
    _
  $region17: #{_lambda_.17} parent=0 // pred_fallthru
    _
  %v18 = vld [vmem:[%s2] sm:$0xff]
  %v19 = vld [vmem:[%s0] sm:$0xf]
  %v20 = vld [vmem:[%s1] sm:$0xf]
  %v21 = vld [vmem:[%s1 + $0x4] sm:$0xf]
  %v22 = vld [vmem:[%s1 + $0x8] sm:$0x3]
  %v26 = vunpack.c.l.b16 %v20
  %v27 = vunpack.c.l.b16 %v21
  %v28 = vunpack.c.l.b16 %v22
  %v29 = vpack.c.b16 %v27, %v26
  %v30 = vpack.c.b16 %v28, %v28
  %vm32 = vcmask 162816
  %v34 = vsel %vm32, %v19, 0
  %vm36 = vcmask 1041408
  %v38 = vsel %vm36, %v30, 0
  %40 = vmatpush.bf16.msra.mxu0 0
  %41 = vmatpush.bf16.msra.mxu0 0
  %42 = vmatpush.bf16.msra.mxu0 0
  %43 = vmatpush.bf16.msra.mxu0 0
  %44 = vmatpush.bf16.msra.mxu0 0
  %45 = vmatpush.bf16.msra.mxu0 0
  %46 = vmatpush.bf16.msra.mxu0 %v38
  %47 = vmatpush.bf16.msra.mxu0 %v29
  %48 = vmatmul.bf16.gmra.mxu0 %v34
  %v49 = vpop.f32.mrf.mxu0
  %v50 = vadd.f32 0.0, %v49
  %v51 = vpop.f32.mrf.mxu0
  %52 = vdwg.mxu0
  %v53 = vadd.f32 %v18, %v50
  %v54 = vld [vmem:[%s0] sm:$0xf]
  %v55 = vld [vmem:[%s0 + $0x4] sm:$0x1]
  %s56 = scalar_lea.vmem %s1, 12
  %v57 = vld [vmem:[%s56] sm:$0xf]
  %v58 = vld [vmem:[%s56 + $0x4] sm:$0xf]
  %v59 = vld [vmem:[%s56 + $0x8] sm:$0x3]
  %v62 = vunpack.c.l.b16 %v54
  %v63 = vunpack.c.l.b16 %v55
  %v64 = vpack.c.b16 %v63, %v62
  %v66 = vshrl.u32 %v64, 16
  %v68 = vshll.u32 %v64, 16
  %v70 = vrot.slane %v68, 1
  %v71 = vor.u32 %v66, %v70
  %v75 = vunpack.c.l.b16 %v57
  %v76 = vunpack.c.l.b16 %v58
  %v77 = vunpack.c.l.b16 %v59
  %v78 = vpack.c.b16 %v76, %v75
  %v79 = vpack.c.b16 %v77, %v77
  %v82 = vsel %vm32, %v71, 0
  %v85 = vsel %vm36, %v79, 0
  %87 = vmatpush.bf16.msra.mxu0 0
  %88 = vmatpush.bf16.msra.mxu0 0
  %89 = vmatpush.bf16.msra.mxu0 0
  %90 = vmatpush.bf16.msra.mxu0 0
  %91 = vmatpush.bf16.msra.mxu0 0
  %92 = vmatpush.bf16.msra.mxu0 0
  %93 = vmatpush.bf16.msra.mxu0 %v85
  %94 = vmatpush.bf16.msra.mxu0 %v78
  %95 = vmatmul.bf16.gmra.mxu0 %v82
  %v96 = vpop.f32.mrf.mxu0
  %v97 = vadd.f32 0.0, %v96
  %v98 = vpop.f32.mrf.mxu0
  %99 = vdwg.mxu0
  %v100 = vadd.f32 %v53, %v97
  %v101 = vld [vmem:[%s0] sm:$0xe]
  %s102 = scalar_lea.vmem %s1, 24
  %v103 = vld [vmem:[%s102] sm:$0xf]
  %v104 = vld [vmem:[%s102 + $0x4] sm:$0xf]
  %v105 = vld [vmem:[%s102 + $0x8] sm:$0x3]
  %v107 = vunpack.c.l.b16 %v101
  %v108 = vpack.c.b16 %v63, %v107
  %v109 = vrot.slane %v108, 1
  %v113 = vunpack.c.l.b16 %v103
  %v114 = vunpack.c.l.b16 %v104
  %v115 = vunpack.c.l.b16 %v105
  %v116 = vpack.c.b16 %v114, %v113
  %v117 = vpack.c.b16 %v115, %v115
  %v120 = vsel %vm32, %v109, 0
  %v123 = vsel %vm36, %v117, 0
  %125 = vmatpush.bf16.msra.mxu0 0
  %126 = vmatpush.bf16.msra.mxu0 0
  %127 = vmatpush.bf16.msra.mxu0 0
  %128 = vmatpush.bf16.msra.mxu0 0
  %129 = vmatpush.bf16.msra.mxu0 0
  %130 = vmatpush.bf16.msra.mxu0 0
  %131 = vmatpush.bf16.msra.mxu0 %v123
  %132 = vmatpush.bf16.msra.mxu0 %v116
  %133 = vmatmul.bf16.gmra.mxu0 %v120
  %v134 = vpop.f32.mrf.mxu0
  %v135 = vadd.f32 0.0, %v134
  %v136 = vpop.f32.mrf.mxu0
  %137 = vdwg.mxu0
  %v138 = vadd.f32 %v100, %v135
  %v139 = vld [vmem:[%s3] sm:$0x1]
  %v141 = vperm.slane %v139, 0
  %vm143 = vcmp.gt.f32.partialorder %v138, %v141
  %v144 = vsub.f32 %v138, %v141
  %v145 = vsub.f32 0.0, %v139
  %v147 = vperm.slane %v145, 0
  %vm149 = vcmp.lt.f32.partialorder %v138, %v147
  %v150 = vadd.f32 %v138, %v141
  %v151 = vsel %vm149, %v150, 0.0
  %v152 = vsel %vm143, %v144, %v151
  %153 = vst [vmem:[%s4] sm:$0xff] %v152
  // Predicated region
  $region18: #{_lambda_.17} parent=0 // pred_check
    _
  $region19: #{_lambda_.17} parent=0 // pred_check_branch
    %155 = sbr.rel (0) target = $region21
  $region20: #{_lambda_.17} parent=0 // pred_region
    _
  $region21: #{_lambda_.17} parent=0 // pred_fallthru
    _
  // Predicated region
  $region22: #{_lambda_.17} parent=0 // pred_check
    _
  $region23: #{_lambda_.17} parent=0 // pred_check_branch
    %157 = sbr.rel (0) target = $region25
  $region24: #{_lambda_.17} parent=0 // pred_region
    _
  $region25: #{_lambda_.17} parent=0 // pred_fallthru
    _

// kernel: _lambda_.12
$region0: #{_lambda_.12}
  #allocation0 [shape = 'u32[]', space=smem, size = 0x4, offset = 0x4, fixed_abs, tag = 'smem constant byte address 0x4 - core index']
  #allocation1 [shape = 'u32[72,128]{1,0:T(1,128)}', space=vmem, size = 0x9000, scoped, tag = 'internal scratch']
  %s0 = inlined_call_operand.vmem [shape: bf16[2,18,54], index: 0, kind: input, shape index: {}]
  %s1 = inlined_call_operand.vmem [shape: bf16[3,54,128], index: 1, kind: input, shape index: {}]
  %s2 = inlined_call_operand.vmem [shape: f32[1,128], index: 2, kind: input, shape index: {}]
  %s3 = inlined_call_operand.vmem [shape: f32[2,16,128], index: 3, kind: output, shape index: {}]
  %s4 = sld [smem:[#allocation0]]
  $region45: #{_lambda_.12} parent=0
    _
  %s6 = ssub.s32 1, %s4
  %s7 = scalar_select 0, %s6, %s4
  loop: start=0, step=1, limit=4
  $region2: #{_lambda_.12} parent=0 // loop_pre_header
    _
  $region3: #{_lambda_.12} parent=0 // loop_header
    %s9 = sphi 0, %s13
    %p10 = scmp.ge.s32.totalorder %s9, 4
    %s16 = sphi 0, %s28
    %s17 = sphi 0, %s24
    %s18 = sphi 0, %s16
    %s19 = sphi 0, %s17
    %s20 = sphi 0, %s18
    %s21 = sphi 0, %s19
    %s31 = sphi 0, %s33
    %s34 = sphi 0, %s31
    %s35 = sphi 0, %s34
    %s51 = sphi 0, %s35
    %s55 = sphi 0, %s55
    %s57 = sphi 0, %s55
    %s58 = sphi 0, %s57
    %s72 = sphi 0, %s58
    %s76 = sphi 0, %s76
    %s78 = sphi 0, %s76
    %s79 = sphi 0, %s78
    %s93 = sphi 0, %s79
    %s101 = sphi 0, %s103
    %s104 = sphi 0, %s101
    %s105 = sphi 0, %s104
    %s121 = sphi 0, %s105
  $region4: #{_lambda_.12} parent=0 // loop_header_branch
    %12 = sbr.rel (%p10) target = $region8
  $region5: #{_lambda_.12} parent=0 // loop_body
    %s14 = ssub.s32 %s9, 1
    %s15 = ssub.s32 %s9, 2
    %s22 = sadd.s32 1, %s17
    %p23 = scmp.ge.s32.totalorder %s22, 1
    %s24 = scalar_select %p23, 0, %s22
    %s25 = sadd.s32 1, %s16
    %s26 = scalar_select %p23, %s25, %s16
    %p27 = scmp.ge.s32.totalorder %s26, 2
    %s28 = scalar_select %p27, 0, %s26
    %s29 = ssub.s32 %s16, %s28
    %p30 = scmp.eq.s32.totalorder %s29, 0
    %s32 = sadd.s32 %s31, 1
    %s33 = scalar_select %p30, %s31, %s32
    %p36 = pneg %p30
    %p37 = scmp.eq.s32.totalorder %s9, 1
    %p38 = por %p36, %p37
    %p39 = scmp.ne.s32.totalorder %s31, %s34
    %p40 = scmp.eq.s32.totalorder %s9, 0
    %p41 = por %p39, %p40
    %p42 = scmp.ne.s32.totalorder %s31, %s34
    %p43 = scmp.eq.s32.totalorder %s14, 1
    %p44 = por %p42, %p43
    %p45 = scmp.ne.s32.totalorder %s34, %s35
    %p46 = scmp.eq.s32.totalorder %s14, 0
    %p47 = por %p45, %p46
    %p48 = scmp.ne.s32.totalorder %s34, %s35
    %p49 = scmp.eq.s32.totalorder %s15, 1
    %p50 = por %p48, %p49
    %p52 = scmp.ne.s32.totalorder %s35, %s51
    %p53 = scmp.eq.s32.totalorder %s15, 0
    %p54 = por %p52, %p53
    %s56 = sadd.s32 %s55, 1
    %p59 = scmp.eq.s32.totalorder %s9, 1
    %p60 = scmp.ne.s32.totalorder %s55, %s57
    %p61 = scmp.eq.s32.totalorder %s9, 0
    %p62 = por %p60, %p61
    %p63 = scmp.ne.s32.totalorder %s55, %s57
    %p64 = scmp.eq.s32.totalorder %s14, 1
    %p65 = por %p63, %p64
    %p66 = scmp.ne.s32.totalorder %s57, %s58
    %p67 = scmp.eq.s32.totalorder %s14, 0
    %p68 = por %p66, %p67
    %p69 = scmp.ne.s32.totalorder %s57, %s58
    %p70 = scmp.eq.s32.totalorder %s15, 1
    %p71 = por %p69, %p70
    %p73 = scmp.ne.s32.totalorder %s58, %s72
    %p74 = scmp.eq.s32.totalorder %s15, 0
    %p75 = por %p73, %p74
    %s77 = sadd.s32 %s76, 1
    %p80 = scmp.eq.s32.totalorder %s9, 1
    %p81 = scmp.ne.s32.totalorder %s76, %s78
    %p82 = scmp.eq.s32.totalorder %s9, 0
    %p83 = por %p81, %p82
    %p84 = scmp.ne.s32.totalorder %s76, %s78
    %p85 = scmp.eq.s32.totalorder %s14, 1
    %p86 = por %p84, %p85
    %p87 = scmp.ne.s32.totalorder %s78, %s79
    %p88 = scmp.eq.s32.totalorder %s14, 0
    %p89 = por %p87, %p88
    %p90 = scmp.ne.s32.totalorder %s78, %s79
    %p91 = scmp.eq.s32.totalorder %s15, 1
    %p92 = por %p90, %p91
    %p94 = scmp.ne.s32.totalorder %s79, %s93
    %p95 = scmp.eq.s32.totalorder %s15, 0
    %p96 = por %p94, %p95
    %s97 = ssub.s32 %s16, %s28
    %s98 = ssub.s32 %s17, %s24
    %s99 = sor.u32 %s97, %s98
    %p100 = scmp.eq.s32.totalorder %s99, 0
    %s102 = sadd.s32 %s101, 1
    %s103 = scalar_select %p100, %s101, %s102
    %p106 = pneg %p100
    %p107 = scmp.eq.s32.totalorder %s9, 1
    %p108 = por %p106, %p107
    %p109 = scmp.ne.s32.totalorder %s101, %s104
    %p110 = scmp.eq.s32.totalorder %s9, 0
    %p111 = por %p109, %p110
    %p112 = scmp.ne.s32.totalorder %s101, %s104
    %p113 = scmp.eq.s32.totalorder %s14, 1
    %p114 = por %p112, %p113
    %p115 = scmp.ne.s32.totalorder %s104, %s105
    %p116 = scmp.eq.s32.totalorder %s14, 0
    %p117 = por %p115, %p116
    %p118 = scmp.ne.s32.totalorder %s104, %s105
    %p119 = scmp.eq.s32.totalorder %s15, 1
    %p120 = por %p118, %p119
    %p122 = scmp.ne.s32.totalorder %s105, %s121
    %p123 = scmp.eq.s32.totalorder %s15, 0
    %p124 = por %p122, %p123
    %p125 = scmp.le.s32.totalorder 1, %s9
    %p126 = scmp.lt.s32.totalorder %s9, 3
    %p127 = pnand %p125, %p126
    %p128 = pneg %p127
    // Predicated region
    $region9: #{_lambda_.12} parent=5 // pred_check
      _
    $region10: #{_lambda_.12} parent=5 // pred_check_branch
      %130 = sbr.rel (%p127) target = $region12
    $region11: #{_lambda_.12} parent=5 // pred_region
      %s131 = ssub.s32 %s9, 1
      // Predicated region
      $region13: #{_lambda_.12} parent=11 // pred_check
        %p132 = pneg %p68
      $region14: #{_lambda_.12} parent=11 // pred_check_branch
        %134 = sbr.rel (%p132) target = $region16
      $region15: #{_lambda_.12} parent=11 // pred_region
        _
      $region16: #{_lambda_.12} parent=11 // pred_fallthru
        _
      // Predicated region
      $region17: #{_lambda_.12} parent=11 // pred_check
        %p135 = pneg %p89
      $region18: #{_lambda_.12} parent=11 // pred_check_branch
        %137 = sbr.rel (%p135) target = $region20
      $region19: #{_lambda_.12} parent=11 // pred_region
        _
      $region20: #{_lambda_.12} parent=11 // pred_fallthru
        _
    $region12: #{_lambda_.12} parent=5 // pred_fallthru
      _
    %p138 = scmp.lt.s32.totalorder %s9, 2
    // Predicated region
    $region21: #{_lambda_.12} parent=5 // pred_check
      %p139 = pneg %p138
    $region22: #{_lambda_.12} parent=5 // pred_check_branch
      %141 = sbr.rel (%p139) target = $region24
    $region23: #{_lambda_.12} parent=5 // pred_region
      // Predicated region
      $region25: #{_lambda_.12} parent=23 // pred_check
        %p142 = pneg %p41
      $region26: #{_lambda_.12} parent=23 // pred_check_branch
        %144 = sbr.rel (%p142) target = $region28
      $region27: #{_lambda_.12} parent=23 // pred_region
        %p145 = scmp.lt.s32.totalorder %s16, 1
        %s146 = scalar_select %p145, %s16, 1
        %s147 = smul.addr %s146, 3
        %s148 = smul.addr %s147, 4
        %s149 = scalar_lea.vmem %s0, %s148
      $region28: #{_lambda_.12} parent=23 // pred_fallthru
        _
    $region24: #{_lambda_.12} parent=5 // pred_fallthru
      _
    %p150 = scmp.le.s32.totalorder 1, %s9
    %p151 = scmp.lt.s32.totalorder %s9, 3
    %p152 = pnand %p150, %p151
    %p153 = pneg %p152
    // Predicated region
    $region29: #{_lambda_.12} parent=5 // pred_check
      _
    $region30: #{_lambda_.12} parent=5 // pred_check_branch
      %155 = sbr.rel (%p152) target = $region32
    $region31: #{_lambda_.12} parent=5 // pred_region
      %s156 = ssub.s32 %s9, 1
      %p157 = scmp.lt.s32.totalorder %s18, 1
      %s158 = scalar_select %p157, %s18, 1
      %s159 = smul.addr %s158, 3
      %s160 = smul.addr %s159, 4
      %s161 = scalar_lea.vmem %s0, %s160
      %p162 = pneg %p47
      %p163 = pneg %p44
      %p164 = pneg %p68
      %p165 = pneg %p65
      %p166 = pneg %p89
      %p167 = pneg %p86
      %p168 = pneg %p117
      %p169 = pneg %p114
      %p170 = scmp.lt.s32.totalorder %s18, 1
      %s171 = scalar_select %p170, %s18, 1
      %p172 = scmp.lt.s32.totalorder %s19, 0
      %s173 = scalar_select %p172, %s19, 0
      %s174 = smul.addr %s171, 2
      %s175 = sadd.s32 %s173, %s174
      %s176 = smul.addr %s175, 8
      %s177 = scalar_lea.vmem %s3, %s176
      %p178 = scmp.lt.s32.totalorder %s18, 1
      %s179 = scalar_select %p178, %s18, 1
      %s180 = smul.addr %s179, 3
      %s181 = smul.addr %s180, 4
      %s182 = scalar_lea.vmem %s0, %s181
      %p183 = scmp.lt.s32.totalorder %s18, 1
      %s184 = scalar_select %p183, %s18, 1
      %p185 = scmp.lt.s32.totalorder %s19, 0
      %s186 = scalar_select %p185, %s19, 0
      %s187 = smul.addr %s184, 2
      %s188 = sadd.s32 %s186, %s187
      %s189 = smul.addr %s188, 8
      %s190 = scalar_lea.vmem %s3, %s189
      %v192 = vld [vmem:[%s182] sm:$0xf]
      %v193 = vld [vmem:[%s182 + $0x4] sm:$0xf]
      %v194 = vld [vmem:[%s1] sm:$0xf]
      %v195 = vld [vmem:[%s1 + $0x4] sm:$0xf]
      %v196 = vld [vmem:[%s1 + $0x8] sm:$0xf]
      %v197 = vld [vmem:[%s1 + $0xc] sm:$0xf]
      %v198 = vld [vmem:[%s1 + $0x10] sm:$0xf]
      %v199 = vld [vmem:[%s1 + $0x14] sm:$0xf]
      %v200 = vld [vmem:[%s1 + $0x18] sm:$0x7]
      %v201 = vld [vmem:[%s182 + $0x8] sm:$0x1]
      %s202 = scalar_lea.vmem %s1, 28
      %v203 = vld [vmem:[%s202] sm:$0xf]
      %v204 = vld [vmem:[%s202 + $0x4] sm:$0xf]
      %v205 = vld [vmem:[%s202 + $0x8] sm:$0xf]
      %v206 = vld [vmem:[%s202 + $0xc] sm:$0xf]
      %v207 = vld [vmem:[%s202 + $0x10] sm:$0xf]
      %v208 = vld [vmem:[%s202 + $0x14] sm:$0xf]
      %v209 = vld [vmem:[%s202 + $0x18] sm:$0x7]
      %v213 = vunpack.c.l.b16 %v192
      %v214 = vunpack.c.l.b16 %v193
      %v215 = vunpack.c.l.b16 %v201
      %v216 = vpack.c.b16 %v214, %v213
      %v217 = vpack.c.b16 %v215, %v215
      %vm218 = vsmask.f32 7424
      %v220 = vshrl.u32 %v216, 16
      %v222 = vshll.u32 %v216, 16
      %v224 = vrot.slane %v222, 1
      %v225 = vor.u32 %v220, %v224
      %v227 = vshll.u32 %v217, 16
      %v229 = vrot.slane %v227, 1
      %v230 = vsel %vm218, %v225, %v229
      %v238 = vunpack.c.l.b16 %v203
      %v239 = vunpack.c.l.b16 %v204
      %v240 = vunpack.c.l.b16 %v205
      %v241 = vunpack.c.l.b16 %v206
      %v242 = vunpack.c.l.b16 %v207
      %v243 = vunpack.c.l.b16 %v208
      %v244 = vunpack.c.l.b16 %v209
      %v245 = vpack.c.b16 %v239, %v238
      %v246 = vpack.c.b16 %v241, %v240
      %v247 = vpack.c.b16 %v243, %v242
      %v248 = vpack.c.b16 %v244, %v244
      %vm252 = vcmask 441344
      %v254 = vsel %vm252, %v230, 0
      %vm256 = vcmask 1042432
      %v258 = vsel %vm256, %v248, 0
      %260 = vmatpush.bf16.msra.mxu0 0
      %261 = vmatpush.bf16.msra.mxu0 0
      %262 = vmatpush.bf16.msra.mxu0 0
      %263 = vmatpush.bf16.msra.mxu0 0
      %264 = vmatpush.bf16.msra.mxu0 %v258
      %265 = vmatpush.bf16.msra.mxu0 %v247
      %266 = vmatpush.bf16.msra.mxu0 %v246
      %267 = vmatpush.bf16.msra.mxu0 %v245
      %268 = vmatmul.bf16.gmra.mxu0 %v254
      %v269 = vpop.f32.mrf.mxu0
      %v270 = vadd.f32 0.0, %v269
      %v271 = vpop.f32.mrf.mxu0
      %v272 = vadd.f32 0.0, %v271
      %273 = vdwg.mxu0
      %v281 = vunpack.c.l.b16 %v194
      %v282 = vunpack.c.l.b16 %v195
      %v283 = vunpack.c.l.b16 %v196
      %v284 = vunpack.c.l.b16 %v197
      %v285 = vunpack.c.l.b16 %v198
      %v286 = vunpack.c.l.b16 %v199
      %v287 = vunpack.c.l.b16 %v200
      %v288 = vpack.c.b16 %v282, %v281
      %v289 = vpack.c.b16 %v284, %v283
      %v290 = vpack.c.b16 %v286, %v285
      %v291 = vpack.c.b16 %v287, %v287
      %v295 = vsel %vm252, %v216, 0
      %v298 = vsel %vm256, %v291, 0
      %300 = vmatpush.bf16.msra.mxu0 0
      %301 = vmatpush.bf16.msra.mxu0 0
      %302 = vmatpush.bf16.msra.mxu0 0
      %303 = vmatpush.bf16.msra.mxu0 0
      %304 = vmatpush.bf16.msra.mxu0 %v298
      %305 = vmatpush.bf16.msra.mxu0 %v290
      %306 = vmatpush.bf16.msra.mxu0 %v289
      %307 = vmatpush.bf16.msra.mxu0 %v288
      %308 = vmatmul.bf16.gmra.mxu0 %v295
      %v309 = vpop.f32.mrf.mxu0
      %v310 = vadd.f32 %v270, %v309
      %v311 = vpop.f32.mrf.mxu0
      %v312 = vadd.f32 %v272, %v311
      %313 = vdwg.mxu0
      %v314 = vld [vmem:[%s182] sm:$0xe]
      %s315 = scalar_lea.vmem %s1, 56
      %v316 = vld [vmem:[%s315] sm:$0xf]
      %v317 = vld [vmem:[%s315 + $0x4] sm:$0xf]
      %v318 = vld [vmem:[%s315 + $0x8] sm:$0xf]
      %v319 = vld [vmem:[%s315 + $0xc] sm:$0xf]
      %v320 = vld [vmem:[%s315 + $0x10] sm:$0xf]
      %v321 = vld [vmem:[%s315 + $0x14] sm:$0xf]
      %v322 = vld [vmem:[%s315 + $0x18] sm:$0x7]
      %v324 = vunpack.c.l.b16 %v314
      %v325 = vpack.c.b16 %v214, %v324
      %vm326 = vcmask 1046528
      %v327 = vrot.slane %v325, 1
      %v328 = vrot.slane %v217, 1
      %v329 = vsel %vm326, %v327, %v328
      %v337 = vunpack.c.l.b16 %v316
      %v338 = vunpack.c.l.b16 %v317
      %v339 = vunpack.c.l.b16 %v318
      %v340 = vunpack.c.l.b16 %v319
      %v341 = vunpack.c.l.b16 %v320
      %v342 = vunpack.c.l.b16 %v321
      %v343 = vunpack.c.l.b16 %v322
      %v344 = vpack.c.b16 %v338, %v337
      %v345 = vpack.c.b16 %v340, %v339
      %v346 = vpack.c.b16 %v342, %v341
      %v347 = vpack.c.b16 %v343, %v343
      %v352 = vsel %vm252, %v329, 0
      %v355 = vsel %vm256, %v347, 0
      %357 = vmatpush.bf16.msra.mxu0 0
      %358 = vmatpush.bf16.msra.mxu0 0
      %359 = vmatpush.bf16.msra.mxu0 0
      %360 = vmatpush.bf16.msra.mxu0 0
      %361 = vmatpush.bf16.msra.mxu0 %v355
      %362 = vmatpush.bf16.msra.mxu0 %v346
      %363 = vmatpush.bf16.msra.mxu0 %v345
      %364 = vmatpush.bf16.msra.mxu0 %v344
      %365 = vmatmul.bf16.gmra.mxu0 %v352
      %v366 = vpop.f32.mrf.mxu0
      %v367 = vadd.f32 0.0, %v366
      %v368 = vpop.f32.mrf.mxu0
      %v369 = vadd.f32 0.0, %v368
      %370 = vdwg.mxu0
      %v371 = vadd.f32 %v310, %v367
      %v372 = vadd.f32 %v312, %v369
      %v373 = vld [vmem:[%s2] sm:$0x1]
      %v375 = vperm.slane %v373, 0
      %vm377 = vcmp.gt.f32.partialorder %v371, %v375
      %vm378 = vcmp.gt.f32.partialorder %v372, %v375
      %v379 = vsub.f32 %v371, %v375
      %v380 = vsub.f32 %v372, %v375
      %v381 = vsub.f32 0.0, %v373
      %v383 = vperm.slane %v381, 0
      %vm385 = vcmp.lt.f32.partialorder %v371, %v383
      %vm386 = vcmp.lt.f32.partialorder %v372, %v383
      %v387 = vadd.f32 %v371, %v375
      %v388 = vadd.f32 %v372, %v375
      %v389 = vsel %vm385, %v387, 0.0
      %v390 = vsel %vm386, %v388, 0.0
      %v391 = vsel %vm377, %v379, %v389
      %v392 = vsel %vm378, %v380, %v390
      %393 = vst [vmem:[%s190] sm:$0xff] %v391
      %394 = vst [vmem:[%s190 + $0x8] sm:$0xff] %v392
      %p395 = scmp.lt.s32.totalorder %s18, 1
      %s396 = scalar_select %p395, %s18, 1
      %p397 = scmp.lt.s32.totalorder %s19, 0
      %s398 = scalar_select %p397, %s19, 0
      %s399 = smul.addr %s396, 2
      %s400 = sadd.s32 %s398, %s399
      %s401 = smul.addr %s400, 8
      %s402 = scalar_lea.vmem %s3, %s401
      // Predicated region
      $region33: #{_lambda_.12} parent=31 // pred_check
        %p403 = pneg %p114
      $region34: #{_lambda_.12} parent=31 // pred_check_branch
        %405 = sbr.rel (%p403) target = $region36
      $region35: #{_lambda_.12} parent=31 // pred_region
        _
      $region36: #{_lambda_.12} parent=31 // pred_fallthru
        _
    $region32: #{_lambda_.12} parent=5 // pred_fallthru
      _
    %p406 = scmp.le.s32.totalorder 2, %s9
    // Predicated region
    $region37: #{_lambda_.12} parent=5 // pred_check
      %p407 = pneg %p406
    $region38: #{_lambda_.12} parent=5 // pred_check_branch
      %409 = sbr.rel (%p407) target = $region40
    $region39: #{_lambda_.12} parent=5 // pred_region
      %s410 = ssub.s32 %s9, 2
      // Predicated region
      $region41: #{_lambda_.12} parent=39 // pred_check
        %p411 = pneg %p120
      $region42: #{_lambda_.12} parent=39 // pred_check_branch
        %413 = sbr.rel (%p411) target = $region44
      $region43: #{_lambda_.12} parent=39 // pred_region
        %p414 = scmp.lt.s32.totalorder %s20, 1
        %s415 = scalar_select %p414, %s20, 1
        %p416 = scmp.lt.s32.totalorder %s21, 0
        %s417 = scalar_select %p416, %s21, 0
        %s418 = smul.addr %s415, 2
        %s419 = sadd.s32 %s417, %s418
        %s420 = smul.addr %s419, 8
        %s421 = scalar_lea.vmem %s3, %s420
      $region44: #{_lambda_.12} parent=39 // pred_fallthru
        _
    $region40: #{_lambda_.12} parent=5 // pred_fallthru
      _
  $region6: #{_lambda_.12} parent=0 // loop_footer
    %s13 = sadd.s32 1, %s9
  $region7: #{_lambda_.12} parent=0 // loop_footer_branch
    %8 = sbr.rel target = $region3
  $region8: #{_lambda_.12} parent=0 // loop_exit
    _

// kernel: _lambda_.13
$region0: #{_lambda_.13}
  #allocation0 [shape = 'u32[]', space=smem, size = 0x4, offset = 0x4, fixed_abs, tag = 'smem constant byte address 0x4 - core index']
  #allocation1 [shape = 'u32[72,128]{1,0:T(1,128)}', space=vmem, size = 0x9000, scoped, tag = 'internal scratch']
  %s0 = inlined_call_operand.vmem [shape: bf16[1,18,288], index: 0, kind: input, shape index: {}]
  %s1 = inlined_call_operand.vmem [shape: bf16[3,288,96], index: 1, kind: input, shape index: {}]
  %s2 = inlined_call_operand.vmem [shape: f32[1,16,96], index: 2, kind: input, shape index: {}]
  %s3 = inlined_call_operand.vmem [shape: f32[1,16,96], index: 3, kind: output, shape index: {}]
  %s4 = sld [smem:[#allocation0]]
  $region22: #{_lambda_.13} parent=0
    _
  %s6 = ssub.s32 1, %s4
  %s7 = scalar_select 0, %s6, %s4
  // Predicated region
  $region2: #{_lambda_.13} parent=0 // pred_check
    _
  $region3: #{_lambda_.13} parent=0 // pred_check_branch
    %9 = sbr.rel (0) target = $region5
  $region4: #{_lambda_.13} parent=0 // pred_region
    _
  $region5: #{_lambda_.13} parent=0 // pred_fallthru
    _
  // Predicated region
  $region6: #{_lambda_.13} parent=0 // pred_check
    _
  $region7: #{_lambda_.13} parent=0 // pred_check_branch
    %11 = sbr.rel (0) target = $region9
  $region8: #{_lambda_.13} parent=0 // pred_region
    _
  $region9: #{_lambda_.13} parent=0 // pred_fallthru
    _
  // Predicated region
  $region10: #{_lambda_.13} parent=0 // pred_check
    _
  $region11: #{_lambda_.13} parent=0 // pred_check_branch
    %13 = sbr.rel (0) target = $region13
  $region12: #{_lambda_.13} parent=0 // pred_region
    _
  $region13: #{_lambda_.13} parent=0 // pred_fallthru
    _
  %v15 = vld [vmem:[%s2] sm:$0xff]
  %v16 = vld [vmem:[%s2 + $0x8] sm:$0xff]
  %v17 = vld [vmem:[%s0] sm:$0xff]
  %v18 = vld [vmem:[%s0 + $0x8] sm:$0xf]
  %v19 = vld [vmem:[%s0 + $0xc] sm:$0xff]
  %v20 = vld [vmem:[%s0 + $0x14] sm:$0xf]
  %v21 = vld [vmem:[%s1] sm:$0xf]
  %v22 = vld [vmem:[%s1 + $0x4] sm:$0xf]
  %v23 = vld [vmem:[%s1 + $0x8] sm:$0xf]
  %v24 = vld [vmem:[%s1 + $0xc] sm:$0xf]
  %v25 = vld [vmem:[%s1 + $0x10] sm:$0xf]
  %v26 = vld [vmem:[%s1 + $0x14] sm:$0xf]
  %v27 = vld [vmem:[%s1 + $0x18] sm:$0xf]
  %v28 = vld [vmem:[%s1 + $0x1c] sm:$0xf]
  %v29 = vld [vmem:[%s1 + $0x20] sm:$0xf]
  %v30 = vld [vmem:[%s1 + $0x24] sm:$0xf]
  %v31 = vld [vmem:[%s1 + $0x28] sm:$0xf]
  %v32 = vld [vmem:[%s1 + $0x2c] sm:$0xf]
  %v33 = vld [vmem:[%s1 + $0x30] sm:$0xf]
  %v34 = vld [vmem:[%s1 + $0x34] sm:$0xf]
  %v35 = vld [vmem:[%s1 + $0x38] sm:$0xf]
  %v36 = vld [vmem:[%s1 + $0x3c] sm:$0xf]
  %v37 = vld [vmem:[%s1 + $0x40] sm:$0xf]
  %v38 = vld [vmem:[%s1 + $0x44] sm:$0xf]
  %v39 = vld [vmem:[%s1 + $0x48] sm:$0xf]
  %v40 = vld [vmem:[%s1 + $0x4c] sm:$0xf]
  %v41 = vld [vmem:[%s1 + $0x50] sm:$0xf]
  %v42 = vld [vmem:[%s1 + $0x54] sm:$0xf]
  %v43 = vld [vmem:[%s1 + $0x58] sm:$0xf]
  %v44 = vld [vmem:[%s1 + $0x5c] sm:$0xf]
  %v45 = vld [vmem:[%s1 + $0x60] sm:$0xf]
  %v46 = vld [vmem:[%s1 + $0x64] sm:$0xf]
  %v47 = vld [vmem:[%s1 + $0x68] sm:$0xf]
  %v48 = vld [vmem:[%s1 + $0x6c] sm:$0xf]
  %v49 = vld [vmem:[%s1 + $0x70] sm:$0xf]
  %v50 = vld [vmem:[%s1 + $0x74] sm:$0xf]
  %v51 = vld [vmem:[%s1 + $0x78] sm:$0xf]
  %v52 = vld [vmem:[%s1 + $0x7c] sm:$0xf]
  %v53 = vld [vmem:[%s1 + $0x80] sm:$0xf]
  %v54 = vld [vmem:[%s1 + $0x84] sm:$0xf]
  %v55 = vld [vmem:[%s1 + $0x88] sm:$0xf]
  %v56 = vld [vmem:[%s1 + $0x8c] sm:$0xf]
  %v61 = vunpack.c.l.b16 %v17
  %v62 = vunpack.c.h.b16 %v17
  %v63 = vunpack.c.l.b16 %v18
  %v64 = vunpack.c.l.b16 %v19
  %v65 = vunpack.c.h.b16 %v19
  %v66 = vunpack.c.l.b16 %v20
  %v67 = vpack.c.b16 %v64, %v61
  %v68 = vpack.c.b16 %v65, %v62
  %v69 = vpack.c.b16 %v66, %v63
  %v108 = vunpack.c.l.b16 %v21
  %v109 = vunpack.c.l.b16 %v22
  %v110 = vunpack.c.l.b16 %v23
  %v111 = vunpack.c.l.b16 %v24
  %v112 = vunpack.c.l.b16 %v25
  %v113 = vunpack.c.l.b16 %v26
  %v114 = vunpack.c.l.b16 %v27
  %v115 = vunpack.c.l.b16 %v28
  %v116 = vunpack.c.l.b16 %v29
  %v117 = vunpack.c.l.b16 %v30
  %v118 = vunpack.c.l.b16 %v31
  %v119 = vunpack.c.l.b16 %v32
  %v120 = vunpack.c.l.b16 %v33
  %v121 = vunpack.c.l.b16 %v34
  %v122 = vunpack.c.l.b16 %v35
  %v123 = vunpack.c.l.b16 %v36
  %v124 = vunpack.c.l.b16 %v37
  %v125 = vunpack.c.l.b16 %v38
  %v126 = vunpack.c.l.b16 %v39
  %v127 = vunpack.c.l.b16 %v40
  %v128 = vunpack.c.l.b16 %v41
  %v129 = vunpack.c.l.b16 %v42
  %v130 = vunpack.c.l.b16 %v43
  %v131 = vunpack.c.l.b16 %v44
  %v132 = vunpack.c.l.b16 %v45
  %v133 = vunpack.c.l.b16 %v46
  %v134 = vunpack.c.l.b16 %v47
  %v135 = vunpack.c.l.b16 %v48
  %v136 = vunpack.c.l.b16 %v49
  %v137 = vunpack.c.l.b16 %v50
  %v138 = vunpack.c.l.b16 %v51
  %v139 = vunpack.c.l.b16 %v52
  %v140 = vunpack.c.l.b16 %v53
  %v141 = vunpack.c.l.b16 %v54
  %v142 = vunpack.c.l.b16 %v55
  %v143 = vunpack.c.l.b16 %v56
  %v144 = vpack.c.b16 %v109, %v108
  %v145 = vpack.c.b16 %v111, %v110
  %v146 = vpack.c.b16 %v113, %v112
  %v147 = vpack.c.b16 %v115, %v114
  %v148 = vpack.c.b16 %v117, %v116
  %v149 = vpack.c.b16 %v119, %v118
  %v150 = vpack.c.b16 %v121, %v120
  %v151 = vpack.c.b16 %v123, %v122
  %v152 = vpack.c.b16 %v125, %v124
  %v153 = vpack.c.b16 %v127, %v126
  %v154 = vpack.c.b16 %v129, %v128
  %v155 = vpack.c.b16 %v131, %v130
  %v156 = vpack.c.b16 %v133, %v132
  %v157 = vpack.c.b16 %v135, %v134
  %v158 = vpack.c.b16 %v137, %v136
  %v159 = vpack.c.b16 %v139, %v138
  %v160 = vpack.c.b16 %v141, %v140
  %v161 = vpack.c.b16 %v143, %v142
  %vm180 = vcmask 261120
  %v182 = vsel %vm180, %v69, 0
  %184 = vmatpush.bf16.msra.mxu0 %v151
  %185 = vmatpush.bf16.msra.mxu0 %v150
  %186 = vmatpush.bf16.msra.mxu0 %v149
  %187 = vmatpush.bf16.msra.mxu0 %v148
  %188 = vmatpush.bf16.msra.mxu0 %v147
  %189 = vmatpush.bf16.msra.mxu0 %v146
  %190 = vmatpush.bf16.msra.mxu0 %v145
  %191 = vmatpush.bf16.msra.mxu0 %v144
  %192 = vmatmul.bf16.gmra.mxu0 %v67
  %v193 = vpop.f32.mrf.mxu0
  %v194 = vadd.f32 0.0, %v193
  %v195 = vpop.f32.mrf.mxu0
  %v196 = vadd.f32 0.0, %v195
  %197 = vdwg.mxu0
  %198 = vmatpush.bf16.msra.mxu0 %v159
  %199 = vmatpush.bf16.msra.mxu0 %v158
  %200 = vmatpush.bf16.msra.mxu0 %v157
  %201 = vmatpush.bf16.msra.mxu0 %v156
  %202 = vmatpush.bf16.msra.mxu0 %v155
  %203 = vmatpush.bf16.msra.mxu0 %v154
  %204 = vmatpush.bf16.msra.mxu0 %v153
  %205 = vmatpush.bf16.msra.mxu0 %v152
  %206 = vmatmul.bf16.gmra.mxu0 %v68
  %v207 = vpop.f32.mrf.mxu0
  %v208 = vadd.f32 %v194, %v207
  %v209 = vpop.f32.mrf.mxu0
  %v210 = vadd.f32 %v196, %v209
  %211 = vdwg.mxu0
  %212 = vmatpush.bf16.msra.mxu0 0
  %213 = vmatpush.bf16.msra.mxu0 0
  %214 = vmatpush.bf16.msra.mxu0 0
  %215 = vmatpush.bf16.msra.mxu0 0
  %216 = vmatpush.bf16.msra.mxu0 0
  %217 = vmatpush.bf16.msra.mxu0 0
  %218 = vmatpush.bf16.msra.mxu0 %v161
  %219 = vmatpush.bf16.msra.mxu0 %v160
  %220 = vmatmul.bf16.gmra.mxu0 %v182
  %v221 = vpop.f32.mrf.mxu0
  %v222 = vadd.f32 %v208, %v221
  %v223 = vpop.f32.mrf.mxu0
  %v224 = vadd.f32 %v210, %v223
  %225 = vdwg.mxu0
  %v226 = vadd.f32 %v15, %v222
  %v227 = vadd.f32 %v16, %v224
  %v228 = vld [vmem:[%s0] sm:$0xff]
  %v229 = vld [vmem:[%s0 + $0x8] sm:$0xf]
  %v230 = vld [vmem:[%s0 + $0xc] sm:$0xff]
  %v231 = vld [vmem:[%s0 + $0x14] sm:$0xf]
  %v232 = vld [vmem:[%s0 + $0x18] sm:$0x11]
  %v233 = vld [vmem:[%s0 + $0x20] sm:$0x1]
  %s234 = scalar_lea.vmem %s1, 144
  %v235 = vld [vmem:[%s234] sm:$0xf]
  %v236 = vld [vmem:[%s234 + $0x4] sm:$0xf]
  %v237 = vld [vmem:[%s234 + $0x8] sm:$0xf]
  %v238 = vld [vmem:[%s234 + $0xc] sm:$0xf]
  %v239 = vld [vmem:[%s234 + $0x10] sm:$0xf]
  %v240 = vld [vmem:[%s234 + $0x14] sm:$0xf]
  %v241 = vld [vmem:[%s234 + $0x18] sm:$0xf]
  %v242 = vld [vmem:[%s234 + $0x1c] sm:$0xf]
  %v243 = vld [vmem:[%s234 + $0x20] sm:$0xf]
  %v244 = vld [vmem:[%s234 + $0x24] sm:$0xf]
  %v245 = vld [vmem:[%s234 + $0x28] sm:$0xf]
  %v246 = vld [vmem:[%s234 + $0x2c] sm:$0xf]
  %v247 = vld [vmem:[%s234 + $0x30] sm:$0xf]
  %v248 = vld [vmem:[%s234 + $0x34] sm:$0xf]
  %v249 = vld [vmem:[%s234 + $0x38] sm:$0xf]
  %v250 = vld [vmem:[%s234 + $0x3c] sm:$0xf]
  %v251 = vld [vmem:[%s234 + $0x40] sm:$0xf]
  %v252 = vld [vmem:[%s234 + $0x44] sm:$0xf]
  %v253 = vld [vmem:[%s234 + $0x48] sm:$0xf]
  %v254 = vld [vmem:[%s234 + $0x4c] sm:$0xf]
  %v255 = vld [vmem:[%s234 + $0x50] sm:$0xf]
  %v256 = vld [vmem:[%s234 + $0x54] sm:$0xf]
  %v257 = vld [vmem:[%s234 + $0x58] sm:$0xf]
  %v258 = vld [vmem:[%s234 + $0x5c] sm:$0xf]
  %v259 = vld [vmem:[%s234 + $0x60] sm:$0xf]
  %v260 = vld [vmem:[%s234 + $0x64] sm:$0xf]
  %v261 = vld [vmem:[%s234 + $0x68] sm:$0xf]
  %v262 = vld [vmem:[%s234 + $0x6c] sm:$0xf]
  %v263 = vld [vmem:[%s234 + $0x70] sm:$0xf]
  %v264 = vld [vmem:[%s234 + $0x74] sm:$0xf]
  %v265 = vld [vmem:[%s234 + $0x78] sm:$0xf]
  %v266 = vld [vmem:[%s234 + $0x7c] sm:$0xf]
  %v267 = vld [vmem:[%s234 + $0x80] sm:$0xf]
  %v268 = vld [vmem:[%s234 + $0x84] sm:$0xf]
  %v269 = vld [vmem:[%s234 + $0x88] sm:$0xf]
  %v270 = vld [vmem:[%s234 + $0x8c] sm:$0xf]
  %v277 = vunpack.c.l.b16 %v228
  %v278 = vunpack.c.h.b16 %v228
  %v279 = vunpack.c.l.b16 %v229
  %v280 = vunpack.c.l.b16 %v230
  %v281 = vunpack.c.h.b16 %v230
  %v282 = vunpack.c.l.b16 %v231
  %v283 = vunpack.c.l.b16 %v232
  %v284 = vunpack.c.h.b16 %v232
  %v285 = vunpack.c.l.b16 %v233
  %v286 = vpack.c.b16 %v280, %v277
  %v287 = vpack.c.b16 %v281, %v278
  %v288 = vpack.c.b16 %v282, %v279
  %v289 = vpack.c.b16 %v283, %v283
  %v290 = vpack.c.b16 %v284, %v284
  %v291 = vpack.c.b16 %v285, %v285
  %vm292 = vsmask.f32 7424
  %v294 = vshrl.u32 %v286, 16
  %v296 = vshll.u32 %v286, 16
  %v298 = vrot.slane %v296, 1
  %v299 = vor.u32 %v294, %v298
  %v301 = vshll.u32 %v289, 16
  %v303 = vrot.slane %v301, 1
  %v304 = vsel %vm292, %v299, %v303
  %v306 = vshrl.u32 %v287, 16
  %v308 = vshll.u32 %v287, 16
  %v310 = vrot.slane %v308, 1
  %v311 = vor.u32 %v306, %v310
  %v313 = vshll.u32 %v290, 16
  %v315 = vrot.slane %v313, 1
  %v316 = vsel %vm292, %v311, %v315
  %v318 = vshrl.u32 %v288, 16
  %v320 = vshll.u32 %v288, 16
  %v322 = vrot.slane %v320, 1
  %v323 = vor.u32 %v318, %v322
  %v325 = vshll.u32 %v291, 16
  %v327 = vrot.slane %v325, 1
  %v328 = vsel %vm292, %v323, %v327
  %v367 = vunpack.c.l.b16 %v235
  %v368 = vunpack.c.l.b16 %v236
  %v369 = vunpack.c.l.b16 %v237
  %v370 = vunpack.c.l.b16 %v238
  %v371 = vunpack.c.l.b16 %v239
  %v372 = vunpack.c.l.b16 %v240
  %v373 = vunpack.c.l.b16 %v241
  %v374 = vunpack.c.l.b16 %v242
  %v375 = vunpack.c.l.b16 %v243
  %v376 = vunpack.c.l.b16 %v244
  %v377 = vunpack.c.l.b16 %v245
  %v378 = vunpack.c.l.b16 %v246
  %v379 = vunpack.c.l.b16 %v247
  %v380 = vunpack.c.l.b16 %v248
  %v381 = vunpack.c.l.b16 %v249
  %v382 = vunpack.c.l.b16 %v250
  %v383 = vunpack.c.l.b16 %v251
  %v384 = vunpack.c.l.b16 %v252
  %v385 = vunpack.c.l.b16 %v253
  %v386 = vunpack.c.l.b16 %v254
  %v387 = vunpack.c.l.b16 %v255
  %v388 = vunpack.c.l.b16 %v256
  %v389 = vunpack.c.l.b16 %v257
  %v390 = vunpack.c.l.b16 %v258
  %v391 = vunpack.c.l.b16 %v259
  %v392 = vunpack.c.l.b16 %v260
  %v393 = vunpack.c.l.b16 %v261
  %v394 = vunpack.c.l.b16 %v262
  %v395 = vunpack.c.l.b16 %v263
  %v396 = vunpack.c.l.b16 %v264
  %v397 = vunpack.c.l.b16 %v265
  %v398 = vunpack.c.l.b16 %v266
  %v399 = vunpack.c.l.b16 %v267
  %v400 = vunpack.c.l.b16 %v268
  %v401 = vunpack.c.l.b16 %v269
  %v402 = vunpack.c.l.b16 %v270
  %v403 = vpack.c.b16 %v368, %v367
  %v404 = vpack.c.b16 %v370, %v369
  %v405 = vpack.c.b16 %v372, %v371
  %v406 = vpack.c.b16 %v374, %v373
  %v407 = vpack.c.b16 %v376, %v375
  %v408 = vpack.c.b16 %v378, %v377
  %v409 = vpack.c.b16 %v380, %v379
  %v410 = vpack.c.b16 %v382, %v381
  %v411 = vpack.c.b16 %v384, %v383
  %v412 = vpack.c.b16 %v386, %v385
  %v413 = vpack.c.b16 %v388, %v387
  %v414 = vpack.c.b16 %v390, %v389
  %v415 = vpack.c.b16 %v392, %v391
  %v416 = vpack.c.b16 %v394, %v393
  %v417 = vpack.c.b16 %v396, %v395
  %v418 = vpack.c.b16 %v398, %v397
  %v419 = vpack.c.b16 %v400, %v399
  %v420 = vpack.c.b16 %v402, %v401
  %v440 = vsel %vm180, %v328, 0
  %442 = vmatpush.bf16.msra.mxu0 %v410
  %443 = vmatpush.bf16.msra.mxu0 %v409
  %444 = vmatpush.bf16.msra.mxu0 %v408
  %445 = vmatpush.bf16.msra.mxu0 %v407
  %446 = vmatpush.bf16.msra.mxu0 %v406
  %447 = vmatpush.bf16.msra.mxu0 %v405
  %448 = vmatpush.bf16.msra.mxu0 %v404
  %449 = vmatpush.bf16.msra.mxu0 %v403
  %450 = vmatmul.bf16.gmra.mxu0 %v304
  %v451 = vpop.f32.mrf.mxu0
  %v452 = vadd.f32 0.0, %v451
  %v453 = vpop.f32.mrf.mxu0
  %v454 = vadd.f32 0.0, %v453
  %455 = vdwg.mxu0
  %456 = vmatpush.bf16.msra.mxu0 %v418
  %457 = vmatpush.bf16.msra.mxu0 %v417
  %458 = vmatpush.bf16.msra.mxu0 %v416
  %459 = vmatpush.bf16.msra.mxu0 %v415
  %460 = vmatpush.bf16.msra.mxu0 %v414
  %461 = vmatpush.bf16.msra.mxu0 %v413
  %462 = vmatpush.bf16.msra.mxu0 %v412
  %463 = vmatpush.bf16.msra.mxu0 %v411
  %464 = vmatmul.bf16.gmra.mxu0 %v316
  %v465 = vpop.f32.mrf.mxu0
  %v466 = vadd.f32 %v452, %v465
  %v467 = vpop.f32.mrf.mxu0
  %v468 = vadd.f32 %v454, %v467
  %469 = vdwg.mxu0
  %470 = vmatpush.bf16.msra.mxu0 0
  %471 = vmatpush.bf16.msra.mxu0 0
  %472 = vmatpush.bf16.msra.mxu0 0
  %473 = vmatpush.bf16.msra.mxu0 0
  %474 = vmatpush.bf16.msra.mxu0 0
  %475 = vmatpush.bf16.msra.mxu0 0
  %476 = vmatpush.bf16.msra.mxu0 %v420
  %477 = vmatpush.bf16.msra.mxu0 %v419
  %478 = vmatmul.bf16.gmra.mxu0 %v440
  %v479 = vpop.f32.mrf.mxu0
  %v480 = vadd.f32 %v466, %v479
  %v481 = vpop.f32.mrf.mxu0
  %v482 = vadd.f32 %v468, %v481
  %483 = vdwg.mxu0
  %v484 = vadd.f32 %v226, %v480
  %v485 = vadd.f32 %v227, %v482
  %v486 = vld [vmem:[%s0] sm:$0xee]
  %v487 = vld [vmem:[%s0 + $0x8] sm:$0xe]
  %s488 = scalar_lea.vmem %s1, 288
  %v489 = vld [vmem:[%s488] sm:$0xf]
  %v490 = vld [vmem:[%s488 + $0x4] sm:$0xf]
  %v491 = vld [vmem:[%s488 + $0x8] sm:$0xf]
  %v492 = vld [vmem:[%s488 + $0xc] sm:$0xf]
  %v493 = vld [vmem:[%s488 + $0x10] sm:$0xf]
  %v494 = vld [vmem:[%s488 + $0x14] sm:$0xf]
  %v495 = vld [vmem:[%s488 + $0x18] sm:$0xf]
  %v496 = vld [vmem:[%s488 + $0x1c] sm:$0xf]
  %v497 = vld [vmem:[%s488 + $0x20] sm:$0xf]
  %v498 = vld [vmem:[%s488 + $0x24] sm:$0xf]
  %v499 = vld [vmem:[%s488 + $0x28] sm:$0xf]
  %v500 = vld [vmem:[%s488 + $0x2c] sm:$0xf]
  %v501 = vld [vmem:[%s488 + $0x30] sm:$0xf]
  %v502 = vld [vmem:[%s488 + $0x34] sm:$0xf]
  %v503 = vld [vmem:[%s488 + $0x38] sm:$0xf]
  %v504 = vld [vmem:[%s488 + $0x3c] sm:$0xf]
  %v505 = vld [vmem:[%s488 + $0x40] sm:$0xf]
  %v506 = vld [vmem:[%s488 + $0x44] sm:$0xf]
  %v507 = vld [vmem:[%s488 + $0x48] sm:$0xf]
  %v508 = vld [vmem:[%s488 + $0x4c] sm:$0xf]
  %v509 = vld [vmem:[%s488 + $0x50] sm:$0xf]
  %v510 = vld [vmem:[%s488 + $0x54] sm:$0xf]
  %v511 = vld [vmem:[%s488 + $0x58] sm:$0xf]
  %v512 = vld [vmem:[%s488 + $0x5c] sm:$0xf]
  %v513 = vld [vmem:[%s488 + $0x60] sm:$0xf]
  %v514 = vld [vmem:[%s488 + $0x64] sm:$0xf]
  %v515 = vld [vmem:[%s488 + $0x68] sm:$0xf]
  %v516 = vld [vmem:[%s488 + $0x6c] sm:$0xf]
  %v517 = vld [vmem:[%s488 + $0x70] sm:$0xf]
  %v518 = vld [vmem:[%s488 + $0x74] sm:$0xf]
  %v519 = vld [vmem:[%s488 + $0x78] sm:$0xf]
  %v520 = vld [vmem:[%s488 + $0x7c] sm:$0xf]
  %v521 = vld [vmem:[%s488 + $0x80] sm:$0xf]
  %v522 = vld [vmem:[%s488 + $0x84] sm:$0xf]
  %v523 = vld [vmem:[%s488 + $0x88] sm:$0xf]
  %v524 = vld [vmem:[%s488 + $0x8c] sm:$0xf]
  %v527 = vunpack.c.l.b16 %v486
  %v528 = vunpack.c.h.b16 %v486
  %v529 = vunpack.c.l.b16 %v487
  %v530 = vpack.c.b16 %v280, %v527
  %v531 = vpack.c.b16 %v281, %v528
  %v532 = vpack.c.b16 %v282, %v529
  %vm533 = vcmask 1046528
  %v534 = vrot.slane %v530, 1
  %v535 = vrot.slane %v289, 1
  %v536 = vsel %vm533, %v534, %v535
  %v537 = vrot.slane %v531, 1
  %v538 = vrot.slane %v290, 1
  %v539 = vsel %vm533, %v537, %v538
  %v540 = vrot.slane %v532, 1
  %v541 = vrot.slane %v291, 1
  %v542 = vsel %vm533, %v540, %v541
  %v581 = vunpack.c.l.b16 %v489
  %v582 = vunpack.c.l.b16 %v490
  %v583 = vunpack.c.l.b16 %v491
  %v584 = vunpack.c.l.b16 %v492
  %v585 = vunpack.c.l.b16 %v493
  %v586 = vunpack.c.l.b16 %v494
  %v587 = vunpack.c.l.b16 %v495
  %v588 = vunpack.c.l.b16 %v496
  %v589 = vunpack.c.l.b16 %v497
  %v590 = vunpack.c.l.b16 %v498
  %v591 = vunpack.c.l.b16 %v499
  %v592 = vunpack.c.l.b16 %v500
  %v593 = vunpack.c.l.b16 %v501
  %v594 = vunpack.c.l.b16 %v502
  %v595 = vunpack.c.l.b16 %v503
  %v596 = vunpack.c.l.b16 %v504
  %v597 = vunpack.c.l.b16 %v505
  %v598 = vunpack.c.l.b16 %v506
  %v599 = vunpack.c.l.b16 %v507
  %v600 = vunpack.c.l.b16 %v508
  %v601 = vunpack.c.l.b16 %v509
  %v602 = vunpack.c.l.b16 %v510
  %v603 = vunpack.c.l.b16 %v511
  %v604 = vunpack.c.l.b16 %v512
  %v605 = vunpack.c.l.b16 %v513
  %v606 = vunpack.c.l.b16 %v514
  %v607 = vunpack.c.l.b16 %v515
  %v608 = vunpack.c.l.b16 %v516
  %v609 = vunpack.c.l.b16 %v517
  %v610 = vunpack.c.l.b16 %v518
  %v611 = vunpack.c.l.b16 %v519
  %v612 = vunpack.c.l.b16 %v520
  %v613 = vunpack.c.l.b16 %v521
  %v614 = vunpack.c.l.b16 %v522
  %v615 = vunpack.c.l.b16 %v523
  %v616 = vunpack.c.l.b16 %v524
  %v617 = vpack.c.b16 %v582, %v581
  %v618 = vpack.c.b16 %v584, %v583
  %v619 = vpack.c.b16 %v586, %v585
  %v620 = vpack.c.b16 %v588, %v587
  %v621 = vpack.c.b16 %v590, %v589
  %v622 = vpack.c.b16 %v592, %v591
  %v623 = vpack.c.b16 %v594, %v593
  %v624 = vpack.c.b16 %v596, %v595
  %v625 = vpack.c.b16 %v598, %v597
  %v626 = vpack.c.b16 %v600, %v599
  %v627 = vpack.c.b16 %v602, %v601
  %v628 = vpack.c.b16 %v604, %v603
  %v629 = vpack.c.b16 %v606, %v605
  %v630 = vpack.c.b16 %v608, %v607
  %v631 = vpack.c.b16 %v610, %v609
  %v632 = vpack.c.b16 %v612, %v611
  %v633 = vpack.c.b16 %v614, %v613
  %v634 = vpack.c.b16 %v616, %v615
  %v654 = vsel %vm180, %v542, 0
  %656 = vmatpush.bf16.msra.mxu0 %v624
  %657 = vmatpush.bf16.msra.mxu0 %v623
  %658 = vmatpush.bf16.msra.mxu0 %v622
  %659 = vmatpush.bf16.msra.mxu0 %v621
  %660 = vmatpush.bf16.msra.mxu0 %v620
  %661 = vmatpush.bf16.msra.mxu0 %v619
  %662 = vmatpush.bf16.msra.mxu0 %v618
  %663 = vmatpush.bf16.msra.mxu0 %v617
  %664 = vmatmul.bf16.gmra.mxu0 %v536
  %v665 = vpop.f32.mrf.mxu0
  %v666 = vadd.f32 0.0, %v665
  %v667 = vpop.f32.mrf.mxu0
  %v668 = vadd.f32 0.0, %v667
  %669 = vdwg.mxu0
  %670 = vmatpush.bf16.msra.mxu0 %v632
  %671 = vmatpush.bf16.msra.mxu0 %v631
  %672 = vmatpush.bf16.msra.mxu0 %v630
  %673 = vmatpush.bf16.msra.mxu0 %v629
  %674 = vmatpush.bf16.msra.mxu0 %v628
  %675 = vmatpush.bf16.msra.mxu0 %v627
  %676 = vmatpush.bf16.msra.mxu0 %v626
  %677 = vmatpush.bf16.msra.mxu0 %v625
  %678 = vmatmul.bf16.gmra.mxu0 %v539
  %v679 = vpop.f32.mrf.mxu0
  %v680 = vadd.f32 %v666, %v679
  %v681 = vpop.f32.mrf.mxu0
  %v682 = vadd.f32 %v668, %v681
  %683 = vdwg.mxu0
  %684 = vmatpush.bf16.msra.mxu0 0
  %685 = vmatpush.bf16.msra.mxu0 0
  %686 = vmatpush.bf16.msra.mxu0 0
  %687 = vmatpush.bf16.msra.mxu0 0
  %688 = vmatpush.bf16.msra.mxu0 0
  %689 = vmatpush.bf16.msra.mxu0 0
  %690 = vmatpush.bf16.msra.mxu0 %v634
  %691 = vmatpush.bf16.msra.mxu0 %v633
  %692 = vmatmul.bf16.gmra.mxu0 %v654
  %v693 = vpop.f32.mrf.mxu0
  %v694 = vadd.f32 %v680, %v693
  %v695 = vpop.f32.mrf.mxu0
  %v696 = vadd.f32 %v682, %v695
  %697 = vdwg.mxu0
  %v698 = vadd.f32 %v484, %v694
  %v699 = vadd.f32 %v485, %v696
  %vm700 = vcmask 785408
  %701 = vst.msk [vmem:[%s3] sm:$0xff] %vm700, %v698
  %702 = vst.msk [vmem:[%s3 + $0x8] sm:$0xff] %vm700, %v699
  // Predicated region
  $region14: #{_lambda_.13} parent=0 // pred_check
    _
  $region15: #{_lambda_.13} parent=0 // pred_check_branch
    %704 = sbr.rel (0) target = $region17
  $region16: #{_lambda_.13} parent=0 // pred_region
    _
  $region17: #{_lambda_.13} parent=0 // pred_fallthru
    _
  // Predicated region
  $region18: #{_lambda_.13} parent=0 // pred_check
    _
  $region19: #{_lambda_.13} parent=0 // pred_check_branch
    %706 = sbr.rel (0) target = $region21
  $region20: #{_lambda_.13} parent=0 // pred_region
    _
  $region21: #{_lambda_.13} parent=0 // pred_fallthru
    _

// kernel: _lambda_.14
$region0: #{_lambda_.14}
  #allocation0 [shape = 'u32[]', space=smem, size = 0x4, offset = 0x4, fixed_abs, tag = 'smem constant byte address 0x4 - core index']
  #allocation1 [shape = 'u32[72,128]{1,0:T(1,128)}', space=vmem, size = 0x9000, scoped, tag = 'internal scratch']
  %s0 = inlined_call_operand.vmem [shape: bf16[2,18,54], index: 0, kind: input, shape index: {}]
  %s1 = inlined_call_operand.vmem [shape: bf16[3,54,128], index: 1, kind: input, shape index: {}]
  %s2 = inlined_call_operand.vmem [shape: f32[2,16,128], index: 2, kind: input, shape index: {}]
  %s3 = inlined_call_operand.vmem [shape: f32[1,128], index: 3, kind: input, shape index: {}]
  %s4 = inlined_call_operand.vmem [shape: f32[2,16,128], index: 4, kind: output, shape index: {}]
  %s5 = sld [smem:[#allocation0]]
  $region49: #{_lambda_.14} parent=0
    _
  %s7 = ssub.s32 1, %s5
  %s8 = scalar_select 0, %s7, %s5
  loop: start=0, step=1, limit=4
  $region2: #{_lambda_.14} parent=0 // loop_pre_header
    _
  $region3: #{_lambda_.14} parent=0 // loop_header
    %s10 = sphi 0, %s14
    %p11 = scmp.ge.s32.totalorder %s10, 4
    %s17 = sphi 0, %s29
    %s18 = sphi 0, %s25
    %s19 = sphi 0, %s17
    %s20 = sphi 0, %s18
    %s21 = sphi 0, %s19
    %s22 = sphi 0, %s20
    %s32 = sphi 0, %s34
    %s35 = sphi 0, %s32
    %s36 = sphi 0, %s35
    %s52 = sphi 0, %s36
    %s56 = sphi 0, %s56
    %s58 = sphi 0, %s56
    %s59 = sphi 0, %s58
    %s73 = sphi 0, %s59
    %s81 = sphi 0, %s83
    %s84 = sphi 0, %s81
    %s85 = sphi 0, %s84
    %s101 = sphi 0, %s85
    %s105 = sphi 0, %s105
    %s107 = sphi 0, %s105
    %s108 = sphi 0, %s107
    %s122 = sphi 0, %s108
    %s130 = sphi 0, %s132
    %s133 = sphi 0, %s130
    %s134 = sphi 0, %s133
    %s150 = sphi 0, %s134
  $region4: #{_lambda_.14} parent=0 // loop_header_branch
    %13 = sbr.rel (%p11) target = $region8
  $region5: #{_lambda_.14} parent=0 // loop_body
    %s15 = ssub.s32 %s10, 1
    %s16 = ssub.s32 %s10, 2
    %s23 = sadd.s32 1, %s18
    %p24 = scmp.ge.s32.totalorder %s23, 1
    %s25 = scalar_select %p24, 0, %s23
    %s26 = sadd.s32 1, %s17
    %s27 = scalar_select %p24, %s26, %s17
    %p28 = scmp.ge.s32.totalorder %s27, 2
    %s29 = scalar_select %p28, 0, %s27
    %s30 = ssub.s32 %s17, %s29
    %p31 = scmp.eq.s32.totalorder %s30, 0
    %s33 = sadd.s32 %s32, 1
    %s34 = scalar_select %p31, %s32, %s33
    %p37 = pneg %p31
    %p38 = scmp.eq.s32.totalorder %s10, 1
    %p39 = por %p37, %p38
    %p40 = scmp.ne.s32.totalorder %s32, %s35
    %p41 = scmp.eq.s32.totalorder %s10, 0
    %p42 = por %p40, %p41
    %p43 = scmp.ne.s32.totalorder %s32, %s35
    %p44 = scmp.eq.s32.totalorder %s15, 1
    %p45 = por %p43, %p44
    %p46 = scmp.ne.s32.totalorder %s35, %s36
    %p47 = scmp.eq.s32.totalorder %s15, 0
    %p48 = por %p46, %p47
    %p49 = scmp.ne.s32.totalorder %s35, %s36
    %p50 = scmp.eq.s32.totalorder %s16, 1
    %p51 = por %p49, %p50
    %p53 = scmp.ne.s32.totalorder %s36, %s52
    %p54 = scmp.eq.s32.totalorder %s16, 0
    %p55 = por %p53, %p54
    %s57 = sadd.s32 %s56, 1
    %p60 = scmp.eq.s32.totalorder %s10, 1
    %p61 = scmp.ne.s32.totalorder %s56, %s58
    %p62 = scmp.eq.s32.totalorder %s10, 0
    %p63 = por %p61, %p62
    %p64 = scmp.ne.s32.totalorder %s56, %s58
    %p65 = scmp.eq.s32.totalorder %s15, 1
    %p66 = por %p64, %p65
    %p67 = scmp.ne.s32.totalorder %s58, %s59
    %p68 = scmp.eq.s32.totalorder %s15, 0
    %p69 = por %p67, %p68
    %p70 = scmp.ne.s32.totalorder %s58, %s59
    %p71 = scmp.eq.s32.totalorder %s16, 1
    %p72 = por %p70, %p71
    %p74 = scmp.ne.s32.totalorder %s59, %s73
    %p75 = scmp.eq.s32.totalorder %s16, 0
    %p76 = por %p74, %p75
    %s77 = ssub.s32 %s17, %s29
    %s78 = ssub.s32 %s18, %s25
    %s79 = sor.u32 %s77, %s78
    %p80 = scmp.eq.s32.totalorder %s79, 0
    %s82 = sadd.s32 %s81, 1
    %s83 = scalar_select %p80, %s81, %s82
    %p86 = pneg %p80
    %p87 = scmp.eq.s32.totalorder %s10, 1
    %p88 = por %p86, %p87
    %p89 = scmp.ne.s32.totalorder %s81, %s84
    %p90 = scmp.eq.s32.totalorder %s10, 0
    %p91 = por %p89, %p90
    %p92 = scmp.ne.s32.totalorder %s81, %s84
    %p93 = scmp.eq.s32.totalorder %s15, 1
    %p94 = por %p92, %p93
    %p95 = scmp.ne.s32.totalorder %s84, %s85
    %p96 = scmp.eq.s32.totalorder %s15, 0
    %p97 = por %p95, %p96
    %p98 = scmp.ne.s32.totalorder %s84, %s85
    %p99 = scmp.eq.s32.totalorder %s16, 1
    %p100 = por %p98, %p99
    %p102 = scmp.ne.s32.totalorder %s85, %s101
    %p103 = scmp.eq.s32.totalorder %s16, 0
    %p104 = por %p102, %p103
    %s106 = sadd.s32 %s105, 1
    %p109 = scmp.eq.s32.totalorder %s10, 1
    %p110 = scmp.ne.s32.totalorder %s105, %s107
    %p111 = scmp.eq.s32.totalorder %s10, 0
    %p112 = por %p110, %p111
    %p113 = scmp.ne.s32.totalorder %s105, %s107
    %p114 = scmp.eq.s32.totalorder %s15, 1
    %p115 = por %p113, %p114
    %p116 = scmp.ne.s32.totalorder %s107, %s108
    %p117 = scmp.eq.s32.totalorder %s15, 0
    %p118 = por %p116, %p117
    %p119 = scmp.ne.s32.totalorder %s107, %s108
    %p120 = scmp.eq.s32.totalorder %s16, 1
    %p121 = por %p119, %p120
    %p123 = scmp.ne.s32.totalorder %s108, %s122
    %p124 = scmp.eq.s32.totalorder %s16, 0
    %p125 = por %p123, %p124
    %s126 = ssub.s32 %s17, %s29
    %s127 = ssub.s32 %s18, %s25
    %s128 = sor.u32 %s126, %s127
    %p129 = scmp.eq.s32.totalorder %s128, 0
    %s131 = sadd.s32 %s130, 1
    %s132 = scalar_select %p129, %s130, %s131
    %p135 = pneg %p129
    %p136 = scmp.eq.s32.totalorder %s10, 1
    %p137 = por %p135, %p136
    %p138 = scmp.ne.s32.totalorder %s130, %s133
    %p139 = scmp.eq.s32.totalorder %s10, 0
    %p140 = por %p138, %p139
    %p141 = scmp.ne.s32.totalorder %s130, %s133
    %p142 = scmp.eq.s32.totalorder %s15, 1
    %p143 = por %p141, %p142
    %p144 = scmp.ne.s32.totalorder %s133, %s134
    %p145 = scmp.eq.s32.totalorder %s15, 0
    %p146 = por %p144, %p145
    %p147 = scmp.ne.s32.totalorder %s133, %s134
    %p148 = scmp.eq.s32.totalorder %s16, 1
    %p149 = por %p147, %p148
    %p151 = scmp.ne.s32.totalorder %s134, %s150
    %p152 = scmp.eq.s32.totalorder %s16, 0
    %p153 = por %p151, %p152
    %p154 = scmp.le.s32.totalorder 1, %s10
    %p155 = scmp.lt.s32.totalorder %s10, 3
    %p156 = pnand %p154, %p155
    %p157 = pneg %p156
    // Predicated region
    $region9: #{_lambda_.14} parent=5 // pred_check
      _
    $region10: #{_lambda_.14} parent=5 // pred_check_branch
      %159 = sbr.rel (%p156) target = $region12
    $region11: #{_lambda_.14} parent=5 // pred_region
      %s160 = ssub.s32 %s10, 1
      // Predicated region
      $region13: #{_lambda_.14} parent=11 // pred_check
        %p161 = pneg %p69
      $region14: #{_lambda_.14} parent=11 // pred_check_branch
        %163 = sbr.rel (%p161) target = $region16
      $region15: #{_lambda_.14} parent=11 // pred_region
        _
      $region16: #{_lambda_.14} parent=11 // pred_fallthru
        _
      // Predicated region
      $region17: #{_lambda_.14} parent=11 // pred_check
        %p164 = pneg %p118
      $region18: #{_lambda_.14} parent=11 // pred_check_branch
        %166 = sbr.rel (%p164) target = $region20
      $region19: #{_lambda_.14} parent=11 // pred_region
        _
      $region20: #{_lambda_.14} parent=11 // pred_fallthru
        _
    $region12: #{_lambda_.14} parent=5 // pred_fallthru
      _
    %p167 = scmp.lt.s32.totalorder %s10, 2
    // Predicated region
    $region21: #{_lambda_.14} parent=5 // pred_check
      %p168 = pneg %p167
    $region22: #{_lambda_.14} parent=5 // pred_check_branch
      %170 = sbr.rel (%p168) target = $region24
    $region23: #{_lambda_.14} parent=5 // pred_region
      // Predicated region
      $region25: #{_lambda_.14} parent=23 // pred_check
        %p171 = pneg %p42
      $region26: #{_lambda_.14} parent=23 // pred_check_branch
        %173 = sbr.rel (%p171) target = $region28
      $region27: #{_lambda_.14} parent=23 // pred_region
        %p174 = scmp.lt.s32.totalorder %s17, 1
        %s175 = scalar_select %p174, %s17, 1
        %s176 = smul.addr %s175, 3
        %s177 = smul.addr %s176, 4
        %s178 = scalar_lea.vmem %s0, %s177
      $region28: #{_lambda_.14} parent=23 // pred_fallthru
        _
      // Predicated region
      $region29: #{_lambda_.14} parent=23 // pred_check
        %p179 = pneg %p91
      $region30: #{_lambda_.14} parent=23 // pred_check_branch
        %181 = sbr.rel (%p179) target = $region32
      $region31: #{_lambda_.14} parent=23 // pred_region
        %p182 = scmp.lt.s32.totalorder %s17, 1
        %s183 = scalar_select %p182, %s17, 1
        %p184 = scmp.lt.s32.totalorder %s18, 0
        %s185 = scalar_select %p184, %s18, 0
        %s186 = smul.addr %s183, 2
        %s187 = sadd.s32 %s185, %s186
        %s188 = smul.addr %s187, 8
        %s189 = scalar_lea.vmem %s2, %s188
      $region32: #{_lambda_.14} parent=23 // pred_fallthru
        _
    $region24: #{_lambda_.14} parent=5 // pred_fallthru
      _
    %p190 = scmp.le.s32.totalorder 1, %s10
    %p191 = scmp.lt.s32.totalorder %s10, 3
    %p192 = pnand %p190, %p191
    %p193 = pneg %p192
    // Predicated region
    $region33: #{_lambda_.14} parent=5 // pred_check
      _
    $region34: #{_lambda_.14} parent=5 // pred_check_branch
      %195 = sbr.rel (%p192) target = $region36
    $region35: #{_lambda_.14} parent=5 // pred_region
      %s196 = ssub.s32 %s10, 1
      %p197 = scmp.lt.s32.totalorder %s19, 1
      %s198 = scalar_select %p197, %s19, 1
      %s199 = smul.addr %s198, 3
      %s200 = smul.addr %s199, 4
      %s201 = scalar_lea.vmem %s0, %s200
      %p202 = pneg %p48
      %p203 = pneg %p45
      %p204 = pneg %p69
      %p205 = pneg %p66
      %p206 = scmp.lt.s32.totalorder %s19, 1
      %s207 = scalar_select %p206, %s19, 1
      %p208 = scmp.lt.s32.totalorder %s20, 0
      %s209 = scalar_select %p208, %s20, 0
      %s210 = smul.addr %s207, 2
      %s211 = sadd.s32 %s209, %s210
      %s212 = smul.addr %s211, 8
      %s213 = scalar_lea.vmem %s2, %s212
      %p214 = pneg %p97
      %p215 = pneg %p94
      %p216 = pneg %p118
      %p217 = pneg %p115
      %p218 = pneg %p146
      %p219 = pneg %p143
      %p220 = scmp.lt.s32.totalorder %s19, 1
      %s221 = scalar_select %p220, %s19, 1
      %p222 = scmp.lt.s32.totalorder %s20, 0
      %s223 = scalar_select %p222, %s20, 0
      %s224 = smul.addr %s221, 2
      %s225 = sadd.s32 %s223, %s224
      %s226 = smul.addr %s225, 8
      %s227 = scalar_lea.vmem %s4, %s226
      %p228 = scmp.lt.s32.totalorder %s19, 1
      %s229 = scalar_select %p228, %s19, 1
      %s230 = smul.addr %s229, 3
      %s231 = smul.addr %s230, 4
      %s232 = scalar_lea.vmem %s0, %s231
      %p233 = scmp.lt.s32.totalorder %s19, 1
      %s234 = scalar_select %p233, %s19, 1
      %p235 = scmp.lt.s32.totalorder %s20, 0
      %s236 = scalar_select %p235, %s20, 0
      %s237 = smul.addr %s234, 2
      %s238 = sadd.s32 %s236, %s237
      %s239 = smul.addr %s238, 8
      %s240 = scalar_lea.vmem %s2, %s239
      %p241 = scmp.lt.s32.totalorder %s19, 1
      %s242 = scalar_select %p241, %s19, 1
      %p243 = scmp.lt.s32.totalorder %s20, 0
      %s244 = scalar_select %p243, %s20, 0
      %s245 = smul.addr %s242, 2
      %s246 = sadd.s32 %s244, %s245
      %s247 = smul.addr %s246, 8
      %s248 = scalar_lea.vmem %s4, %s247
      %v250 = vld [vmem:[%s240] sm:$0xff]
      %v251 = vld [vmem:[%s240 + $0x8] sm:$0xff]
      %v252 = vld [vmem:[%s232] sm:$0xf]
      %v253 = vld [vmem:[%s232 + $0x4] sm:$0xf]
      %v254 = vld [vmem:[%s1] sm:$0xf]
      %v255 = vld [vmem:[%s1 + $0x4] sm:$0xf]
      %v256 = vld [vmem:[%s1 + $0x8] sm:$0xf]
      %v257 = vld [vmem:[%s1 + $0xc] sm:$0xf]
      %v258 = vld [vmem:[%s1 + $0x10] sm:$0xf]
      %v259 = vld [vmem:[%s1 + $0x14] sm:$0xf]
      %v260 = vld [vmem:[%s1 + $0x18] sm:$0x7]
      %v263 = vunpack.c.l.b16 %v252
      %v264 = vunpack.c.l.b16 %v253
      %v265 = vpack.c.b16 %v264, %v263
      %v273 = vunpack.c.l.b16 %v254
      %v274 = vunpack.c.l.b16 %v255
      %v275 = vunpack.c.l.b16 %v256
      %v276 = vunpack.c.l.b16 %v257
      %v277 = vunpack.c.l.b16 %v258
      %v278 = vunpack.c.l.b16 %v259
      %v279 = vunpack.c.l.b16 %v260
      %v280 = vpack.c.b16 %v274, %v273
      %v281 = vpack.c.b16 %v276, %v275
      %v282 = vpack.c.b16 %v278, %v277
      %v283 = vpack.c.b16 %v279, %v279
      %vm287 = vcmask 441344
      %v289 = vsel %vm287, %v265, 0
      %vm291 = vcmask 1042432
      %v293 = vsel %vm291, %v283, 0
      %295 = vmatpush.bf16.msra.mxu0 0
      %296 = vmatpush.bf16.msra.mxu0 0
      %297 = vmatpush.bf16.msra.mxu0 0
      %298 = vmatpush.bf16.msra.mxu0 0
      %299 = vmatpush.bf16.msra.mxu0 %v293
      %300 = vmatpush.bf16.msra.mxu0 %v282
      %301 = vmatpush.bf16.msra.mxu0 %v281
      %302 = vmatpush.bf16.msra.mxu0 %v280
      %303 = vmatmul.bf16.gmra.mxu0 %v289
      %v304 = vpop.f32.mrf.mxu0
      %v305 = vadd.f32 0.0, %v304
      %v306 = vpop.f32.mrf.mxu0
      %v307 = vadd.f32 0.0, %v306
      %308 = vdwg.mxu0
      %v309 = vadd.f32 %v250, %v305
      %v310 = vadd.f32 %v251, %v307
      %v311 = vld [vmem:[%s232] sm:$0xf]
      %v312 = vld [vmem:[%s232 + $0x4] sm:$0xf]
      %v313 = vld [vmem:[%s232 + $0x8] sm:$0x1]
      %s314 = scalar_lea.vmem %s1, 28
      %v315 = vld [vmem:[%s314] sm:$0xf]
      %v316 = vld [vmem:[%s314 + $0x4] sm:$0xf]
      %v317 = vld [vmem:[%s314 + $0x8] sm:$0xf]
      %v318 = vld [vmem:[%s314 + $0xc] sm:$0xf]
      %v319 = vld [vmem:[%s314 + $0x10] sm:$0xf]
      %v320 = vld [vmem:[%s314 + $0x14] sm:$0xf]
      %v321 = vld [vmem:[%s314 + $0x18] sm:$0x7]
      %v325 = vunpack.c.l.b16 %v311
      %v326 = vunpack.c.l.b16 %v312
      %v327 = vunpack.c.l.b16 %v313
      %v328 = vpack.c.b16 %v326, %v325
      %v329 = vpack.c.b16 %v327, %v327
      %vm330 = vsmask.f32 7424
      %v332 = vshrl.u32 %v328, 16
      %v334 = vshll.u32 %v328, 16
      %v336 = vrot.slane %v334, 1
      %v337 = vor.u32 %v332, %v336
      %v339 = vshll.u32 %v329, 16
      %v341 = vrot.slane %v339, 1
      %v342 = vsel %vm330, %v337, %v341
      %v350 = vunpack.c.l.b16 %v315
      %v351 = vunpack.c.l.b16 %v316
      %v352 = vunpack.c.l.b16 %v317
      %v353 = vunpack.c.l.b16 %v318
      %v354 = vunpack.c.l.b16 %v319
      %v355 = vunpack.c.l.b16 %v320
      %v356 = vunpack.c.l.b16 %v321
      %v357 = vpack.c.b16 %v351, %v350
      %v358 = vpack.c.b16 %v353, %v352
      %v359 = vpack.c.b16 %v355, %v354
      %v360 = vpack.c.b16 %v356, %v356
      %v365 = vsel %vm287, %v342, 0
      %v368 = vsel %vm291, %v360, 0
      %370 = vmatpush.bf16.msra.mxu0 0
      %371 = vmatpush.bf16.msra.mxu0 0
      %372 = vmatpush.bf16.msra.mxu0 0
      %373 = vmatpush.bf16.msra.mxu0 0
      %374 = vmatpush.bf16.msra.mxu0 %v368
      %375 = vmatpush.bf16.msra.mxu0 %v359
      %376 = vmatpush.bf16.msra.mxu0 %v358
      %377 = vmatpush.bf16.msra.mxu0 %v357
      %378 = vmatmul.bf16.gmra.mxu0 %v365
      %v379 = vpop.f32.mrf.mxu0
      %v380 = vadd.f32 0.0, %v379
      %v381 = vpop.f32.mrf.mxu0
      %v382 = vadd.f32 0.0, %v381
      %383 = vdwg.mxu0
      %v384 = vadd.f32 %v309, %v380
      %v385 = vadd.f32 %v310, %v382
      %v386 = vld [vmem:[%s232] sm:$0xe]
      %s387 = scalar_lea.vmem %s1, 56
      %v388 = vld [vmem:[%s387] sm:$0xf]
      %v389 = vld [vmem:[%s387 + $0x4] sm:$0xf]
      %v390 = vld [vmem:[%s387 + $0x8] sm:$0xf]
      %v391 = vld [vmem:[%s387 + $0xc] sm:$0xf]
      %v392 = vld [vmem:[%s387 + $0x10] sm:$0xf]
      %v393 = vld [vmem:[%s387 + $0x14] sm:$0xf]
      %v394 = vld [vmem:[%s387 + $0x18] sm:$0x7]
      %v396 = vunpack.c.l.b16 %v386
      %v397 = vpack.c.b16 %v326, %v396
      %vm398 = vcmask 1046528
      %v399 = vrot.slane %v397, 1
      %v400 = vrot.slane %v329, 1
      %v401 = vsel %vm398, %v399, %v400
      %v409 = vunpack.c.l.b16 %v388
      %v410 = vunpack.c.l.b16 %v389
      %v411 = vunpack.c.l.b16 %v390
      %v412 = vunpack.c.l.b16 %v391
      %v413 = vunpack.c.l.b16 %v392
      %v414 = vunpack.c.l.b16 %v393
      %v415 = vunpack.c.l.b16 %v394
      %v416 = vpack.c.b16 %v410, %v409
      %v417 = vpack.c.b16 %v412, %v411
      %v418 = vpack.c.b16 %v414, %v413
      %v419 = vpack.c.b16 %v415, %v415
      %v424 = vsel %vm287, %v401, 0
      %v427 = vsel %vm291, %v419, 0
      %429 = vmatpush.bf16.msra.mxu0 0
      %430 = vmatpush.bf16.msra.mxu0 0
      %431 = vmatpush.bf16.msra.mxu0 0
      %432 = vmatpush.bf16.msra.mxu0 0
      %433 = vmatpush.bf16.msra.mxu0 %v427
      %434 = vmatpush.bf16.msra.mxu0 %v418
      %435 = vmatpush.bf16.msra.mxu0 %v417
      %436 = vmatpush.bf16.msra.mxu0 %v416
      %437 = vmatmul.bf16.gmra.mxu0 %v424
      %v438 = vpop.f32.mrf.mxu0
      %v439 = vadd.f32 0.0, %v438
      %v440 = vpop.f32.mrf.mxu0
      %v441 = vadd.f32 0.0, %v440
      %442 = vdwg.mxu0
      %v443 = vadd.f32 %v384, %v439
      %v444 = vadd.f32 %v385, %v441
      %v445 = vld [vmem:[%s3] sm:$0x1]
      %v447 = vperm.slane %v445, 0
      %vm449 = vcmp.gt.f32.partialorder %v443, %v447
      %vm450 = vcmp.gt.f32.partialorder %v444, %v447
      %v451 = vsub.f32 %v443, %v447
      %v452 = vsub.f32 %v444, %v447
      %v453 = vsub.f32 0.0, %v445
      %v455 = vperm.slane %v453, 0
      %vm457 = vcmp.lt.f32.partialorder %v443, %v455
      %vm458 = vcmp.lt.f32.partialorder %v444, %v455
      %v459 = vadd.f32 %v443, %v447
      %v460 = vadd.f32 %v444, %v447
      %v461 = vsel %vm457, %v459, 0.0
      %v462 = vsel %vm458, %v460, 0.0
      %v463 = vsel %vm449, %v451, %v461
      %v464 = vsel %vm450, %v452, %v462
      %465 = vst [vmem:[%s248] sm:$0xff] %v463
      %466 = vst [vmem:[%s248 + $0x8] sm:$0xff] %v464
      %p467 = scmp.lt.s32.totalorder %s19, 1
      %s468 = scalar_select %p467, %s19, 1
      %p469 = scmp.lt.s32.totalorder %s20, 0
      %s470 = scalar_select %p469, %s20, 0
      %s471 = smul.addr %s468, 2
      %s472 = sadd.s32 %s470, %s471
      %s473 = smul.addr %s472, 8
      %s474 = scalar_lea.vmem %s4, %s473
      // Predicated region
      $region37: #{_lambda_.14} parent=35 // pred_check
        %p475 = pneg %p143
      $region38: #{_lambda_.14} parent=35 // pred_check_branch
        %477 = sbr.rel (%p475) target = $region40
      $region39: #{_lambda_.14} parent=35 // pred_region
        _
      $region40: #{_lambda_.14} parent=35 // pred_fallthru
        _
    $region36: #{_lambda_.14} parent=5 // pred_fallthru
      _
    %p478 = scmp.le.s32.totalorder 2, %s10
    // Predicated region
    $region41: #{_lambda_.14} parent=5 // pred_check
      %p479 = pneg %p478
    $region42: #{_lambda_.14} parent=5 // pred_check_branch
      %481 = sbr.rel (%p479) target = $region44
    $region43: #{_lambda_.14} parent=5 // pred_region
      %s482 = ssub.s32 %s10, 2
      // Predicated region
      $region45: #{_lambda_.14} parent=43 // pred_check
        %p483 = pneg %p149
      $region46: #{_lambda_.14} parent=43 // pred_check_branch
        %485 = sbr.rel (%p483) target = $region48
      $region47: #{_lambda_.14} parent=43 // pred_region
        %p486 = scmp.lt.s32.totalorder %s21, 1
        %s487 = scalar_select %p486, %s21, 1
        %p488 = scmp.lt.s32.totalorder %s22, 0
        %s489 = scalar_select %p488, %s22, 0
        %s490 = smul.addr %s487, 2
        %s491 = sadd.s32 %s489, %s490
        %s492 = smul.addr %s491, 8
        %s493 = scalar_lea.vmem %s4, %s492
      $region48: #{_lambda_.14} parent=43 // pred_fallthru
        _
    $region44: #{_lambda_.14} parent=5 // pred_fallthru
      _
  $region6: #{_lambda_.14} parent=0 // loop_footer
    %s14 = sadd.s32 1, %s10
  $region7: #{_lambda_.14} parent=0 // loop_footer_branch
    %9 = sbr.rel target = $region3
  $region8: #{_lambda_.14} parent=0 // loop_exit
    _

// kernel: _lambda_.18
$region0: #{_lambda_.18}
  #allocation0 [shape = 'u32[]', space=smem, size = 0x4, offset = 0x4, fixed_abs, tag = 'smem constant byte address 0x4 - core index']
  #allocation1 [shape = 'u32[72,128]{1,0:T(1,128)}', space=vmem, size = 0x9000, scoped, tag = 'internal scratch']
  %s0 = inlined_call_operand.vmem [shape: f32[2,16,128], index: 0, kind: input, shape index: {}]
  %s1 = inlined_call_operand.vmem [shape: f32[8,16], index: 1, kind: input, shape index: {}]
  %s2 = inlined_call_operand.vmem [shape: f32[128,64], index: 2, kind: input, shape index: {}]
  %s3 = inlined_call_operand.vmem [shape: f32[2,8,64], index: 3, kind: output, shape index: {}]
  %s4 = sld [smem:[#allocation0]]
  $region45: #{_lambda_.18} parent=0
    _
  %s6 = ssub.s32 1, %s4
  %s7 = scalar_select 0, %s6, %s4
  loop: start=0, step=1, limit=4
  $region2: #{_lambda_.18} parent=0 // loop_pre_header
    _
  $region3: #{_lambda_.18} parent=0 // loop_header
    %s9 = sphi 0, %s13
    %p10 = scmp.ge.s32.totalorder %s9, 4
    %s19 = sphi 0, %s21
    %s22 = sphi 0, %s19
    %s23 = sphi 0, %s22
    %s39 = sphi 0, %s23
    %s43 = sphi 0, %s43
    %s45 = sphi 0, %s43
    %s46 = sphi 0, %s45
    %s60 = sphi 0, %s46
    %s64 = sphi 0, %s64
    %s66 = sphi 0, %s64
    %s67 = sphi 0, %s66
    %s81 = sphi 0, %s67
    %s87 = sphi 0, %s89
    %s90 = sphi 0, %s87
    %s91 = sphi 0, %s90
    %s107 = sphi 0, %s91
  $region4: #{_lambda_.18} parent=0 // loop_header_branch
    %12 = sbr.rel (%p10) target = $region8
  $region5: #{_lambda_.18} parent=0 // loop_body
    %s14 = ssub.s32 %s9, 1
    %s15 = ssub.s32 %s9, 2
    %s16 = sadd.s32 %s9, 1
    %s17 = ssub.s32 %s9, %s16
    %p18 = scmp.eq.s32.totalorder %s17, 0
    %s20 = sadd.s32 %s19, 1
    %s21 = scalar_select %p18, %s19, %s20
    %p24 = pneg %p18
    %p25 = scmp.eq.s32.totalorder %s9, 1
    %p26 = por %p24, %p25
    %p27 = scmp.ne.s32.totalorder %s19, %s22
    %p28 = scmp.eq.s32.totalorder %s9, 0
    %p29 = por %p27, %p28
    %p30 = scmp.ne.s32.totalorder %s19, %s22
    %p31 = scmp.eq.s32.totalorder %s14, 1
    %p32 = por %p30, %p31
    %p33 = scmp.ne.s32.totalorder %s22, %s23
    %p34 = scmp.eq.s32.totalorder %s14, 0
    %p35 = por %p33, %p34
    %p36 = scmp.ne.s32.totalorder %s22, %s23
    %p37 = scmp.eq.s32.totalorder %s15, 1
    %p38 = por %p36, %p37
    %p40 = scmp.ne.s32.totalorder %s23, %s39
    %p41 = scmp.eq.s32.totalorder %s15, 0
    %p42 = por %p40, %p41
    %s44 = sadd.s32 %s43, 1
    %p47 = scmp.eq.s32.totalorder %s9, 1
    %p48 = scmp.ne.s32.totalorder %s43, %s45
    %p49 = scmp.eq.s32.totalorder %s9, 0
    %p50 = por %p48, %p49
    %p51 = scmp.ne.s32.totalorder %s43, %s45
    %p52 = scmp.eq.s32.totalorder %s14, 1
    %p53 = por %p51, %p52
    %p54 = scmp.ne.s32.totalorder %s45, %s46
    %p55 = scmp.eq.s32.totalorder %s14, 0
    %p56 = por %p54, %p55
    %p57 = scmp.ne.s32.totalorder %s45, %s46
    %p58 = scmp.eq.s32.totalorder %s15, 1
    %p59 = por %p57, %p58
    %p61 = scmp.ne.s32.totalorder %s46, %s60
    %p62 = scmp.eq.s32.totalorder %s15, 0
    %p63 = por %p61, %p62
    %s65 = sadd.s32 %s64, 1
    %p68 = scmp.eq.s32.totalorder %s9, 1
    %p69 = scmp.ne.s32.totalorder %s64, %s66
    %p70 = scmp.eq.s32.totalorder %s9, 0
    %p71 = por %p69, %p70
    %p72 = scmp.ne.s32.totalorder %s64, %s66
    %p73 = scmp.eq.s32.totalorder %s14, 1
    %p74 = por %p72, %p73
    %p75 = scmp.ne.s32.totalorder %s66, %s67
    %p76 = scmp.eq.s32.totalorder %s14, 0
    %p77 = por %p75, %p76
    %p78 = scmp.ne.s32.totalorder %s66, %s67
    %p79 = scmp.eq.s32.totalorder %s15, 1
    %p80 = por %p78, %p79
    %p82 = scmp.ne.s32.totalorder %s67, %s81
    %p83 = scmp.eq.s32.totalorder %s15, 0
    %p84 = por %p82, %p83
    %s85 = ssub.s32 %s9, %s16
    %p86 = scmp.eq.s32.totalorder %s85, 0
    %s88 = sadd.s32 %s87, 1
    %s89 = scalar_select %p86, %s87, %s88
    %p92 = pneg %p86
    %p93 = scmp.eq.s32.totalorder %s9, 1
    %p94 = por %p92, %p93
    %p95 = scmp.ne.s32.totalorder %s87, %s90
    %p96 = scmp.eq.s32.totalorder %s9, 0
    %p97 = por %p95, %p96
    %p98 = scmp.ne.s32.totalorder %s87, %s90
    %p99 = scmp.eq.s32.totalorder %s14, 1
    %p100 = por %p98, %p99
    %p101 = scmp.ne.s32.totalorder %s90, %s91
    %p102 = scmp.eq.s32.totalorder %s14, 0
    %p103 = por %p101, %p102
    %p104 = scmp.ne.s32.totalorder %s90, %s91
    %p105 = scmp.eq.s32.totalorder %s15, 1
    %p106 = por %p104, %p105
    %p108 = scmp.ne.s32.totalorder %s91, %s107
    %p109 = scmp.eq.s32.totalorder %s15, 0
    %p110 = por %p108, %p109
    %p111 = scmp.le.s32.totalorder 1, %s9
    %p112 = scmp.lt.s32.totalorder %s9, 3
    %p113 = pnand %p111, %p112
    %p114 = pneg %p113
    // Predicated region
    $region9: #{_lambda_.18} parent=5 // pred_check
      _
    $region10: #{_lambda_.18} parent=5 // pred_check_branch
      %116 = sbr.rel (%p113) target = $region12
    $region11: #{_lambda_.18} parent=5 // pred_region
      %s117 = ssub.s32 %s9, 1
      // Predicated region
      $region13: #{_lambda_.18} parent=11 // pred_check
        %p118 = pneg %p56
      $region14: #{_lambda_.18} parent=11 // pred_check_branch
        %120 = sbr.rel (%p118) target = $region16
      $region15: #{_lambda_.18} parent=11 // pred_region
        _
      $region16: #{_lambda_.18} parent=11 // pred_fallthru
        _
      // Predicated region
      $region17: #{_lambda_.18} parent=11 // pred_check
        %p121 = pneg %p77
      $region18: #{_lambda_.18} parent=11 // pred_check_branch
        %123 = sbr.rel (%p121) target = $region20
      $region19: #{_lambda_.18} parent=11 // pred_region
        _
      $region20: #{_lambda_.18} parent=11 // pred_fallthru
        _
    $region12: #{_lambda_.18} parent=5 // pred_fallthru
      _
    %p124 = scmp.lt.s32.totalorder %s9, 2
    // Predicated region
    $region21: #{_lambda_.18} parent=5 // pred_check
      %p125 = pneg %p124
    $region22: #{_lambda_.18} parent=5 // pred_check_branch
      %127 = sbr.rel (%p125) target = $region24
    $region23: #{_lambda_.18} parent=5 // pred_region
      // Predicated region
      $region25: #{_lambda_.18} parent=23 // pred_check
        %p128 = pneg %p29
      $region26: #{_lambda_.18} parent=23 // pred_check_branch
        %130 = sbr.rel (%p128) target = $region28
      $region27: #{_lambda_.18} parent=23 // pred_region
        %p131 = scmp.lt.s32.totalorder %s9, 1
        %s132 = scalar_select %p131, %s9, 1
        %s133 = smul.addr %s132, 2
        %s134 = smul.addr %s133, 8
        %s135 = scalar_lea.vmem %s0, %s134
      $region28: #{_lambda_.18} parent=23 // pred_fallthru
        _
    $region24: #{_lambda_.18} parent=5 // pred_fallthru
      _
    %p136 = scmp.le.s32.totalorder 1, %s9
    %p137 = scmp.lt.s32.totalorder %s9, 3
    %p138 = pnand %p136, %p137
    %p139 = pneg %p138
    // Predicated region
    $region29: #{_lambda_.18} parent=5 // pred_check
      _
    $region30: #{_lambda_.18} parent=5 // pred_check_branch
      %141 = sbr.rel (%p138) target = $region32
    $region31: #{_lambda_.18} parent=5 // pred_region
      %s142 = ssub.s32 %s9, 1
      %p143 = scmp.lt.s32.totalorder %s14, 1
      %s144 = scalar_select %p143, %s14, 1
      %s145 = smul.addr %s144, 2
      %s146 = smul.addr %s145, 8
      %s147 = scalar_lea.vmem %s0, %s146
      %p148 = pneg %p35
      %p149 = pneg %p32
      %p150 = pneg %p56
      %p151 = pneg %p53
      %p152 = pneg %p77
      %p153 = pneg %p74
      %p154 = pneg %p103
      %p155 = pneg %p100
      %p156 = scmp.lt.s32.totalorder %s14, 1
      %s157 = scalar_select %p156, %s14, 1
      %s158 = smul.addr %s157, 8
      %s159 = scalar_lea.vmem %s3, %s158
      %p160 = scmp.lt.s32.totalorder %s14, 1
      %s161 = scalar_select %p160, %s14, 1
      %s162 = smul.addr %s161, 2
      %s163 = smul.addr %s162, 8
      %s164 = scalar_lea.vmem %s0, %s163
      %p165 = scmp.lt.s32.totalorder %s14, 1
      %s166 = scalar_select %p165, %s14, 1
      %s167 = smul.addr %s166, 8
      %s168 = scalar_lea.vmem %s3, %s167
      %v169 = vld [vmem:[%s1] sm:$0xff]
      %v170 = vld [vmem:[%s164] sm:$0xff]
      %v171 = vld [vmem:[%s164 + $0x8] sm:$0xff]
      %vm172 = vcmask 130048
      %v174 = vsel %vm172, %v169, 0
      %176 = vmatpush.msra.mxu0 0.0
      %177 = vmatpush.msra.mxu0 0.0
      %178 = vmatpush.msra.mxu0 0.0
      %179 = vmatpush.msra.mxu0 0.0
      %180 = vmatpush.msra.mxu0 0.0
      %181 = vmatpush.msra.mxu0 0.0
      %182 = vmatpush.msra.mxu0 0.0
      %183 = vmatpush.msra.mxu0 0.0
      %184 = vmatpush.msra.mxu0 0.0
      %185 = vmatpush.msra.mxu0 0.0
      %186 = vmatpush.msra.mxu0 0.0
      %187 = vmatpush.msra.mxu0 0.0
      %188 = vmatpush.msra.mxu0 0.0
      %189 = vmatpush.msra.mxu0 0.0
      %190 = vmatpush.msra.mxu0 %v171
      %191 = vmatpush.msra.mxu0 %v170
      %192 = vmatmul.f32.gmra.mxu0 %v174
      %v193 = vpop.f32.mrf.mxu0
      %v194 = vadd.f32 0.0, %v193
      %195 = vdwg.mxu0
      %v196 = vld [vmem:[%s2] sm:$0xff]
      %v197 = vld [vmem:[%s2 + $0x8] sm:$0xff]
      %v198 = vld [vmem:[%s2 + $0x10] sm:$0xff]
      %v199 = vld [vmem:[%s2 + $0x18] sm:$0xff]
      %v200 = vld [vmem:[%s2 + $0x20] sm:$0xff]
      %v201 = vld [vmem:[%s2 + $0x28] sm:$0xff]
      %v202 = vld [vmem:[%s2 + $0x30] sm:$0xff]
      %v203 = vld [vmem:[%s2 + $0x38] sm:$0xff]
      %v204 = vld [vmem:[%s2 + $0x40] sm:$0xff]
      %v205 = vld [vmem:[%s2 + $0x48] sm:$0xff]
      %v206 = vld [vmem:[%s2 + $0x50] sm:$0xff]
      %v207 = vld [vmem:[%s2 + $0x58] sm:$0xff]
      %v208 = vld [vmem:[%s2 + $0x60] sm:$0xff]
      %v209 = vld [vmem:[%s2 + $0x68] sm:$0xff]
      %v210 = vld [vmem:[%s2 + $0x70] sm:$0xff]
      %v211 = vld [vmem:[%s2 + $0x78] sm:$0xff]
      %212 = vmatpush.msra.mxu0 %v211
      %213 = vmatpush.msra.mxu0 %v210
      %214 = vmatpush.msra.mxu0 %v209
      %215 = vmatpush.msra.mxu0 %v208
      %216 = vmatpush.msra.mxu0 %v207
      %217 = vmatpush.msra.mxu0 %v206
      %218 = vmatpush.msra.mxu0 %v205
      %219 = vmatpush.msra.mxu0 %v204
      %220 = vmatpush.msra.mxu0 %v203
      %221 = vmatpush.msra.mxu0 %v202
      %222 = vmatpush.msra.mxu0 %v201
      %223 = vmatpush.msra.mxu0 %v200
      %224 = vmatpush.msra.mxu0 %v199
      %225 = vmatpush.msra.mxu0 %v198
      %226 = vmatpush.msra.mxu0 %v197
      %227 = vmatpush.msra.mxu0 %v196
      %228 = vmatmul.f32.gmra.mxu0 %v194
      %v229 = vpop.f32.mrf.mxu0
      %v230 = vadd.f32 0.0, %v229
      %231 = vdwg.mxu0
      %vm232 = vcmask 523264
      %233 = vst.msk [vmem:[%s168] sm:$0xff] %vm232, %v230
      %p234 = scmp.lt.s32.totalorder %s14, 1
      %s235 = scalar_select %p234, %s14, 1
      %s236 = smul.addr %s235, 8
      %s237 = scalar_lea.vmem %s3, %s236
      // Predicated region
      $region33: #{_lambda_.18} parent=31 // pred_check
        %p238 = pneg %p100
      $region34: #{_lambda_.18} parent=31 // pred_check_branch
        %240 = sbr.rel (%p238) target = $region36
      $region35: #{_lambda_.18} parent=31 // pred_region
        _
      $region36: #{_lambda_.18} parent=31 // pred_fallthru
        _
    $region32: #{_lambda_.18} parent=5 // pred_fallthru
      _
    %p241 = scmp.le.s32.totalorder 2, %s9
    // Predicated region
    $region37: #{_lambda_.18} parent=5 // pred_check
      %p242 = pneg %p241
    $region38: #{_lambda_.18} parent=5 // pred_check_branch
      %244 = sbr.rel (%p242) target = $region40
    $region39: #{_lambda_.18} parent=5 // pred_region
      %s245 = ssub.s32 %s9, 2
      // Predicated region
      $region41: #{_lambda_.18} parent=39 // pred_check
        %p246 = pneg %p106
      $region42: #{_lambda_.18} parent=39 // pred_check_branch
        %248 = sbr.rel (%p246) target = $region44
      $region43: #{_lambda_.18} parent=39 // pred_region
        %p249 = scmp.lt.s32.totalorder %s15, 1
        %s250 = scalar_select %p249, %s15, 1
        %s251 = smul.addr %s250, 8
        %s252 = scalar_lea.vmem %s3, %s251
      $region44: #{_lambda_.18} parent=39 // pred_fallthru
        _
    $region40: #{_lambda_.18} parent=5 // pred_fallthru
      _
  $region6: #{_lambda_.18} parent=0 // loop_footer
    %s13 = sadd.s32 1, %s9
  $region7: #{_lambda_.18} parent=0 // loop_footer_branch
    %8 = sbr.rel target = $region3
  $region8: #{_lambda_.18} parent=0 // loop_exit
    _

// kernel: _lambda_.22
$region0: #{_lambda_.22}
  #allocation0 [shape = 'u32[]', space=smem, size = 0x4, offset = 0x4, fixed_abs, tag = 'smem constant byte address 0x4 - core index']
  #allocation1 [shape = 'u32[72,128]{1,0:T(1,128)}', space=vmem, size = 0x9000, scoped, tag = 'internal scratch']
  %s0 = inlined_call_operand.vmem [shape: f32[2,8,8], index: 0, kind: input, shape index: {}]
  %s1 = inlined_call_operand.vmem [shape: f32[16,8], index: 1, kind: input, shape index: {}]
  %s2 = inlined_call_operand.vmem [shape: f32[8,16], index: 2, kind: input, shape index: {}]
  %s3 = inlined_call_operand.vmem [shape: f32[2,16,16], index: 3, kind: output, shape index: {}]
  %s4 = sld [smem:[#allocation0]]
  $region45: #{_lambda_.22} parent=0
    _
  %s6 = ssub.s32 1, %s4
  %s7 = scalar_select 0, %s6, %s4
  loop: start=0, step=1, limit=4
  $region2: #{_lambda_.22} parent=0 // loop_pre_header
    _
  $region3: #{_lambda_.22} parent=0 // loop_header
    %s9 = sphi 0, %s13
    %p10 = scmp.ge.s32.totalorder %s9, 4
    %s19 = sphi 0, %s21
    %s22 = sphi 0, %s19
    %s23 = sphi 0, %s22
    %s39 = sphi 0, %s23
    %s43 = sphi 0, %s43
    %s45 = sphi 0, %s43
    %s46 = sphi 0, %s45
    %s60 = sphi 0, %s46
    %s64 = sphi 0, %s64
    %s66 = sphi 0, %s64
    %s67 = sphi 0, %s66
    %s81 = sphi 0, %s67
    %s87 = sphi 0, %s89
    %s90 = sphi 0, %s87
    %s91 = sphi 0, %s90
    %s107 = sphi 0, %s91
  $region4: #{_lambda_.22} parent=0 // loop_header_branch
    %12 = sbr.rel (%p10) target = $region8
  $region5: #{_lambda_.22} parent=0 // loop_body
    %s14 = ssub.s32 %s9, 1
    %s15 = ssub.s32 %s9, 2
    %s16 = sadd.s32 %s9, 1
    %s17 = ssub.s32 %s9, %s16
    %p18 = scmp.eq.s32.totalorder %s17, 0
    %s20 = sadd.s32 %s19, 1
    %s21 = scalar_select %p18, %s19, %s20
    %p24 = pneg %p18
    %p25 = scmp.eq.s32.totalorder %s9, 1
    %p26 = por %p24, %p25
    %p27 = scmp.ne.s32.totalorder %s19, %s22
    %p28 = scmp.eq.s32.totalorder %s9, 0
    %p29 = por %p27, %p28
    %p30 = scmp.ne.s32.totalorder %s19, %s22
    %p31 = scmp.eq.s32.totalorder %s14, 1
    %p32 = por %p30, %p31
    %p33 = scmp.ne.s32.totalorder %s22, %s23
    %p34 = scmp.eq.s32.totalorder %s14, 0
    %p35 = por %p33, %p34
    %p36 = scmp.ne.s32.totalorder %s22, %s23
    %p37 = scmp.eq.s32.totalorder %s15, 1
    %p38 = por %p36, %p37
    %p40 = scmp.ne.s32.totalorder %s23, %s39
    %p41 = scmp.eq.s32.totalorder %s15, 0
    %p42 = por %p40, %p41
    %s44 = sadd.s32 %s43, 1
    %p47 = scmp.eq.s32.totalorder %s9, 1
    %p48 = scmp.ne.s32.totalorder %s43, %s45
    %p49 = scmp.eq.s32.totalorder %s9, 0
    %p50 = por %p48, %p49
    %p51 = scmp.ne.s32.totalorder %s43, %s45
    %p52 = scmp.eq.s32.totalorder %s14, 1
    %p53 = por %p51, %p52
    %p54 = scmp.ne.s32.totalorder %s45, %s46
    %p55 = scmp.eq.s32.totalorder %s14, 0
    %p56 = por %p54, %p55
    %p57 = scmp.ne.s32.totalorder %s45, %s46
    %p58 = scmp.eq.s32.totalorder %s15, 1
    %p59 = por %p57, %p58
    %p61 = scmp.ne.s32.totalorder %s46, %s60
    %p62 = scmp.eq.s32.totalorder %s15, 0
    %p63 = por %p61, %p62
    %s65 = sadd.s32 %s64, 1
    %p68 = scmp.eq.s32.totalorder %s9, 1
    %p69 = scmp.ne.s32.totalorder %s64, %s66
    %p70 = scmp.eq.s32.totalorder %s9, 0
    %p71 = por %p69, %p70
    %p72 = scmp.ne.s32.totalorder %s64, %s66
    %p73 = scmp.eq.s32.totalorder %s14, 1
    %p74 = por %p72, %p73
    %p75 = scmp.ne.s32.totalorder %s66, %s67
    %p76 = scmp.eq.s32.totalorder %s14, 0
    %p77 = por %p75, %p76
    %p78 = scmp.ne.s32.totalorder %s66, %s67
    %p79 = scmp.eq.s32.totalorder %s15, 1
    %p80 = por %p78, %p79
    %p82 = scmp.ne.s32.totalorder %s67, %s81
    %p83 = scmp.eq.s32.totalorder %s15, 0
    %p84 = por %p82, %p83
    %s85 = ssub.s32 %s9, %s16
    %p86 = scmp.eq.s32.totalorder %s85, 0
    %s88 = sadd.s32 %s87, 1
    %s89 = scalar_select %p86, %s87, %s88
    %p92 = pneg %p86
    %p93 = scmp.eq.s32.totalorder %s9, 1
    %p94 = por %p92, %p93
    %p95 = scmp.ne.s32.totalorder %s87, %s90
    %p96 = scmp.eq.s32.totalorder %s9, 0
    %p97 = por %p95, %p96
    %p98 = scmp.ne.s32.totalorder %s87, %s90
    %p99 = scmp.eq.s32.totalorder %s14, 1
    %p100 = por %p98, %p99
    %p101 = scmp.ne.s32.totalorder %s90, %s91
    %p102 = scmp.eq.s32.totalorder %s14, 0
    %p103 = por %p101, %p102
    %p104 = scmp.ne.s32.totalorder %s90, %s91
    %p105 = scmp.eq.s32.totalorder %s15, 1
    %p106 = por %p104, %p105
    %p108 = scmp.ne.s32.totalorder %s91, %s107
    %p109 = scmp.eq.s32.totalorder %s15, 0
    %p110 = por %p108, %p109
    %p111 = scmp.le.s32.totalorder 1, %s9
    %p112 = scmp.lt.s32.totalorder %s9, 3
    %p113 = pnand %p111, %p112
    %p114 = pneg %p113
    // Predicated region
    $region9: #{_lambda_.22} parent=5 // pred_check
      _
    $region10: #{_lambda_.22} parent=5 // pred_check_branch
      %116 = sbr.rel (%p113) target = $region12
    $region11: #{_lambda_.22} parent=5 // pred_region
      %s117 = ssub.s32 %s9, 1
      // Predicated region
      $region13: #{_lambda_.22} parent=11 // pred_check
        %p118 = pneg %p56
      $region14: #{_lambda_.22} parent=11 // pred_check_branch
        %120 = sbr.rel (%p118) target = $region16
      $region15: #{_lambda_.22} parent=11 // pred_region
        _
      $region16: #{_lambda_.22} parent=11 // pred_fallthru
        _
      // Predicated region
      $region17: #{_lambda_.22} parent=11 // pred_check
        %p121 = pneg %p77
      $region18: #{_lambda_.22} parent=11 // pred_check_branch
        %123 = sbr.rel (%p121) target = $region20
      $region19: #{_lambda_.22} parent=11 // pred_region
        _
      $region20: #{_lambda_.22} parent=11 // pred_fallthru
        _
    $region12: #{_lambda_.22} parent=5 // pred_fallthru
      _
    %p124 = scmp.lt.s32.totalorder %s9, 2
    // Predicated region
    $region21: #{_lambda_.22} parent=5 // pred_check
      %p125 = pneg %p124
    $region22: #{_lambda_.22} parent=5 // pred_check_branch
      %127 = sbr.rel (%p125) target = $region24
    $region23: #{_lambda_.22} parent=5 // pred_region
      // Predicated region
      $region25: #{_lambda_.22} parent=23 // pred_check
        %p128 = pneg %p29
      $region26: #{_lambda_.22} parent=23 // pred_check_branch
        %130 = sbr.rel (%p128) target = $region28
      $region27: #{_lambda_.22} parent=23 // pred_region
        %p131 = scmp.lt.s32.totalorder %s9, 1
        %s132 = scalar_select %p131, %s9, 1
        %s133 = smul.addr %s132, 8
        %s134 = scalar_lea.vmem %s0, %s133
      $region28: #{_lambda_.22} parent=23 // pred_fallthru
        _
    $region24: #{_lambda_.22} parent=5 // pred_fallthru
      _
    %p135 = scmp.le.s32.totalorder 1, %s9
    %p136 = scmp.lt.s32.totalorder %s9, 3
    %p137 = pnand %p135, %p136
    %p138 = pneg %p137
    // Predicated region
    $region29: #{_lambda_.22} parent=5 // pred_check
      _
    $region30: #{_lambda_.22} parent=5 // pred_check_branch
      %140 = sbr.rel (%p137) target = $region32
    $region31: #{_lambda_.22} parent=5 // pred_region
      %s141 = ssub.s32 %s9, 1
      %p142 = scmp.lt.s32.totalorder %s14, 1
      %s143 = scalar_select %p142, %s14, 1
      %s144 = smul.addr %s143, 8
      %s145 = scalar_lea.vmem %s0, %s144
      %p146 = pneg %p35
      %p147 = pneg %p32
      %p148 = pneg %p56
      %p149 = pneg %p53
      %p150 = pneg %p77
      %p151 = pneg %p74
      %p152 = pneg %p103
      %p153 = pneg %p100
      %p154 = scmp.lt.s32.totalorder %s14, 1
      %s155 = scalar_select %p154, %s14, 1
      %s156 = smul.addr %s155, 2
      %s157 = smul.addr %s156, 8
      %s158 = scalar_lea.vmem %s3, %s157
      %p159 = scmp.lt.s32.totalorder %s14, 1
      %s160 = scalar_select %p159, %s14, 1
      %s161 = smul.addr %s160, 8
      %s162 = scalar_lea.vmem %s0, %s161
      %p163 = scmp.lt.s32.totalorder %s14, 1
      %s164 = scalar_select %p163, %s14, 1
      %s165 = smul.addr %s164, 2
      %s166 = smul.addr %s165, 8
      %s167 = scalar_lea.vmem %s3, %s166
      %v168 = vld [vmem:[%s1] sm:$0xff]
      %v169 = vld [vmem:[%s1 + $0x8] sm:$0xff]
      %v170 = vld [vmem:[%s162] sm:$0xff]
      %vm171 = vcmask 64512
      %v173 = vsel %vm171, %v168, 0
      %v176 = vsel %vm171, %v169, 0
      %178 = vmatpush.msra.mxu0 0.0
      %179 = vmatpush.msra.mxu0 0.0
      %180 = vmatpush.msra.mxu0 0.0
      %181 = vmatpush.msra.mxu0 0.0
      %182 = vmatpush.msra.mxu0 0.0
      %183 = vmatpush.msra.mxu0 0.0
      %184 = vmatpush.msra.mxu0 0.0
      %185 = vmatpush.msra.mxu0 0.0
      %186 = vmatpush.msra.mxu0 0.0
      %187 = vmatpush.msra.mxu0 0.0
      %188 = vmatpush.msra.mxu0 0.0
      %189 = vmatpush.msra.mxu0 0.0
      %190 = vmatpush.msra.mxu0 0.0
      %191 = vmatpush.msra.mxu0 0.0
      %192 = vmatpush.msra.mxu0 0.0
      %193 = vmatpush.msra.mxu0 %v170
      %194 = vmatmul.f32.gmra.mxu0 %v173
      %v195 = vpop.f32.mrf.mxu0
      %v196 = vadd.f32 0.0, %v195
      %197 = vmatmul.f32.gmra.mxu0 %v176
      %v198 = vpop.f32.mrf.mxu0
      %v199 = vadd.f32 0.0, %v198
      %200 = vdwg.mxu0
      %v201 = vld [vmem:[%s2] sm:$0xff]
      %v203 = vsel %vm171, %v196, 0
      %v206 = vsel %vm171, %v199, 0
      %208 = vmatpush.msra.mxu0 0.0
      %209 = vmatpush.msra.mxu0 0.0
      %210 = vmatpush.msra.mxu0 0.0
      %211 = vmatpush.msra.mxu0 0.0
      %212 = vmatpush.msra.mxu0 0.0
      %213 = vmatpush.msra.mxu0 0.0
      %214 = vmatpush.msra.mxu0 0.0
      %215 = vmatpush.msra.mxu0 0.0
      %216 = vmatpush.msra.mxu0 0.0
      %217 = vmatpush.msra.mxu0 0.0
      %218 = vmatpush.msra.mxu0 0.0
      %219 = vmatpush.msra.mxu0 0.0
      %220 = vmatpush.msra.mxu0 0.0
      %221 = vmatpush.msra.mxu0 0.0
      %222 = vmatpush.msra.mxu0 0.0
      %223 = vmatpush.msra.mxu0 %v201
      %224 = vmatmul.f32.gmra.mxu0 %v203
      %v225 = vpop.f32.mrf.mxu0
      %v226 = vadd.f32 0.0, %v225
      %227 = vmatmul.f32.gmra.mxu0 %v206
      %v228 = vpop.f32.mrf.mxu0
      %v229 = vadd.f32 0.0, %v228
      %230 = vdwg.mxu0
      %vm231 = vcmask 130048
      %232 = vst.msk [vmem:[%s167] sm:$0xff] %vm231, %v226
      %233 = vst.msk [vmem:[%s167 + $0x8] sm:$0xff] %vm231, %v229
      %p234 = scmp.lt.s32.totalorder %s14, 1
      %s235 = scalar_select %p234, %s14, 1
      %s236 = smul.addr %s235, 2
      %s237 = smul.addr %s236, 8
      %s238 = scalar_lea.vmem %s3, %s237
      // Predicated region
      $region33: #{_lambda_.22} parent=31 // pred_check
        %p239 = pneg %p100
      $region34: #{_lambda_.22} parent=31 // pred_check_branch
        %241 = sbr.rel (%p239) target = $region36
      $region35: #{_lambda_.22} parent=31 // pred_region
        _
      $region36: #{_lambda_.22} parent=31 // pred_fallthru
        _
    $region32: #{_lambda_.22} parent=5 // pred_fallthru
      _
    %p242 = scmp.le.s32.totalorder 2, %s9
    // Predicated region
    $region37: #{_lambda_.22} parent=5 // pred_check
      %p243 = pneg %p242
    $region38: #{_lambda_.22} parent=5 // pred_check_branch
      %245 = sbr.rel (%p243) target = $region40
    $region39: #{_lambda_.22} parent=5 // pred_region
      %s246 = ssub.s32 %s9, 2
      // Predicated region
      $region41: #{_lambda_.22} parent=39 // pred_check
        %p247 = pneg %p106
      $region42: #{_lambda_.22} parent=39 // pred_check_branch
        %249 = sbr.rel (%p247) target = $region44
      $region43: #{_lambda_.22} parent=39 // pred_region
        %p250 = scmp.lt.s32.totalorder %s15, 1
        %s251 = scalar_select %p250, %s15, 1
        %s252 = smul.addr %s251, 2
        %s253 = smul.addr %s252, 8
        %s254 = scalar_lea.vmem %s3, %s253
      $region44: #{_lambda_.22} parent=39 // pred_fallthru
        _
    $region40: #{_lambda_.22} parent=5 // pred_fallthru
      _
  $region6: #{_lambda_.22} parent=0 // loop_footer
    %s13 = sadd.s32 1, %s9
  $region7: #{_lambda_.22} parent=0 // loop_footer_branch
    %8 = sbr.rel target = $region3
  $region8: #{_lambda_.22} parent=0 // loop_exit
    _

// kernel: _lambda_.21
$region0: #{_lambda_.21}
  #allocation0 [shape = 'u32[]', space=smem, size = 0x4, offset = 0x4, fixed_abs, tag = 'smem constant byte address 0x4 - core index']
  #allocation1 [shape = 'u32[72,128]{1,0:T(1,128)}', space=vmem, size = 0x9000, scoped, tag = 'internal scratch']
  %s0 = inlined_call_operand.vmem [shape: f32[2,8,64], index: 0, kind: input, shape index: {}]
  %s1 = inlined_call_operand.vmem [shape: f32[16,8], index: 1, kind: input, shape index: {}]
  %s2 = inlined_call_operand.vmem [shape: f32[64,128], index: 2, kind: input, shape index: {}]
  %s3 = inlined_call_operand.vmem [shape: f32[2,16,128], index: 3, kind: output, shape index: {}]
  %s4 = sld [smem:[#allocation0]]
  $region45: #{_lambda_.21} parent=0
    _
  %s6 = ssub.s32 1, %s4
  %s7 = scalar_select 0, %s6, %s4
  loop: start=0, step=1, limit=4
  $region2: #{_lambda_.21} parent=0 // loop_pre_header
    _
  $region3: #{_lambda_.21} parent=0 // loop_header
    %s9 = sphi 0, %s13
    %p10 = scmp.ge.s32.totalorder %s9, 4
    %s19 = sphi 0, %s21
    %s22 = sphi 0, %s19
    %s23 = sphi 0, %s22
    %s39 = sphi 0, %s23
    %s43 = sphi 0, %s43
    %s45 = sphi 0, %s43
    %s46 = sphi 0, %s45
    %s60 = sphi 0, %s46
    %s64 = sphi 0, %s64
    %s66 = sphi 0, %s64
    %s67 = sphi 0, %s66
    %s81 = sphi 0, %s67
    %s87 = sphi 0, %s89
    %s90 = sphi 0, %s87
    %s91 = sphi 0, %s90
    %s107 = sphi 0, %s91
  $region4: #{_lambda_.21} parent=0 // loop_header_branch
    %12 = sbr.rel (%p10) target = $region8
  $region5: #{_lambda_.21} parent=0 // loop_body
    %s14 = ssub.s32 %s9, 1
    %s15 = ssub.s32 %s9, 2
    %s16 = sadd.s32 %s9, 1
    %s17 = ssub.s32 %s9, %s16
    %p18 = scmp.eq.s32.totalorder %s17, 0
    %s20 = sadd.s32 %s19, 1
    %s21 = scalar_select %p18, %s19, %s20
    %p24 = pneg %p18
    %p25 = scmp.eq.s32.totalorder %s9, 1
    %p26 = por %p24, %p25
    %p27 = scmp.ne.s32.totalorder %s19, %s22
    %p28 = scmp.eq.s32.totalorder %s9, 0
    %p29 = por %p27, %p28
    %p30 = scmp.ne.s32.totalorder %s19, %s22
    %p31 = scmp.eq.s32.totalorder %s14, 1
    %p32 = por %p30, %p31
    %p33 = scmp.ne.s32.totalorder %s22, %s23
    %p34 = scmp.eq.s32.totalorder %s14, 0
    %p35 = por %p33, %p34
    %p36 = scmp.ne.s32.totalorder %s22, %s23
    %p37 = scmp.eq.s32.totalorder %s15, 1
    %p38 = por %p36, %p37
    %p40 = scmp.ne.s32.totalorder %s23, %s39
    %p41 = scmp.eq.s32.totalorder %s15, 0
    %p42 = por %p40, %p41
    %s44 = sadd.s32 %s43, 1
    %p47 = scmp.eq.s32.totalorder %s9, 1
    %p48 = scmp.ne.s32.totalorder %s43, %s45
    %p49 = scmp.eq.s32.totalorder %s9, 0
    %p50 = por %p48, %p49
    %p51 = scmp.ne.s32.totalorder %s43, %s45
    %p52 = scmp.eq.s32.totalorder %s14, 1
    %p53 = por %p51, %p52
    %p54 = scmp.ne.s32.totalorder %s45, %s46
    %p55 = scmp.eq.s32.totalorder %s14, 0
    %p56 = por %p54, %p55
    %p57 = scmp.ne.s32.totalorder %s45, %s46
    %p58 = scmp.eq.s32.totalorder %s15, 1
    %p59 = por %p57, %p58
    %p61 = scmp.ne.s32.totalorder %s46, %s60
    %p62 = scmp.eq.s32.totalorder %s15, 0
    %p63 = por %p61, %p62
    %s65 = sadd.s32 %s64, 1
    %p68 = scmp.eq.s32.totalorder %s9, 1
    %p69 = scmp.ne.s32.totalorder %s64, %s66
    %p70 = scmp.eq.s32.totalorder %s9, 0
    %p71 = por %p69, %p70
    %p72 = scmp.ne.s32.totalorder %s64, %s66
    %p73 = scmp.eq.s32.totalorder %s14, 1
    %p74 = por %p72, %p73
    %p75 = scmp.ne.s32.totalorder %s66, %s67
    %p76 = scmp.eq.s32.totalorder %s14, 0
    %p77 = por %p75, %p76
    %p78 = scmp.ne.s32.totalorder %s66, %s67
    %p79 = scmp.eq.s32.totalorder %s15, 1
    %p80 = por %p78, %p79
    %p82 = scmp.ne.s32.totalorder %s67, %s81
    %p83 = scmp.eq.s32.totalorder %s15, 0
    %p84 = por %p82, %p83
    %s85 = ssub.s32 %s9, %s16
    %p86 = scmp.eq.s32.totalorder %s85, 0
    %s88 = sadd.s32 %s87, 1
    %s89 = scalar_select %p86, %s87, %s88
    %p92 = pneg %p86
    %p93 = scmp.eq.s32.totalorder %s9, 1
    %p94 = por %p92, %p93
    %p95 = scmp.ne.s32.totalorder %s87, %s90
    %p96 = scmp.eq.s32.totalorder %s9, 0
    %p97 = por %p95, %p96
    %p98 = scmp.ne.s32.totalorder %s87, %s90
    %p99 = scmp.eq.s32.totalorder %s14, 1
    %p100 = por %p98, %p99
    %p101 = scmp.ne.s32.totalorder %s90, %s91
    %p102 = scmp.eq.s32.totalorder %s14, 0
    %p103 = por %p101, %p102
    %p104 = scmp.ne.s32.totalorder %s90, %s91
    %p105 = scmp.eq.s32.totalorder %s15, 1
    %p106 = por %p104, %p105
    %p108 = scmp.ne.s32.totalorder %s91, %s107
    %p109 = scmp.eq.s32.totalorder %s15, 0
    %p110 = por %p108, %p109
    %p111 = scmp.le.s32.totalorder 1, %s9
    %p112 = scmp.lt.s32.totalorder %s9, 3
    %p113 = pnand %p111, %p112
    %p114 = pneg %p113
    // Predicated region
    $region9: #{_lambda_.21} parent=5 // pred_check
      _
    $region10: #{_lambda_.21} parent=5 // pred_check_branch
      %116 = sbr.rel (%p113) target = $region12
    $region11: #{_lambda_.21} parent=5 // pred_region
      %s117 = ssub.s32 %s9, 1
      // Predicated region
      $region13: #{_lambda_.21} parent=11 // pred_check
        %p118 = pneg %p56
      $region14: #{_lambda_.21} parent=11 // pred_check_branch
        %120 = sbr.rel (%p118) target = $region16
      $region15: #{_lambda_.21} parent=11 // pred_region
        _
      $region16: #{_lambda_.21} parent=11 // pred_fallthru
        _
      // Predicated region
      $region17: #{_lambda_.21} parent=11 // pred_check
        %p121 = pneg %p77
      $region18: #{_lambda_.21} parent=11 // pred_check_branch
        %123 = sbr.rel (%p121) target = $region20
      $region19: #{_lambda_.21} parent=11 // pred_region
        _
      $region20: #{_lambda_.21} parent=11 // pred_fallthru
        _
    $region12: #{_lambda_.21} parent=5 // pred_fallthru
      _
    %p124 = scmp.lt.s32.totalorder %s9, 2
    // Predicated region
    $region21: #{_lambda_.21} parent=5 // pred_check
      %p125 = pneg %p124
    $region22: #{_lambda_.21} parent=5 // pred_check_branch
      %127 = sbr.rel (%p125) target = $region24
    $region23: #{_lambda_.21} parent=5 // pred_region
      // Predicated region
      $region25: #{_lambda_.21} parent=23 // pred_check
        %p128 = pneg %p29
      $region26: #{_lambda_.21} parent=23 // pred_check_branch
        %130 = sbr.rel (%p128) target = $region28
      $region27: #{_lambda_.21} parent=23 // pred_region
        %p131 = scmp.lt.s32.totalorder %s9, 1
        %s132 = scalar_select %p131, %s9, 1
        %s133 = smul.addr %s132, 8
        %s134 = scalar_lea.vmem %s0, %s133
      $region28: #{_lambda_.21} parent=23 // pred_fallthru
        _
    $region24: #{_lambda_.21} parent=5 // pred_fallthru
      _
    %p135 = scmp.le.s32.totalorder 1, %s9
    %p136 = scmp.lt.s32.totalorder %s9, 3
    %p137 = pnand %p135, %p136
    %p138 = pneg %p137
    // Predicated region
    $region29: #{_lambda_.21} parent=5 // pred_check
      _
    $region30: #{_lambda_.21} parent=5 // pred_check_branch
      %140 = sbr.rel (%p137) target = $region32
    $region31: #{_lambda_.21} parent=5 // pred_region
      %s141 = ssub.s32 %s9, 1
      %p142 = scmp.lt.s32.totalorder %s14, 1
      %s143 = scalar_select %p142, %s14, 1
      %s144 = smul.addr %s143, 8
      %s145 = scalar_lea.vmem %s0, %s144
      %p146 = pneg %p35
      %p147 = pneg %p32
      %p148 = pneg %p56
      %p149 = pneg %p53
      %p150 = pneg %p77
      %p151 = pneg %p74
      %p152 = pneg %p103
      %p153 = pneg %p100
      %p154 = scmp.lt.s32.totalorder %s14, 1
      %s155 = scalar_select %p154, %s14, 1
      %s156 = smul.addr %s155, 2
      %s157 = smul.addr %s156, 8
      %s158 = scalar_lea.vmem %s3, %s157
      %p159 = scmp.lt.s32.totalorder %s14, 1
      %s160 = scalar_select %p159, %s14, 1
      %s161 = smul.addr %s160, 8
      %s162 = scalar_lea.vmem %s0, %s161
      %p163 = scmp.lt.s32.totalorder %s14, 1
      %s164 = scalar_select %p163, %s14, 1
      %s165 = smul.addr %s164, 2
      %s166 = smul.addr %s165, 8
      %s167 = scalar_lea.vmem %s3, %s166
      %v168 = vld [vmem:[%s1] sm:$0xff]
      %v169 = vld [vmem:[%s1 + $0x8] sm:$0xff]
      %v170 = vld [vmem:[%s162] sm:$0xff]
      %vm171 = vcmask 64512
      %v173 = vsel %vm171, %v168, 0
      %v176 = vsel %vm171, %v169, 0
      %178 = vmatpush.msra.mxu0 0.0
      %179 = vmatpush.msra.mxu0 0.0
      %180 = vmatpush.msra.mxu0 0.0
      %181 = vmatpush.msra.mxu0 0.0
      %182 = vmatpush.msra.mxu0 0.0
      %183 = vmatpush.msra.mxu0 0.0
      %184 = vmatpush.msra.mxu0 0.0
      %185 = vmatpush.msra.mxu0 0.0
      %186 = vmatpush.msra.mxu0 0.0
      %187 = vmatpush.msra.mxu0 0.0
      %188 = vmatpush.msra.mxu0 0.0
      %189 = vmatpush.msra.mxu0 0.0
      %190 = vmatpush.msra.mxu0 0.0
      %191 = vmatpush.msra.mxu0 0.0
      %192 = vmatpush.msra.mxu0 0.0
      %193 = vmatpush.msra.mxu0 %v170
      %194 = vmatmul.f32.gmra.mxu0 %v173
      %v195 = vpop.f32.mrf.mxu0
      %v196 = vadd.f32 0.0, %v195
      %197 = vmatmul.f32.gmra.mxu0 %v176
      %v198 = vpop.f32.mrf.mxu0
      %v199 = vadd.f32 0.0, %v198
      %200 = vdwg.mxu0
      %v201 = vld [vmem:[%s2] sm:$0xff]
      %v202 = vld [vmem:[%s2 + $0x8] sm:$0xff]
      %v203 = vld [vmem:[%s2 + $0x10] sm:$0xff]
      %v204 = vld [vmem:[%s2 + $0x18] sm:$0xff]
      %v205 = vld [vmem:[%s2 + $0x20] sm:$0xff]
      %v206 = vld [vmem:[%s2 + $0x28] sm:$0xff]
      %v207 = vld [vmem:[%s2 + $0x30] sm:$0xff]
      %v208 = vld [vmem:[%s2 + $0x38] sm:$0xff]
      %vm209 = vcmask 523264
      %v211 = vsel %vm209, %v196, 0
      %v214 = vsel %vm209, %v199, 0
      %216 = vmatpush.msra.mxu0 0.0
      %217 = vmatpush.msra.mxu0 0.0
      %218 = vmatpush.msra.mxu0 0.0
      %219 = vmatpush.msra.mxu0 0.0
      %220 = vmatpush.msra.mxu0 0.0
      %221 = vmatpush.msra.mxu0 0.0
      %222 = vmatpush.msra.mxu0 0.0
      %223 = vmatpush.msra.mxu0 0.0
      %224 = vmatpush.msra.mxu0 %v208
      %225 = vmatpush.msra.mxu0 %v207
      %226 = vmatpush.msra.mxu0 %v206
      %227 = vmatpush.msra.mxu0 %v205
      %228 = vmatpush.msra.mxu0 %v204
      %229 = vmatpush.msra.mxu0 %v203
      %230 = vmatpush.msra.mxu0 %v202
      %231 = vmatpush.msra.mxu0 %v201
      %232 = vmatmul.f32.gmra.mxu0 %v211
      %v233 = vpop.f32.mrf.mxu0
      %v234 = vadd.f32 0.0, %v233
      %235 = vmatmul.f32.gmra.mxu0 %v214
      %v236 = vpop.f32.mrf.mxu0
      %v237 = vadd.f32 0.0, %v236
      %238 = vdwg.mxu0
      %239 = vst [vmem:[%s167] sm:$0xff] %v234
      %240 = vst [vmem:[%s167 + $0x8] sm:$0xff] %v237
      %p241 = scmp.lt.s32.totalorder %s14, 1
      %s242 = scalar_select %p241, %s14, 1
      %s243 = smul.addr %s242, 2
      %s244 = smul.addr %s243, 8
      %s245 = scalar_lea.vmem %s3, %s244
      // Predicated region
      $region33: #{_lambda_.21} parent=31 // pred_check
        %p246 = pneg %p100
      $region34: #{_lambda_.21} parent=31 // pred_check_branch
        %248 = sbr.rel (%p246) target = $region36
      $region35: #{_lambda_.21} parent=31 // pred_region
        _
      $region36: #{_lambda_.21} parent=31 // pred_fallthru
        _
    $region32: #{_lambda_.21} parent=5 // pred_fallthru
      _
    %p249 = scmp.le.s32.totalorder 2, %s9
    // Predicated region
    $region37: #{_lambda_.21} parent=5 // pred_check
      %p250 = pneg %p249
    $region38: #{_lambda_.21} parent=5 // pred_check_branch
      %252 = sbr.rel (%p250) target = $region40
    $region39: #{_lambda_.21} parent=5 // pred_region
      %s253 = ssub.s32 %s9, 2
      // Predicated region
      $region41: #{_lambda_.21} parent=39 // pred_check
        %p254 = pneg %p106
      $region42: #{_lambda_.21} parent=39 // pred_check_branch
        %256 = sbr.rel (%p254) target = $region44
      $region43: #{_lambda_.21} parent=39 // pred_region
        %p257 = scmp.lt.s32.totalorder %s15, 1
        %s258 = scalar_select %p257, %s15, 1
        %s259 = smul.addr %s258, 2
        %s260 = smul.addr %s259, 8
        %s261 = scalar_lea.vmem %s3, %s260
      $region44: #{_lambda_.21} parent=39 // pred_fallthru
        _
    $region40: #{_lambda_.21} parent=5 // pred_fallthru
      _
  $region6: #{_lambda_.21} parent=0 // loop_footer
    %s13 = sadd.s32 1, %s9
  $region7: #{_lambda_.21} parent=0 // loop_footer_branch
    %8 = sbr.rel target = $region3
  $region8: #{_lambda_.21} parent=0 // loop_exit
    _

// kernel: _lambda_.19
$region0: #{_lambda_.19}
  #allocation0 [shape = 'u32[]', space=smem, size = 0x4, offset = 0x4, fixed_abs, tag = 'smem constant byte address 0x4 - core index']
  #allocation1 [shape = 'u32[72,128]{1,0:T(1,128)}', space=vmem, size = 0x9000, scoped, tag = 'internal scratch']
  %s0 = inlined_call_operand.vmem [shape: f32[2,10,80], index: 0, kind: input, shape index: {}]
  %s1 = inlined_call_operand.vmem [shape: f32[2,10,80], index: 1, kind: input, shape index: {}]
  %s2 = inlined_call_operand.vmem [shape: f32[8,64], index: 2, kind: input, shape index: {}]
  %s3 = inlined_call_operand.vmem [shape: f32[2,8,64], index: 3, kind: output, shape index: {0}]
  %s4 = inlined_call_operand.vmem [shape: f32[2,8,64], index: 4, kind: output, shape index: {1}]
  %5 = xla_tuple %s3, %s4
  %s6 = sld [smem:[#allocation0]]
  $region30: #{_lambda_.19} parent=0
    _
  %s8 = ssub.s32 1, %s6
  %s9 = scalar_select 0, %s8, %s6
  // Predicated region
  $region2: #{_lambda_.19} parent=0 // pred_check
    _
  $region3: #{_lambda_.19} parent=0 // pred_check_branch
    %11 = sbr.rel (0) target = $region5
  $region4: #{_lambda_.19} parent=0 // pred_region
    _
  $region5: #{_lambda_.19} parent=0 // pred_fallthru
    _
  // Predicated region
  $region6: #{_lambda_.19} parent=0 // pred_check
    _
  $region7: #{_lambda_.19} parent=0 // pred_check_branch
    %13 = sbr.rel (0) target = $region9
  $region8: #{_lambda_.19} parent=0 // pred_region
    _
  $region9: #{_lambda_.19} parent=0 // pred_fallthru
    _
  // Predicated region
  $region10: #{_lambda_.19} parent=0 // pred_check
    _
  $region11: #{_lambda_.19} parent=0 // pred_check_branch
    %15 = sbr.rel (0) target = $region13
  $region12: #{_lambda_.19} parent=0 // pred_region
    _
  $region13: #{_lambda_.19} parent=0 // pred_fallthru
    _
  %v16 = vld [vmem:[%s0] sm:$0xff]
  %v17 = vld [vmem:[%s0 + $0x10] sm:$0xff]
  %v18 = vld [vmem:[%s1] sm:$0xff]
  %v19 = vld [vmem:[%s1 + $0x10] sm:$0xff]
  %v20 = vmul.f32 %v16, %v16
  %v21 = vmul.f32 %v17, %v17
  %v22 = vmul.f32 %v16, %v18
  %v23 = vmul.f32 %v17, %v19
  %v24 = vld [vmem:[%s0 + $0x1] sm:$0xff]
  %v25 = vld [vmem:[%s0 + $0x11] sm:$0xff]
  %v26 = vld [vmem:[%s1 + $0x1] sm:$0xff]
  %v27 = vld [vmem:[%s1 + $0x11] sm:$0xff]
  %v28 = vadd.f32 %v16, %v24
  %v29 = vadd.f32 %v17, %v25
  %v30 = vadd.f32 %v18, %v26
  %v31 = vadd.f32 %v19, %v27
  %v32 = vmul.f32 %v24, %v24
  %v33 = vmul.f32 %v25, %v25
  %v34 = vadd.f32 %v20, %v32
  %v35 = vadd.f32 %v21, %v33
  %v36 = vmul.f32 %v24, %v26
  %v37 = vmul.f32 %v25, %v27
  %v38 = vadd.f32 %v22, %v36
  %v39 = vadd.f32 %v23, %v37
  %v40 = vld [vmem:[%s0 + $0x2] sm:$0xff]
  %v41 = vld [vmem:[%s0 + $0x12] sm:$0xff]
  %v42 = vld [vmem:[%s1 + $0x2] sm:$0xff]
  %v43 = vld [vmem:[%s1 + $0x12] sm:$0xff]
  %v44 = vadd.f32 %v28, %v40
  %v45 = vadd.f32 %v29, %v41
  %v46 = vadd.f32 %v30, %v42
  %v47 = vadd.f32 %v31, %v43
  %v48 = vmul.f32 %v40, %v40
  %v49 = vmul.f32 %v41, %v41
  %v50 = vadd.f32 %v34, %v48
  %v51 = vadd.f32 %v35, %v49
  %v52 = vmul.f32 %v40, %v42
  %v53 = vmul.f32 %v41, %v43
  %v54 = vadd.f32 %v38, %v52
  %v55 = vadd.f32 %v39, %v53
  %58 = vrot.lane.b32.xlu0 %v44, 120
  %v59 = vpop.permute.xlu0 %58
  %60 = vrot.lane.b32.xlu0 %v45, 120
  %v61 = vpop.permute.xlu0 %60
  %v64 = vadd.f32 %v44, %v59
  %v65 = vadd.f32 %v45, %v61
  %68 = vrot.lane.b32.xlu0 %v46, 120
  %v69 = vpop.permute.xlu0 %68
  %70 = vrot.lane.b32.xlu0 %v47, 120
  %v71 = vpop.permute.xlu0 %70
  %v74 = vadd.f32 %v46, %v69
  %v75 = vadd.f32 %v47, %v71
  %78 = vrot.lane.b32.xlu0 %v50, 120
  %v79 = vpop.permute.xlu0 %78
  %80 = vrot.lane.b32.xlu0 %v51, 120
  %v81 = vpop.permute.xlu0 %80
  %v84 = vadd.f32 %v50, %v79
  %v85 = vadd.f32 %v51, %v81
  %88 = vrot.lane.b32.xlu0 %v54, 120
  %v89 = vpop.permute.xlu0 %88
  %90 = vrot.lane.b32.xlu0 %v55, 120
  %v91 = vpop.permute.xlu0 %90
  %v94 = vadd.f32 %v54, %v89
  %v95 = vadd.f32 %v55, %v91
  %96 = vrot.lane.b32.xlu0 %v44, 112
  %v97 = vpop.permute.xlu0 %96
  %98 = vrot.lane.b32.xlu0 %v45, 112
  %v99 = vpop.permute.xlu0 %98
  %v102 = vadd.f32 %v64, %v97
  %v103 = vadd.f32 %v65, %v99
  %104 = vrot.lane.b32.xlu0 %v46, 112
  %v105 = vpop.permute.xlu0 %104
  %106 = vrot.lane.b32.xlu0 %v47, 112
  %v107 = vpop.permute.xlu0 %106
  %v110 = vadd.f32 %v74, %v105
  %v111 = vadd.f32 %v75, %v107
  %112 = vrot.lane.b32.xlu0 %v50, 112
  %v113 = vpop.permute.xlu0 %112
  %114 = vrot.lane.b32.xlu0 %v51, 112
  %v115 = vpop.permute.xlu0 %114
  %v118 = vadd.f32 %v84, %v113
  %v119 = vadd.f32 %v85, %v115
  %120 = vrot.lane.b32.xlu0 %v54, 112
  %v121 = vpop.permute.xlu0 %120
  %122 = vrot.lane.b32.xlu0 %v55, 112
  %v123 = vpop.permute.xlu0 %122
  %v126 = vadd.f32 %v94, %v121
  %v127 = vadd.f32 %v95, %v123
  %v128 = vld [vmem:[%s2] sm:$0xff]
  %v129 = vmul.f32 %v102, %v128
  %v130 = vmul.f32 %v103, %v128
  %v131 = vmul.f32 %v110, %v128
  %v132 = vmul.f32 %v111, %v128
  %v133 = vmul.f32 %v118, %v128
  %v134 = vmul.f32 %v119, %v128
  %v135 = vmul.f32 %v129, %v129
  %v136 = vmul.f32 %v130, %v130
  %v137 = vsub.f32 %v133, %v135
  %v138 = vsub.f32 %v134, %v136
  %v139 = vmul.f32 %v126, %v128
  %v140 = vmul.f32 %v127, %v128
  %v141 = vmul.f32 %v129, %v131
  %v142 = vmul.f32 %v130, %v132
  %v143 = vsub.f32 %v139, %v141
  %v144 = vsub.f32 %v140, %v142
  %v145 = vadd.f32 %v137, 0.0001
  %v146 = vadd.f32 %v138, 0.0001
  %v147 = vrcp.pop %v145
  %v148 = vmul.f32 %v145, %v147
  %v149 = vsub.f32 1.0, %v148
  %v150 = vmul.f32 %v147, %v149
  %v151 = vadd.f32 %v147, %v150
  %vm152 = vweird.f32 %v145
  %vm153 = vweird.f32 %v147
  %vm154 = vmor %vm152, %vm153
  %v155 = vsel %vm154, %v147, %v151
  %v156 = vand.u32 2147483647, %v145
  %vm157 = vcmp.eq.f32.partialorder %v156, 8.507059e+37
  %v158 = vand.u32 %v145, 2147483648
  %v159 = vor.u32 1.1754944e-38, %v158
  %v160 = vsel %vm157, %v159, %v155
  %v161 = vmul.f32 %v143, %v160
  %v162 = vrcp.pop %v146
  %v163 = vmul.f32 %v146, %v162
  %v164 = vsub.f32 1.0, %v163
  %v165 = vmul.f32 %v162, %v164
  %v166 = vadd.f32 %v162, %v165
  %vm167 = vweird.f32 %v146
  %vm168 = vweird.f32 %v162
  %vm169 = vmor %vm167, %vm168
  %v170 = vsel %vm169, %v162, %v166
  %v171 = vand.u32 2147483647, %v146
  %vm172 = vcmp.eq.f32.partialorder %v171, 8.507059e+37
  %v173 = vand.u32 %v146, 2147483648
  %v174 = vor.u32 1.1754944e-38, %v173
  %v175 = vsel %vm172, %v174, %v170
  %v176 = vmul.f32 %v144, %v175
  %vm177 = vcmask 523264
  %178 = vst.msk [vmem:[%s3] sm:$0xff] %vm177, %v161
  %179 = vst.msk [vmem:[%s3 + $0x8] sm:$0xff] %vm177, %v176
  %v180 = vmul.f32 %v161, %v129
  %v181 = vmul.f32 %v176, %v130
  %v182 = vsub.f32 %v131, %v180
  %v183 = vsub.f32 %v132, %v181
  %184 = vst.msk [vmem:[%s4] sm:$0xff] %vm177, %v182
  %185 = vst.msk [vmem:[%s4 + $0x8] sm:$0xff] %vm177, %v183
  // Predicated region
  $region14: #{_lambda_.19} parent=0 // pred_check
    _
  $region15: #{_lambda_.19} parent=0 // pred_check_branch
    %187 = sbr.rel (0) target = $region17
  $region16: #{_lambda_.19} parent=0 // pred_region
    _
  $region17: #{_lambda_.19} parent=0 // pred_fallthru
    _
  // Predicated region
  $region18: #{_lambda_.19} parent=0 // pred_check
    _
  $region19: #{_lambda_.19} parent=0 // pred_check_branch
    %189 = sbr.rel (0) target = $region21
  $region20: #{_lambda_.19} parent=0 // pred_region
    _
  $region21: #{_lambda_.19} parent=0 // pred_fallthru
    _
  // Predicated region
  $region22: #{_lambda_.19} parent=0 // pred_check
    _
  $region23: #{_lambda_.19} parent=0 // pred_check_branch
    %191 = sbr.rel (0) target = $region25
  $region24: #{_lambda_.19} parent=0 // pred_region
    _
  $region25: #{_lambda_.19} parent=0 // pred_fallthru
    _
  // Predicated region
  $region26: #{_lambda_.19} parent=0 // pred_check
    _
  $region27: #{_lambda_.19} parent=0 // pred_check_branch
    %193 = sbr.rel (0) target = $region29
  $region28: #{_lambda_.19} parent=0 // pred_region
    _
  $region29: #{_lambda_.19} parent=0 // pred_fallthru
    _

// kernel: _lambda_.23
$region0: #{_lambda_.23}
  #allocation0 [shape = 'u32[]', space=smem, size = 0x4, offset = 0x4, fixed_abs, tag = 'smem constant byte address 0x4 - core index']
  #allocation1 [shape = 'u32[72,128]{1,0:T(1,128)}', space=vmem, size = 0x9000, scoped, tag = 'internal scratch']
  %s0 = inlined_call_operand.vmem [shape: bf16[1,18,288], index: 0, kind: input, shape index: {}]
  %s1 = inlined_call_operand.vmem [shape: bf16[1,18,288], index: 1, kind: input, shape index: {}]
  %s2 = inlined_call_operand.vmem [shape: bf16[1,18,288], index: 2, kind: input, shape index: {}]
  %s3 = inlined_call_operand.vmem [shape: bf16[3,288,32], index: 3, kind: input, shape index: {}]
  %s4 = inlined_call_operand.vmem [shape: f32[1,16,32], index: 4, kind: input, shape index: {}]
  %s5 = inlined_call_operand.vmem [shape: f32[1,16,32], index: 5, kind: output, shape index: {}]
  %s6 = sld [smem:[#allocation0]]
  $region30: #{_lambda_.23} parent=0
    _
  %s8 = ssub.s32 1, %s6
  %s9 = scalar_select 0, %s8, %s6
  // Predicated region
  $region2: #{_lambda_.23} parent=0 // pred_check
    _
  $region3: #{_lambda_.23} parent=0 // pred_check_branch
    %11 = sbr.rel (0) target = $region5
  $region4: #{_lambda_.23} parent=0 // pred_region
    _
  $region5: #{_lambda_.23} parent=0 // pred_fallthru
    _
  // Predicated region
  $region6: #{_lambda_.23} parent=0 // pred_check
    _
  $region7: #{_lambda_.23} parent=0 // pred_check_branch
    %13 = sbr.rel (0) target = $region9
  $region8: #{_lambda_.23} parent=0 // pred_region
    _
  $region9: #{_lambda_.23} parent=0 // pred_fallthru
    _
  // Predicated region
  $region10: #{_lambda_.23} parent=0 // pred_check
    _
  $region11: #{_lambda_.23} parent=0 // pred_check_branch
    %15 = sbr.rel (0) target = $region13
  $region12: #{_lambda_.23} parent=0 // pred_region
    _
  $region13: #{_lambda_.23} parent=0 // pred_fallthru
    _
  // Predicated region
  $region14: #{_lambda_.23} parent=0 // pred_check
    _
  $region15: #{_lambda_.23} parent=0 // pred_check_branch
    %17 = sbr.rel (0) target = $region17
  $region16: #{_lambda_.23} parent=0 // pred_region
    _
  $region17: #{_lambda_.23} parent=0 // pred_fallthru
    _
  // Predicated region
  $region18: #{_lambda_.23} parent=0 // pred_check
    _
  $region19: #{_lambda_.23} parent=0 // pred_check_branch
    %19 = sbr.rel (0) target = $region21
  $region20: #{_lambda_.23} parent=0 // pred_region
    _
  $region21: #{_lambda_.23} parent=0 // pred_fallthru
    _
  %v21 = vld [vmem:[%s4] sm:$0xff]
  %v22 = vld [vmem:[%s4 + $0x8] sm:$0xff]
  %v23 = vld [vmem:[%s0] sm:$0xff]
  %v24 = vld [vmem:[%s0 + $0x8] sm:$0xf]
  %v25 = vld [vmem:[%s0 + $0xc] sm:$0xff]
  %v26 = vld [vmem:[%s0 + $0x14] sm:$0xf]
  %v27 = vld [vmem:[%s1] sm:$0xff]
  %v28 = vld [vmem:[%s1 + $0x8] sm:$0xf]
  %v29 = vld [vmem:[%s1 + $0xc] sm:$0xff]
  %v30 = vld [vmem:[%s1 + $0x14] sm:$0xf]
  %v31 = vunpack.c.l.bf16 %v23
  %v32 = vunpack.c.h.bf16 %v23
  %v33 = vunpack.c.l.bf16 %v24
  %v34 = vunpack.c.l.bf16 %v25
  %v35 = vunpack.c.h.bf16 %v25
  %v36 = vunpack.c.l.bf16 %v26
  %v37 = vunpack.c.l.bf16 %v27
  %v38 = vunpack.c.h.bf16 %v27
  %v39 = vunpack.c.l.bf16 %v28
  %v40 = vunpack.c.l.bf16 %v29
  %v41 = vunpack.c.h.bf16 %v29
  %v42 = vunpack.c.l.bf16 %v30
  %v43 = vmul.f32 %v31, %v37
  %v44 = vmul.f32 %v32, %v38
  %v45 = vmul.f32 %v33, %v39
  %v46 = vmul.f32 %v34, %v40
  %v47 = vmul.f32 %v35, %v41
  %v48 = vmul.f32 %v36, %v42
  %v49 = vpack.c.bf16 %v44, %v43
  %v50 = vpack.c.bf16 %v45, %v45
  %v51 = vpack.c.bf16 %v47, %v46
  %v52 = vpack.c.bf16 %v48, %v48
  %v53 = vld [vmem:[%s2] sm:$0xff]
  %v54 = vld [vmem:[%s2 + $0x8] sm:$0xf]
  %v55 = vld [vmem:[%s2 + $0xc] sm:$0xff]
  %v56 = vld [vmem:[%s2 + $0x14] sm:$0xf]
  %v57 = vunpack.c.l.bf16 %v49
  %v58 = vunpack.c.h.bf16 %v49
  %v59 = vunpack.c.l.bf16 %v50
  %v60 = vunpack.c.l.bf16 %v51
  %v61 = vunpack.c.h.bf16 %v51
  %v62 = vunpack.c.l.bf16 %v52
  %v63 = vunpack.c.l.bf16 %v53
  %v64 = vunpack.c.h.bf16 %v53
  %v65 = vunpack.c.l.bf16 %v54
  %v66 = vunpack.c.l.bf16 %v55
  %v67 = vunpack.c.h.bf16 %v55
  %v68 = vunpack.c.l.bf16 %v56
  %v69 = vadd.f32 %v57, %v63
  %v70 = vadd.f32 %v58, %v64
  %v71 = vadd.f32 %v59, %v65
  %v72 = vadd.f32 %v60, %v66
  %v73 = vadd.f32 %v61, %v67
  %v74 = vadd.f32 %v62, %v68
  %v75 = vpack.c.bf16 %v72, %v69
  %v76 = vpack.c.bf16 %v73, %v70
  %v77 = vpack.c.bf16 %v74, %v71
  %v78 = vld [vmem:[%s3] sm:$0xf]
  %v79 = vld [vmem:[%s3 + $0x4] sm:$0xf]
  %v80 = vld [vmem:[%s3 + $0x8] sm:$0xf]
  %v81 = vld [vmem:[%s3 + $0xc] sm:$0xf]
  %v82 = vld [vmem:[%s3 + $0x10] sm:$0xf]
  %v83 = vld [vmem:[%s3 + $0x14] sm:$0xf]
  %v84 = vld [vmem:[%s3 + $0x18] sm:$0xf]
  %v85 = vld [vmem:[%s3 + $0x1c] sm:$0xf]
  %v86 = vld [vmem:[%s3 + $0x20] sm:$0xf]
  %v87 = vld [vmem:[%s3 + $0x24] sm:$0xf]
  %v88 = vld [vmem:[%s3 + $0x28] sm:$0xf]
  %v89 = vld [vmem:[%s3 + $0x2c] sm:$0xf]
  %v90 = vld [vmem:[%s3 + $0x30] sm:$0xf]
  %v91 = vld [vmem:[%s3 + $0x34] sm:$0xf]
  %v92 = vld [vmem:[%s3 + $0x38] sm:$0xf]
  %v93 = vld [vmem:[%s3 + $0x3c] sm:$0xf]
  %v94 = vld [vmem:[%s3 + $0x40] sm:$0xf]
  %v95 = vld [vmem:[%s3 + $0x44] sm:$0xf]
  %v96 = vld [vmem:[%s3 + $0x48] sm:$0xf]
  %v97 = vld [vmem:[%s3 + $0x4c] sm:$0xf]
  %v98 = vld [vmem:[%s3 + $0x50] sm:$0xf]
  %v99 = vld [vmem:[%s3 + $0x54] sm:$0xf]
  %v100 = vld [vmem:[%s3 + $0x58] sm:$0xf]
  %v101 = vld [vmem:[%s3 + $0x5c] sm:$0xf]
  %v102 = vld [vmem:[%s3 + $0x60] sm:$0xf]
  %v103 = vld [vmem:[%s3 + $0x64] sm:$0xf]
  %v104 = vld [vmem:[%s3 + $0x68] sm:$0xf]
  %v105 = vld [vmem:[%s3 + $0x6c] sm:$0xf]
  %v106 = vld [vmem:[%s3 + $0x70] sm:$0xf]
  %v107 = vld [vmem:[%s3 + $0x74] sm:$0xf]
  %v108 = vld [vmem:[%s3 + $0x78] sm:$0xf]
  %v109 = vld [vmem:[%s3 + $0x7c] sm:$0xf]
  %v110 = vld [vmem:[%s3 + $0x80] sm:$0xf]
  %v111 = vld [vmem:[%s3 + $0x84] sm:$0xf]
  %v112 = vld [vmem:[%s3 + $0x88] sm:$0xf]
  %v113 = vld [vmem:[%s3 + $0x8c] sm:$0xf]
  %v150 = vunpack.c.l.b16 %v78
  %v151 = vunpack.c.l.b16 %v79
  %v152 = vunpack.c.l.b16 %v80
  %v153 = vunpack.c.l.b16 %v81
  %v154 = vunpack.c.l.b16 %v82
  %v155 = vunpack.c.l.b16 %v83
  %v156 = vunpack.c.l.b16 %v84
  %v157 = vunpack.c.l.b16 %v85
  %v158 = vunpack.c.l.b16 %v86
  %v159 = vunpack.c.l.b16 %v87
  %v160 = vunpack.c.l.b16 %v88
  %v161 = vunpack.c.l.b16 %v89
  %v162 = vunpack.c.l.b16 %v90
  %v163 = vunpack.c.l.b16 %v91
  %v164 = vunpack.c.l.b16 %v92
  %v165 = vunpack.c.l.b16 %v93
  %v166 = vunpack.c.l.b16 %v94
  %v167 = vunpack.c.l.b16 %v95
  %v168 = vunpack.c.l.b16 %v96
  %v169 = vunpack.c.l.b16 %v97
  %v170 = vunpack.c.l.b16 %v98
  %v171 = vunpack.c.l.b16 %v99
  %v172 = vunpack.c.l.b16 %v100
  %v173 = vunpack.c.l.b16 %v101
  %v174 = vunpack.c.l.b16 %v102
  %v175 = vunpack.c.l.b16 %v103
  %v176 = vunpack.c.l.b16 %v104
  %v177 = vunpack.c.l.b16 %v105
  %v178 = vunpack.c.l.b16 %v106
  %v179 = vunpack.c.l.b16 %v107
  %v180 = vunpack.c.l.b16 %v108
  %v181 = vunpack.c.l.b16 %v109
  %v182 = vunpack.c.l.b16 %v110
  %v183 = vunpack.c.l.b16 %v111
  %v184 = vunpack.c.l.b16 %v112
  %v185 = vunpack.c.l.b16 %v113
  %v186 = vpack.c.b16 %v151, %v150
  %v187 = vpack.c.b16 %v153, %v152
  %v188 = vpack.c.b16 %v155, %v154
  %v189 = vpack.c.b16 %v157, %v156
  %v190 = vpack.c.b16 %v159, %v158
  %v191 = vpack.c.b16 %v161, %v160
  %v192 = vpack.c.b16 %v163, %v162
  %v193 = vpack.c.b16 %v165, %v164
  %v194 = vpack.c.b16 %v167, %v166
  %v195 = vpack.c.b16 %v169, %v168
  %v196 = vpack.c.b16 %v171, %v170
  %v197 = vpack.c.b16 %v173, %v172
  %v198 = vpack.c.b16 %v175, %v174
  %v199 = vpack.c.b16 %v177, %v176
  %v200 = vpack.c.b16 %v179, %v178
  %v201 = vpack.c.b16 %v181, %v180
  %v202 = vpack.c.b16 %v183, %v182
  %v203 = vpack.c.b16 %v185, %v184
  %vm222 = vcmask 261120
  %v224 = vsel %vm222, %v77, 0
  %226 = vmatpush.bf16.msra.mxu0 %v193
  %227 = vmatpush.bf16.msra.mxu0 %v192
  %228 = vmatpush.bf16.msra.mxu0 %v191
  %229 = vmatpush.bf16.msra.mxu0 %v190
  %230 = vmatpush.bf16.msra.mxu0 %v189
  %231 = vmatpush.bf16.msra.mxu0 %v188
  %232 = vmatpush.bf16.msra.mxu0 %v187
  %233 = vmatpush.bf16.msra.mxu0 %v186
  %234 = vmatmul.bf16.gmra.mxu0 %v75
  %v235 = vpop.f32.mrf.mxu0
  %v236 = vadd.f32 0.0, %v235
  %v237 = vpop.f32.mrf.mxu0
  %v238 = vadd.f32 0.0, %v237
  %239 = vdwg.mxu0
  %240 = vmatpush.bf16.msra.mxu0 %v201
  %241 = vmatpush.bf16.msra.mxu0 %v200
  %242 = vmatpush.bf16.msra.mxu0 %v199
  %243 = vmatpush.bf16.msra.mxu0 %v198
  %244 = vmatpush.bf16.msra.mxu0 %v197
  %245 = vmatpush.bf16.msra.mxu0 %v196
  %246 = vmatpush.bf16.msra.mxu0 %v195
  %247 = vmatpush.bf16.msra.mxu0 %v194
  %248 = vmatmul.bf16.gmra.mxu0 %v76
  %v249 = vpop.f32.mrf.mxu0
  %v250 = vadd.f32 %v236, %v249
  %v251 = vpop.f32.mrf.mxu0
  %v252 = vadd.f32 %v238, %v251
  %253 = vdwg.mxu0
  %254 = vmatpush.bf16.msra.mxu0 0
  %255 = vmatpush.bf16.msra.mxu0 0
  %256 = vmatpush.bf16.msra.mxu0 0
  %257 = vmatpush.bf16.msra.mxu0 0
  %258 = vmatpush.bf16.msra.mxu0 0
  %259 = vmatpush.bf16.msra.mxu0 0
  %260 = vmatpush.bf16.msra.mxu0 %v203
  %261 = vmatpush.bf16.msra.mxu0 %v202
  %262 = vmatmul.bf16.gmra.mxu0 %v224
  %v263 = vpop.f32.mrf.mxu0
  %v264 = vadd.f32 %v250, %v263
  %v265 = vpop.f32.mrf.mxu0
  %v266 = vadd.f32 %v252, %v265
  %267 = vdwg.mxu0
  %v268 = vadd.f32 %v21, %v264
  %v269 = vadd.f32 %v22, %v266
  %v270 = vld [vmem:[%s0] sm:$0xff]
  %v271 = vld [vmem:[%s0 + $0x8] sm:$0xf]
  %v272 = vld [vmem:[%s0 + $0xc] sm:$0xff]
  %v273 = vld [vmem:[%s0 + $0x14] sm:$0xf]
  %v274 = vld [vmem:[%s0 + $0x18] sm:$0x11]
  %v275 = vld [vmem:[%s0 + $0x20] sm:$0x1]
  %v276 = vld [vmem:[%s1] sm:$0xff]
  %v277 = vld [vmem:[%s1 + $0x8] sm:$0xf]
  %v278 = vld [vmem:[%s1 + $0xc] sm:$0xff]
  %v279 = vld [vmem:[%s1 + $0x14] sm:$0xf]
  %v280 = vld [vmem:[%s1 + $0x18] sm:$0x11]
  %v281 = vld [vmem:[%s1 + $0x20] sm:$0x1]
  %v282 = vunpack.c.l.bf16 %v270
  %v283 = vunpack.c.h.bf16 %v270
  %v284 = vunpack.c.l.bf16 %v271
  %v285 = vunpack.c.l.bf16 %v272
  %v286 = vunpack.c.h.bf16 %v272
  %v287 = vunpack.c.l.bf16 %v273
  %v288 = vunpack.c.l.bf16 %v274
  %v289 = vunpack.c.h.bf16 %v274
  %v290 = vunpack.c.l.bf16 %v275
  %v291 = vunpack.c.l.bf16 %v276
  %v292 = vunpack.c.h.bf16 %v276
  %v293 = vunpack.c.l.bf16 %v277
  %v294 = vunpack.c.l.bf16 %v278
  %v295 = vunpack.c.h.bf16 %v278
  %v296 = vunpack.c.l.bf16 %v279
  %v297 = vunpack.c.l.bf16 %v280
  %v298 = vunpack.c.h.bf16 %v280
  %v299 = vunpack.c.l.bf16 %v281
  %v300 = vmul.f32 %v282, %v291
  %v301 = vmul.f32 %v283, %v292
  %v302 = vmul.f32 %v284, %v293
  %v303 = vmul.f32 %v285, %v294
  %v304 = vmul.f32 %v286, %v295
  %v305 = vmul.f32 %v287, %v296
  %v306 = vmul.f32 %v288, %v297
  %v307 = vmul.f32 %v289, %v298
  %v308 = vmul.f32 %v290, %v299
  %v309 = vpack.c.bf16 %v301, %v300
  %v310 = vpack.c.bf16 %v302, %v302
  %v311 = vpack.c.bf16 %v304, %v303
  %v312 = vpack.c.bf16 %v305, %v305
  %v313 = vpack.c.bf16 %v307, %v306
  %v314 = vpack.c.bf16 %v308, %v308
  %v315 = vld [vmem:[%s2] sm:$0xff]
  %v316 = vld [vmem:[%s2 + $0x8] sm:$0xf]
  %v317 = vld [vmem:[%s2 + $0xc] sm:$0xff]
  %v318 = vld [vmem:[%s2 + $0x14] sm:$0xf]
  %v319 = vld [vmem:[%s2 + $0x18] sm:$0x11]
  %v320 = vld [vmem:[%s2 + $0x20] sm:$0x1]
  %v321 = vunpack.c.l.bf16 %v309
  %v322 = vunpack.c.h.bf16 %v309
  %v323 = vunpack.c.l.bf16 %v310
  %v324 = vunpack.c.l.bf16 %v311
  %v325 = vunpack.c.h.bf16 %v311
  %v326 = vunpack.c.l.bf16 %v312
  %v327 = vunpack.c.l.bf16 %v313
  %v328 = vunpack.c.h.bf16 %v313
  %v329 = vunpack.c.l.bf16 %v314
  %v330 = vunpack.c.l.bf16 %v315
  %v331 = vunpack.c.h.bf16 %v315
  %v332 = vunpack.c.l.bf16 %v316
  %v333 = vunpack.c.l.bf16 %v317
  %v334 = vunpack.c.h.bf16 %v317
  %v335 = vunpack.c.l.bf16 %v318
  %v336 = vunpack.c.l.bf16 %v319
  %v337 = vunpack.c.h.bf16 %v319
  %v338 = vunpack.c.l.bf16 %v320
  %v339 = vadd.f32 %v321, %v330
  %v340 = vadd.f32 %v322, %v331
  %v341 = vadd.f32 %v323, %v332
  %v342 = vadd.f32 %v324, %v333
  %v343 = vadd.f32 %v325, %v334
  %v344 = vadd.f32 %v326, %v335
  %v345 = vadd.f32 %v327, %v336
  %v346 = vadd.f32 %v328, %v337
  %v347 = vadd.f32 %v329, %v338
  %v348 = vpack.c.bf16 %v342, %v339
  %v349 = vpack.c.bf16 %v343, %v340
  %v350 = vpack.c.bf16 %v344, %v341
  %v351 = vpack.c.bf16 %v345, %v345
  %v352 = vpack.c.bf16 %v346, %v346
  %v353 = vpack.c.bf16 %v347, %v347
  %s354 = scalar_lea.vmem %s3, 144
  %v355 = vld [vmem:[%s354] sm:$0xf]
  %v356 = vld [vmem:[%s354 + $0x4] sm:$0xf]
  %v357 = vld [vmem:[%s354 + $0x8] sm:$0xf]
  %v358 = vld [vmem:[%s354 + $0xc] sm:$0xf]
  %v359 = vld [vmem:[%s354 + $0x10] sm:$0xf]
  %v360 = vld [vmem:[%s354 + $0x14] sm:$0xf]
  %v361 = vld [vmem:[%s354 + $0x18] sm:$0xf]
  %v362 = vld [vmem:[%s354 + $0x1c] sm:$0xf]
  %v363 = vld [vmem:[%s354 + $0x20] sm:$0xf]
  %v364 = vld [vmem:[%s354 + $0x24] sm:$0xf]
  %v365 = vld [vmem:[%s354 + $0x28] sm:$0xf]
  %v366 = vld [vmem:[%s354 + $0x2c] sm:$0xf]
  %v367 = vld [vmem:[%s354 + $0x30] sm:$0xf]
  %v368 = vld [vmem:[%s354 + $0x34] sm:$0xf]
  %v369 = vld [vmem:[%s354 + $0x38] sm:$0xf]
  %v370 = vld [vmem:[%s354 + $0x3c] sm:$0xf]
  %v371 = vld [vmem:[%s354 + $0x40] sm:$0xf]
  %v372 = vld [vmem:[%s354 + $0x44] sm:$0xf]
  %v373 = vld [vmem:[%s354 + $0x48] sm:$0xf]
  %v374 = vld [vmem:[%s354 + $0x4c] sm:$0xf]
  %v375 = vld [vmem:[%s354 + $0x50] sm:$0xf]
  %v376 = vld [vmem:[%s354 + $0x54] sm:$0xf]
  %v377 = vld [vmem:[%s354 + $0x58] sm:$0xf]
  %v378 = vld [vmem:[%s354 + $0x5c] sm:$0xf]
  %v379 = vld [vmem:[%s354 + $0x60] sm:$0xf]
  %v380 = vld [vmem:[%s354 + $0x64] sm:$0xf]
  %v381 = vld [vmem:[%s354 + $0x68] sm:$0xf]
  %v382 = vld [vmem:[%s354 + $0x6c] sm:$0xf]
  %v383 = vld [vmem:[%s354 + $0x70] sm:$0xf]
  %v384 = vld [vmem:[%s354 + $0x74] sm:$0xf]
  %v385 = vld [vmem:[%s354 + $0x78] sm:$0xf]
  %v386 = vld [vmem:[%s354 + $0x7c] sm:$0xf]
  %v387 = vld [vmem:[%s354 + $0x80] sm:$0xf]
  %v388 = vld [vmem:[%s354 + $0x84] sm:$0xf]
  %v389 = vld [vmem:[%s354 + $0x88] sm:$0xf]
  %v390 = vld [vmem:[%s354 + $0x8c] sm:$0xf]
  %vm391 = vsmask.f32 7424
  %v393 = vshrl.u32 %v348, 16
  %v395 = vshll.u32 %v348, 16
  %v397 = vrot.slane %v395, 1
  %v398 = vor.u32 %v393, %v397
  %v400 = vshll.u32 %v351, 16
  %v402 = vrot.slane %v400, 1
  %v403 = vsel %vm391, %v398, %v402
  %v405 = vshrl.u32 %v349, 16
  %v407 = vshll.u32 %v349, 16
  %v409 = vrot.slane %v407, 1
  %v410 = vor.u32 %v405, %v409
  %v412 = vshll.u32 %v352, 16
  %v414 = vrot.slane %v412, 1
  %v415 = vsel %vm391, %v410, %v414
  %v417 = vshrl.u32 %v350, 16
  %v419 = vshll.u32 %v350, 16
  %v421 = vrot.slane %v419, 1
  %v422 = vor.u32 %v417, %v421
  %v424 = vshll.u32 %v353, 16
  %v426 = vrot.slane %v424, 1
  %v427 = vsel %vm391, %v422, %v426
  %v466 = vunpack.c.l.b16 %v355
  %v467 = vunpack.c.l.b16 %v356
  %v468 = vunpack.c.l.b16 %v357
  %v469 = vunpack.c.l.b16 %v358
  %v470 = vunpack.c.l.b16 %v359
  %v471 = vunpack.c.l.b16 %v360
  %v472 = vunpack.c.l.b16 %v361
  %v473 = vunpack.c.l.b16 %v362
  %v474 = vunpack.c.l.b16 %v363
  %v475 = vunpack.c.l.b16 %v364
  %v476 = vunpack.c.l.b16 %v365
  %v477 = vunpack.c.l.b16 %v366
  %v478 = vunpack.c.l.b16 %v367
  %v479 = vunpack.c.l.b16 %v368
  %v480 = vunpack.c.l.b16 %v369
  %v481 = vunpack.c.l.b16 %v370
  %v482 = vunpack.c.l.b16 %v371
  %v483 = vunpack.c.l.b16 %v372
  %v484 = vunpack.c.l.b16 %v373
  %v485 = vunpack.c.l.b16 %v374
  %v486 = vunpack.c.l.b16 %v375
  %v487 = vunpack.c.l.b16 %v376
  %v488 = vunpack.c.l.b16 %v377
  %v489 = vunpack.c.l.b16 %v378
  %v490 = vunpack.c.l.b16 %v379
  %v491 = vunpack.c.l.b16 %v380
  %v492 = vunpack.c.l.b16 %v381
  %v493 = vunpack.c.l.b16 %v382
  %v494 = vunpack.c.l.b16 %v383
  %v495 = vunpack.c.l.b16 %v384
  %v496 = vunpack.c.l.b16 %v385
  %v497 = vunpack.c.l.b16 %v386
  %v498 = vunpack.c.l.b16 %v387
  %v499 = vunpack.c.l.b16 %v388
  %v500 = vunpack.c.l.b16 %v389
  %v501 = vunpack.c.l.b16 %v390
  %v502 = vpack.c.b16 %v467, %v466
  %v503 = vpack.c.b16 %v469, %v468
  %v504 = vpack.c.b16 %v471, %v470
  %v505 = vpack.c.b16 %v473, %v472
  %v506 = vpack.c.b16 %v475, %v474
  %v507 = vpack.c.b16 %v477, %v476
  %v508 = vpack.c.b16 %v479, %v478
  %v509 = vpack.c.b16 %v481, %v480
  %v510 = vpack.c.b16 %v483, %v482
  %v511 = vpack.c.b16 %v485, %v484
  %v512 = vpack.c.b16 %v487, %v486
  %v513 = vpack.c.b16 %v489, %v488
  %v514 = vpack.c.b16 %v491, %v490
  %v515 = vpack.c.b16 %v493, %v492
  %v516 = vpack.c.b16 %v495, %v494
  %v517 = vpack.c.b16 %v497, %v496
  %v518 = vpack.c.b16 %v499, %v498
  %v519 = vpack.c.b16 %v501, %v500
  %v539 = vsel %vm222, %v427, 0
  %541 = vmatpush.bf16.msra.mxu0 %v509
  %542 = vmatpush.bf16.msra.mxu0 %v508
  %543 = vmatpush.bf16.msra.mxu0 %v507
  %544 = vmatpush.bf16.msra.mxu0 %v506
  %545 = vmatpush.bf16.msra.mxu0 %v505
  %546 = vmatpush.bf16.msra.mxu0 %v504
  %547 = vmatpush.bf16.msra.mxu0 %v503
  %548 = vmatpush.bf16.msra.mxu0 %v502
  %549 = vmatmul.bf16.gmra.mxu0 %v403
  %v550 = vpop.f32.mrf.mxu0
  %v551 = vadd.f32 0.0, %v550
  %v552 = vpop.f32.mrf.mxu0
  %v553 = vadd.f32 0.0, %v552
  %554 = vdwg.mxu0
  %555 = vmatpush.bf16.msra.mxu0 %v517
  %556 = vmatpush.bf16.msra.mxu0 %v516
  %557 = vmatpush.bf16.msra.mxu0 %v515
  %558 = vmatpush.bf16.msra.mxu0 %v514
  %559 = vmatpush.bf16.msra.mxu0 %v513
  %560 = vmatpush.bf16.msra.mxu0 %v512
  %561 = vmatpush.bf16.msra.mxu0 %v511
  %562 = vmatpush.bf16.msra.mxu0 %v510
  %563 = vmatmul.bf16.gmra.mxu0 %v415
  %v564 = vpop.f32.mrf.mxu0
  %v565 = vadd.f32 %v551, %v564
  %v566 = vpop.f32.mrf.mxu0
  %v567 = vadd.f32 %v553, %v566
  %568 = vdwg.mxu0
  %569 = vmatpush.bf16.msra.mxu0 0
  %570 = vmatpush.bf16.msra.mxu0 0
  %571 = vmatpush.bf16.msra.mxu0 0
  %572 = vmatpush.bf16.msra.mxu0 0
  %573 = vmatpush.bf16.msra.mxu0 0
  %574 = vmatpush.bf16.msra.mxu0 0
  %575 = vmatpush.bf16.msra.mxu0 %v519
  %576 = vmatpush.bf16.msra.mxu0 %v518
  %577 = vmatmul.bf16.gmra.mxu0 %v539
  %v578 = vpop.f32.mrf.mxu0
  %v579 = vadd.f32 %v565, %v578
  %v580 = vpop.f32.mrf.mxu0
  %v581 = vadd.f32 %v567, %v580
  %582 = vdwg.mxu0
  %v583 = vadd.f32 %v268, %v579
  %v584 = vadd.f32 %v269, %v581
  %v585 = vld [vmem:[%s0] sm:$0xee]
  %v586 = vld [vmem:[%s0 + $0x8] sm:$0xe]
  %v587 = vld [vmem:[%s1] sm:$0xee]
  %v588 = vld [vmem:[%s1 + $0x8] sm:$0xe]
  %v589 = vunpack.c.l.bf16 %v585
  %v590 = vunpack.c.h.bf16 %v585
  %v591 = vunpack.c.l.bf16 %v586
  %v592 = vunpack.c.l.bf16 %v587
  %v593 = vunpack.c.h.bf16 %v587
  %v594 = vunpack.c.l.bf16 %v588
  %v595 = vmul.f32 %v589, %v592
  %v596 = vmul.f32 %v590, %v593
  %v597 = vmul.f32 %v591, %v594
  %v598 = vpack.c.bf16 %v596, %v595
  %v599 = vpack.c.bf16 %v597, %v597
  %v600 = vld [vmem:[%s2] sm:$0xee]
  %v601 = vld [vmem:[%s2 + $0x8] sm:$0xe]
  %v602 = vunpack.c.l.bf16 %v598
  %v603 = vunpack.c.h.bf16 %v598
  %v604 = vunpack.c.l.bf16 %v599
  %v605 = vunpack.c.l.bf16 %v600
  %v606 = vunpack.c.h.bf16 %v600
  %v607 = vunpack.c.l.bf16 %v601
  %v608 = vadd.f32 %v602, %v605
  %v609 = vadd.f32 %v603, %v606
  %v610 = vadd.f32 %v604, %v607
  %v611 = vpack.c.bf16 %v342, %v608
  %v612 = vpack.c.bf16 %v343, %v609
  %v613 = vpack.c.bf16 %v344, %v610
  %s614 = scalar_lea.vmem %s3, 288
  %v615 = vld [vmem:[%s614] sm:$0xf]
  %v616 = vld [vmem:[%s614 + $0x4] sm:$0xf]
  %v617 = vld [vmem:[%s614 + $0x8] sm:$0xf]
  %v618 = vld [vmem:[%s614 + $0xc] sm:$0xf]
  %v619 = vld [vmem:[%s614 + $0x10] sm:$0xf]
  %v620 = vld [vmem:[%s614 + $0x14] sm:$0xf]
  %v621 = vld [vmem:[%s614 + $0x18] sm:$0xf]
  %v622 = vld [vmem:[%s614 + $0x1c] sm:$0xf]
  %v623 = vld [vmem:[%s614 + $0x20] sm:$0xf]
  %v624 = vld [vmem:[%s614 + $0x24] sm:$0xf]
  %v625 = vld [vmem:[%s614 + $0x28] sm:$0xf]
  %v626 = vld [vmem:[%s614 + $0x2c] sm:$0xf]
  %v627 = vld [vmem:[%s614 + $0x30] sm:$0xf]
  %v628 = vld [vmem:[%s614 + $0x34] sm:$0xf]
  %v629 = vld [vmem:[%s614 + $0x38] sm:$0xf]
  %v630 = vld [vmem:[%s614 + $0x3c] sm:$0xf]
  %v631 = vld [vmem:[%s614 + $0x40] sm:$0xf]
  %v632 = vld [vmem:[%s614 + $0x44] sm:$0xf]
  %v633 = vld [vmem:[%s614 + $0x48] sm:$0xf]
  %v634 = vld [vmem:[%s614 + $0x4c] sm:$0xf]
  %v635 = vld [vmem:[%s614 + $0x50] sm:$0xf]
  %v636 = vld [vmem:[%s614 + $0x54] sm:$0xf]
  %v637 = vld [vmem:[%s614 + $0x58] sm:$0xf]
  %v638 = vld [vmem:[%s614 + $0x5c] sm:$0xf]
  %v639 = vld [vmem:[%s614 + $0x60] sm:$0xf]
  %v640 = vld [vmem:[%s614 + $0x64] sm:$0xf]
  %v641 = vld [vmem:[%s614 + $0x68] sm:$0xf]
  %v642 = vld [vmem:[%s614 + $0x6c] sm:$0xf]
  %v643 = vld [vmem:[%s614 + $0x70] sm:$0xf]
  %v644 = vld [vmem:[%s614 + $0x74] sm:$0xf]
  %v645 = vld [vmem:[%s614 + $0x78] sm:$0xf]
  %v646 = vld [vmem:[%s614 + $0x7c] sm:$0xf]
  %v647 = vld [vmem:[%s614 + $0x80] sm:$0xf]
  %v648 = vld [vmem:[%s614 + $0x84] sm:$0xf]
  %v649 = vld [vmem:[%s614 + $0x88] sm:$0xf]
  %v650 = vld [vmem:[%s614 + $0x8c] sm:$0xf]
  %vm657 = vcmask 1046528
  %v658 = vrot.slane %v611, 1
  %v659 = vrot.slane %v351, 1
  %v660 = vsel %vm657, %v658, %v659
  %v661 = vrot.slane %v612, 1
  %v662 = vrot.slane %v352, 1
  %v663 = vsel %vm657, %v661, %v662
  %v664 = vrot.slane %v613, 1
  %v665 = vrot.slane %v353, 1
  %v666 = vsel %vm657, %v664, %v665
  %v705 = vunpack.c.l.b16 %v615
  %v706 = vunpack.c.l.b16 %v616
  %v707 = vunpack.c.l.b16 %v617
  %v708 = vunpack.c.l.b16 %v618
  %v709 = vunpack.c.l.b16 %v619
  %v710 = vunpack.c.l.b16 %v620
  %v711 = vunpack.c.l.b16 %v621
  %v712 = vunpack.c.l.b16 %v622
  %v713 = vunpack.c.l.b16 %v623
  %v714 = vunpack.c.l.b16 %v624
  %v715 = vunpack.c.l.b16 %v625
  %v716 = vunpack.c.l.b16 %v626
  %v717 = vunpack.c.l.b16 %v627
  %v718 = vunpack.c.l.b16 %v628
  %v719 = vunpack.c.l.b16 %v629
  %v720 = vunpack.c.l.b16 %v630
  %v721 = vunpack.c.l.b16 %v631
  %v722 = vunpack.c.l.b16 %v632
  %v723 = vunpack.c.l.b16 %v633
  %v724 = vunpack.c.l.b16 %v634
  %v725 = vunpack.c.l.b16 %v635
  %v726 = vunpack.c.l.b16 %v636
  %v727 = vunpack.c.l.b16 %v637
  %v728 = vunpack.c.l.b16 %v638
  %v729 = vunpack.c.l.b16 %v639
  %v730 = vunpack.c.l.b16 %v640
  %v731 = vunpack.c.l.b16 %v641
  %v732 = vunpack.c.l.b16 %v642
  %v733 = vunpack.c.l.b16 %v643
  %v734 = vunpack.c.l.b16 %v644
  %v735 = vunpack.c.l.b16 %v645
  %v736 = vunpack.c.l.b16 %v646
  %v737 = vunpack.c.l.b16 %v647
  %v738 = vunpack.c.l.b16 %v648
  %v739 = vunpack.c.l.b16 %v649
  %v740 = vunpack.c.l.b16 %v650
  %v741 = vpack.c.b16 %v706, %v705
  %v742 = vpack.c.b16 %v708, %v707
  %v743 = vpack.c.b16 %v710, %v709
  %v744 = vpack.c.b16 %v712, %v711
  %v745 = vpack.c.b16 %v714, %v713
  %v746 = vpack.c.b16 %v716, %v715
  %v747 = vpack.c.b16 %v718, %v717
  %v748 = vpack.c.b16 %v720, %v719
  %v749 = vpack.c.b16 %v722, %v721
  %v750 = vpack.c.b16 %v724, %v723
  %v751 = vpack.c.b16 %v726, %v725
  %v752 = vpack.c.b16 %v728, %v727
  %v753 = vpack.c.b16 %v730, %v729
  %v754 = vpack.c.b16 %v732, %v731
  %v755 = vpack.c.b16 %v734, %v733
  %v756 = vpack.c.b16 %v736, %v735
  %v757 = vpack.c.b16 %v738, %v737
  %v758 = vpack.c.b16 %v740, %v739
  %v778 = vsel %vm222, %v666, 0
  %780 = vmatpush.bf16.msra.mxu0 %v748
  %781 = vmatpush.bf16.msra.mxu0 %v747
  %782 = vmatpush.bf16.msra.mxu0 %v746
  %783 = vmatpush.bf16.msra.mxu0 %v745
  %784 = vmatpush.bf16.msra.mxu0 %v744
  %785 = vmatpush.bf16.msra.mxu0 %v743
  %786 = vmatpush.bf16.msra.mxu0 %v742
  %787 = vmatpush.bf16.msra.mxu0 %v741
  %788 = vmatmul.bf16.gmra.mxu0 %v660
  %v789 = vpop.f32.mrf.mxu0
  %v790 = vadd.f32 0.0, %v789
  %v791 = vpop.f32.mrf.mxu0
  %v792 = vadd.f32 0.0, %v791
  %793 = vdwg.mxu0
  %794 = vmatpush.bf16.msra.mxu0 %v756
  %795 = vmatpush.bf16.msra.mxu0 %v755
  %796 = vmatpush.bf16.msra.mxu0 %v754
  %797 = vmatpush.bf16.msra.mxu0 %v753
  %798 = vmatpush.bf16.msra.mxu0 %v752
  %799 = vmatpush.bf16.msra.mxu0 %v751
  %800 = vmatpush.bf16.msra.mxu0 %v750
  %801 = vmatpush.bf16.msra.mxu0 %v749
  %802 = vmatmul.bf16.gmra.mxu0 %v663
  %v803 = vpop.f32.mrf.mxu0
  %v804 = vadd.f32 %v790, %v803
  %v805 = vpop.f32.mrf.mxu0
  %v806 = vadd.f32 %v792, %v805
  %807 = vdwg.mxu0
  %808 = vmatpush.bf16.msra.mxu0 0
  %809 = vmatpush.bf16.msra.mxu0 0
  %810 = vmatpush.bf16.msra.mxu0 0
  %811 = vmatpush.bf16.msra.mxu0 0
  %812 = vmatpush.bf16.msra.mxu0 0
  %813 = vmatpush.bf16.msra.mxu0 0
  %814 = vmatpush.bf16.msra.mxu0 %v758
  %815 = vmatpush.bf16.msra.mxu0 %v757
  %816 = vmatmul.bf16.gmra.mxu0 %v778
  %v817 = vpop.f32.mrf.mxu0
  %v818 = vadd.f32 %v804, %v817
  %v819 = vpop.f32.mrf.mxu0
  %v820 = vadd.f32 %v806, %v819
  %821 = vdwg.mxu0
  %v822 = vadd.f32 %v583, %v818
  %v823 = vadd.f32 %v584, %v820
  %824 = vst.msk [vmem:[%s5] sm:$0xff] %vm222, %v822
  %825 = vst.msk [vmem:[%s5 + $0x8] sm:$0xff] %vm222, %v823
  // Predicated region
  $region22: #{_lambda_.23} parent=0 // pred_check
    _
  $region23: #{_lambda_.23} parent=0 // pred_check_branch
    %827 = sbr.rel (0) target = $region25
  $region24: #{_lambda_.23} parent=0 // pred_region
    _
  $region25: #{_lambda_.23} parent=0 // pred_fallthru
    _
  // Predicated region
  $region26: #{_lambda_.23} parent=0 // pred_check
    _
  $region27: #{_lambda_.23} parent=0 // pred_check_branch
    %829 = sbr.rel (0) target = $region29
  $region28: #{_lambda_.23} parent=0 // pred_region
    _
  $region29: #{_lambda_.23} parent=0 // pred_fallthru
    _

</llo_original>
